<compile_context>
chip_gen: v7x
topology: tpu7x:2x2x1
jax: 0.10.0
libtpu: 0.0.40
codegen_flags: <defaults>
</compile_context>

<pallas_src>
import jax
import jax.numpy as jnp
import numpy as np
from jax.experimental import pallas as pl
from jax.experimental.pallas import tpu as pltpu

# ---------------- problem constants (FCNN defaults: in_channels=1, input_size=16) ---------
H = W = 16
C0, C1, C2 = 1, 16, 64
H1, W1 = H // 2, W // 2            # 8 x 8 after stage-1 pool
H2, W2 = H // 4, W // 4            # 4 x 4 after stage-2 pool
N_FEATURE = 1000
NF_PAD = 1024                      # fc1 width padded to a lane-dense multiple of 128
N_CLASSES = 10
OUT_PAD = 128                      # lane-dense logits slab (sliced back to 10 in the wrapper)

K1_BLK = (W + 2) * C0              # 18  : one kh-row of the stage-1 padded input
K1 = 3 * K1_BLK                    # 54
K1R = 64                           # stage-1 banded-matmul K (padded)
COLS1 = W * C1                     # 256 : stage-1 matmul output columns
HALF1 = (W // 2) * C1              # 128

K2_BLK = (W1 + 2) * C1             # 160 : one kh-row of the stage-2 padded input
K2 = 3 * K2_BLK                    # 480
K2R = 512                          # stage-2 banded-matmul K (padded)
COLS2 = W1 * C2                    # 512
HALF2 = (W1 // 2) * C2             # 256

_MAX_BT = 64                       # max images per grid step (VMEM-safe on v5e/v6e/v7x)


def _cdiv(a, b):
    return -(-a // b)


def _batch_tile(n):
    """Images per grid step: as large as possible (fills MXU rows, amortizes per-step
    overhead) while keeping >= 2 grid steps when there is enough work for both of v7x's
    TensorCores, and keeping the tile sublane-aligned (multiple of 8) when grid > 1."""
    if n <= 8:
        return n
    if n <= 2 * _MAX_BT:
        return min(_MAX_BT, 8 * _cdiv(_cdiv(n, 2), 8))
    return _MAX_BT


# ------------------------------------ the fused kernel ------------------------------------
def fcnn_kernel(x_ref, t1_ref, b1_ref, t2_ref, b2_ref,
                wf1_ref, bf1_ref, wf2_ref, bf2_ref,
                out_ref, xp1_ref, r1_ref, xp2_ref, r2_ref):
    bt = x_ref.shape[0]

    # ---- stage 1: conv3x3 (1 -> 16, 'same') + bias, maxpool 2x2, relu ----
    # Halo / K-pad regions are re-zeroed every step (cheap, and megacore-safe: each core
    # owns its own scratch).  The interior is fully rewritten below.
    xp1_ref[...] = jnp.zeros_like(xp1_ref)
    xp1_ref[:, 1:H + 1, 1:W + 1] = x_ref[...]
    r1_ref[:, K1:] = jnp.zeros((bt * H, K1R - K1), jnp.bfloat16)
    for kh in range(3):            # 3 wide slab copies (not 9 one-lane im2col column stores)
        r1_ref[:, kh * K1_BLK:(kh + 1) * K1_BLK] = (
            xp1_ref[:, kh:kh + H, :].reshape(bt * H, K1_BLK).astype(jnp.bfloat16))
    y = jnp.dot(r1_ref[...], t1_ref[...], preferred_element_type=jnp.float32)   # (bt*16, 256)
    y = y + b1_ref[...]
    y = jnp.maximum(y[:, :HALF1], y[:, HALF1:])             # maxpool over width pairs
    y = jnp.max(y.reshape(bt, H // 2, 2, HALF1), axis=2)    # maxpool over height pairs
    y = jnp.maximum(y, 0.0)                                 # ReLU -> (bt, 8, 128) = (b,i,16j'+c)

    # ---- stage 2: conv3x3 (16 -> 64, 'same') + bias, maxpool 2x2, relu ----
    xp2_ref[...] = jnp.zeros_like(xp2_ref)
    xp2_ref[:, 1:H1 + 1, C1:(W1 + 1) * C1] = y
    r2_ref[:, K2:] = jnp.zeros((bt * H1, K2R - K2), jnp.bfloat16)
    for kh in range(3):
        r2_ref[:, kh * K2_BLK:(kh + 1) * K2_BLK] = (
            xp2_ref[:, kh:kh + H1, :].reshape(bt * H1, K2_BLK).astype(jnp.bfloat16))
    z = jnp.dot(r2_ref[...], t2_ref[...], preferred_element_type=jnp.float32)   # (bt*8, 512)
    z = z + b2_ref[...]
    z = jnp.maximum(z[:, :HALF2], z[:, HALF2:])             # width pairs
    z = jnp.max(z.reshape(bt, H1 // 2, 2, HALF2), axis=2)   # height pairs
    z = jnp.maximum(z, 0.0)                                 # (bt, 4, 256) = (b, i', 64*j'+c)
    # Dropout2d(p=0.0) is the identity.
    # TODO(synk): dropout with p > 0 / training-mode (logit, feature) tuple not implemented.

    # ---- classifier: fc1 (1024 -> 1024-padded) + relu, fc2 (-> 128-padded logits) ----
    feat = z.reshape(bt, H2 * W2 * C2).astype(jnp.bfloat16)       # (bt, 1024), (H, W, C) order
    h = jnp.dot(feat, wf1_ref[...], preferred_element_type=jnp.float32) + bf1_ref[...]
    h = jnp.maximum(h, 0.0).astype(jnp.bfloat16)
    out_ref[...] = jnp.dot(h, wf2_ref[...], preferred_element_type=jnp.float32) + bf2_ref[...]


# ------------------------------------ wrapper ----------------------------------------------
@jax.jit
def fcnn_forward(x_nchw, kp):
    """Pallas implementation of FCNN.forward (eval mode). x_nchw: (N, 1, H, W) float32."""
    n = x_nchw.shape[0]
    x = x_nchw.reshape(n, H, W)                 # in_channels == 1
    bt = _batch_tile(n)
    g = _cdiv(n, bt)
    n_pad = g * bt
    if n_pad != n:                              # pad the tail batch tile with zero images
        x = jnp.pad(x, ((0, n_pad - n), (0, 0), (0, 0)))

    out = pl.pallas_call(
        fcnn_kernel,
        out_shape=jax.ShapeDtypeStruct((n_pad, OUT_PAD), jnp.float32),
        grid=(g,),
        in_specs=[
            pl.BlockSpec((bt, H, W), lambda i: (i, 0, 0)),          # batch tile of images
            pl.BlockSpec((K1R, COLS1), lambda i: (0, 0)),           # banded conv1 weight
            pl.BlockSpec((1, COLS1), lambda i: (0, 0)),             # conv1 bias (lane-tiled)
            pl.BlockSpec((K2R, COLS2), lambda i: (0, 0)),           # banded conv2 weight
            pl.BlockSpec((1, COLS2), lambda i: (0, 0)),             # conv2 bias (lane-tiled)
            pl.BlockSpec((H2 * W2 * C2, NF_PAD), lambda i: (0, 0)),  # fc1 (HWC rows, 1024 cols)
            pl.BlockSpec((1, NF_PAD), lambda i: (0, 0)),
            pl.BlockSpec((NF_PAD, OUT_PAD), lambda i: (0, 0)),      # fc2 (padded 1024 x 128)
            pl.BlockSpec((1, OUT_PAD), lambda i: (0, 0)),
        ],
        out_specs=pl.BlockSpec((bt, OUT_PAD), lambda i: (i, 0)),
        scratch_shapes=[
            pltpu.VMEM((bt, H + 2, K1_BLK), jnp.float32),   # stage-1 zero-padded input
            pltpu.VMEM((bt * H, K1R), jnp.bfloat16),        # stage-1 row-slab matrix R1
            pltpu.VMEM((bt, H1 + 2, K2_BLK), jnp.float32),  # stage-2 zero-padded input
            pltpu.VMEM((bt * H1, K2R), jnp.bfloat16),       # stage-2 row-slab matrix R2
        ],
        compiler_params=pltpu.CompilerParams(
            dimension_semantics=("parallel",),
            vmem_limit_bytes=28 * 1024 * 1024,
        ),
    )(x, kp["t1"], kp["b1"], kp["t2"], kp["b2"],
      kp["wf1"], kp["bf1"], kp["wf2"], kp["bf2"])

    return out[:n, :N_CLASSES]                  # drop batch / lane padding -> (N, 10)


# ------------------------------ parameter preparation --------------------------------------
def init_params(key):
    """Deterministic synthetic parameters in 'PyTorch-equivalent' layouts (HWIO convs,
    fc1 rows in CHW flatten order, fc weights stored as (in, out))."""
    ks = jax.random.split(key, 8)
    chw = C2 * H2 * W2  # 1024
    return {
        "w1": jax.random.normal(ks[0], (3, 3, C0, C1), jnp.float32) * 0.1,
        "b1": jax.random.normal(ks[1], (C1,), jnp.float32) * 0.1,
        "w2": jax.random.normal(ks[2], (3, 3, C1, C2), jnp.float32) * 0.05,
        "b2": jax.random.normal(ks[3], (C2,), jnp.float32) * 0.05,
        "wf1": jax.random.normal(ks[4], (chw, N_FEATURE), jnp.float32) * 0.03,
        "bf1": jax.random.normal(ks[5], (N_FEATURE,), jnp.float32) * 0.03,
        "wf2": jax.random.normal(ks[6], (N_FEATURE, N_CLASSES), jnp.float32) * 0.03,
        "bf2": jax.random.normal(ks[7], (N_CLASSES,), jnp.float32) * 0.03,
    }


def _banded_conv_weight(w_hwio, w_pad, w_out):
    """Banded (lowered) 3x3-conv weight.

    Rows index the padded-input slab layout used by the kernel:
        row = kh * (w_pad * cin) + p * cin + ci      (p = padded column index)
    Columns index the conv output, with even/odd output columns interleaved into the two
    lane halves so the width max-pool is a plain max of two aligned halves:
        col = (j % 2) * (w_out // 2 * cout) + (j // 2) * cout + co
    T[row, col] = w[kh, p - j, ci, co] if 0 <= p - j <= 2 else 0, so (R @ T) is the conv.
    """
    _, _, cin, cout = w_hwio.shape
    w_np = np.asarray(w_hwio, np.float32)
    half = (w_out // 2) * cout
    t = np.zeros((3 * w_pad * cin, w_out * cout), np.float32)
    for kh in range(3):
        for j in range(w_out):
            col0 = (j % 2) * half + (j // 2) * cout
            for kw in range(3):
                p = j + kw
                r0 = (kh * w_pad + p) * cin
                t[r0:r0 + cin, col0:col0 + cout] = w_np[kh, kw]
    return t


def prepare_kernel_params(params):
    """One-time repack of weights into kernel-friendly layouts (banded conv matmuls, bf16
    operands, lane-padded fc widths).  Done once, outside the jitted forward."""
    t1 = _banded_conv_weight(params["w1"], W + 2, W)                 # (54, 256)
    t1 = np.pad(t1, ((0, K1R - t1.shape[0]), (0, 0)))                # K padded -> 64
    t2 = _banded_conv_weight(params["w2"], W1 + 2, W1)               # (480, 512)
    t2 = np.pad(t2, ((0, K2R - t2.shape[0]), (0, 0)))                # K padded -> 512
    b1l = np.tile(np.asarray(params["b1"], np.float32), W)           # (256,) -> b1[c % 16]
    b2l = np.tile(np.asarray(params["b2"], np.float32), W1)          # (512,) -> b2[c % 64]
    # fc1 rows: PyTorch (C, H, W) flatten order -> kernel's (H, W, C); pad cols 1000 -> 1024.
    wf1 = np.asarray(params["wf1"], np.float32).reshape(C2, H2, W2, N_FEATURE)
    wf1 = wf1.transpose(1, 2, 0, 3).reshape(H2 * W2 * C2, N_FEATURE)
    wf1 = np.pad(wf1, ((0, 0), (0, NF_PAD - N_FEATURE)))
    bf1 = np.pad(np.asarray(params["bf1"], np.float32), (0, NF_PAD - N_FEATURE))
    wf2 = np.pad(np.asarray(params["wf2"], np.float32),
                 ((0, NF_PAD - N_FEATURE), (0, OUT_PAD - N_CLASSES)))
    bf2 = np.pad(np.asarray(params["bf2"], np.float32), (0, OUT_PAD - N_CLASSES))
    return {
        "t1": jnp.asarray(t1, jnp.bfloat16), "b1": jnp.asarray(b1l).reshape(1, COLS1),
        "t2": jnp.asarray(t2, jnp.bfloat16), "b2": jnp.asarray(b2l).reshape(1, COLS2),
        "wf1": jnp.asarray(wf1, jnp.bfloat16), "bf1": jnp.asarray(bf1).reshape(1, NF_PAD),
        "wf2": jnp.asarray(wf2, jnp.bfloat16), "bf2": jnp.asarray(bf2).reshape(1, OUT_PAD),
    }


# ------------------------------------ pure-JAX reference -----------------------------------
def reference_forward(x_nchw, params):
    """Pure-JAX reference (no Pallas), mirroring the PyTorch forward exactly."""
    x = jnp.transpose(x_nchw, (0, 2, 3, 1))

    def block(x, w, b):
        y = jax.lax.conv_general_dilated(
            x, w, window_strides=(1, 1), padding=((1, 1), (1, 1)),
            dimension_numbers=("NHWC", "HWIO", "NHWC")) + b
        y = jax.lax.reduce_window(
            y, -jnp.inf, jax.lax.max, (1, 2, 2, 1), (1, 2, 2, 1), "VALID")
        return jnp.maximum(y, 0.0)

    x = block(x, params["w1"], params["b1"])
    x = block(x, params["w2"], params["b2"])
    feat = jnp.transpose(x, (0, 3, 1, 2)).reshape(x.shape[0], -1)   # PyTorch x.view(N, -1)
    h = jnp.maximum(feat @ params["wf1"] + params["bf1"], 0.0)
    return h @ params["wf2"] + params["bf2"]


if __name__ == "__main__":
    key = jax.random.PRNGKey(0)
    k_param, k_x = jax.random.split(key)

    params = init_params(k_param)
    kparams = prepare_kernel_params(params)

    # Small case (batch=2): single grid step.
    x = jax.random.normal(k_x, (2, C0, H, W), jnp.float32)
    logits = jax.block_until_ready(fcnn_forward(x, kparams))
    assert logits.shape == (2, N_CLASSES), logits.shape
    ref = jax.block_until_ready(reference_forward(x, params))
    np.testing.assert_allclose(np.asarray(logits), np.asarray(ref), rtol=2e-2, atol=2e-2)

    # Batched case (batch=20): exercises grid > 1 + batch-tile padding.
    x20 = jax.random.normal(jax.random.fold_in(k_x, 1), (20, C0, H, W), jnp.float32)
    logits20 = jax.block_until_ready(fcnn_forward(x20, kparams))
    ref20 = jax.block_until_ready(reference_forward(x20, params))
    np.testing.assert_allclose(np.asarray(logits20), np.asarray(ref20), rtol=2e-2, atol=2e-2)

    print("KERNEL_OK")
</pallas_src>

<mosaic_0001>
module attributes {stable_mosaic.version = 11 : i64} {
  func.func @fcnn_kernel(%arg0: i32, %arg1: memref<2x16x16xf32, #tpu.memory_space<vmem>>, %arg2: memref<64x256xbf16, #tpu.memory_space<vmem>>, %arg3: memref<1x256xf32, #tpu.memory_space<vmem>>, %arg4: memref<512x512xbf16, #tpu.memory_space<vmem>>, %arg5: memref<1x512xf32, #tpu.memory_space<vmem>>, %arg6: memref<1024x1024xbf16, #tpu.memory_space<vmem>>, %arg7: memref<1x1024xf32, #tpu.memory_space<vmem>>, %arg8: memref<1024x128xbf16, #tpu.memory_space<vmem>>, %arg9: memref<1x128xf32, #tpu.memory_space<vmem>>, %arg10: memref<2x128xf32, #tpu.memory_space<vmem>>, %arg11: memref<2x18x18xf32, #tpu.memory_space<vmem>>, %arg12: memref<32x64xbf16, #tpu.memory_space<vmem>>, %arg13: memref<2x10x160xf32, #tpu.memory_space<vmem>>, %arg14: memref<16x512xbf16, #tpu.memory_space<vmem>>) attributes {dimension_semantics = [#tpu.dimension_semantics<parallel>], iteration_bounds = array<i64: 1>, scalar_prefetch = 0 : i64, scratch_operands = 4 : i64, tpu.core_type = #tpu.core_type<tc>, window_params = [{transform_indices = @transform_0, window_bounds = array<i64: 2, 16, 16>}, {pipeline_mode = #tpu.pipeline_mode<synchronous>, transform_indices = @transform_1, window_bounds = array<i64: 64, 256>}, {pipeline_mode = #tpu.pipeline_mode<synchronous>, transform_indices = @transform_2, window_bounds = array<i64: 1, 256>}, {pipeline_mode = #tpu.pipeline_mode<synchronous>, transform_indices = @transform_3, window_bounds = array<i64: 512, 512>}, {pipeline_mode = #tpu.pipeline_mode<synchronous>, transform_indices = @transform_4, window_bounds = array<i64: 1, 512>}, {pipeline_mode = #tpu.pipeline_mode<synchronous>, transform_indices = @transform_5, window_bounds = array<i64: 1024, 1024>}, {pipeline_mode = #tpu.pipeline_mode<synchronous>, transform_indices = @transform_6, window_bounds = array<i64: 1, 1024>}, {pipeline_mode = #tpu.pipeline_mode<synchronous>, transform_indices = @transform_7, window_bounds = array<i64: 1024, 128>}, {pipeline_mode = #tpu.pipeline_mode<synchronous>, transform_indices = @transform_8, window_bounds = array<i64: 1, 128>}, {transform_indices = @transform_9, window_bounds = array<i64: 2, 128>}]} {
    %cst = arith.constant 0.000000e+00 : f32
    %0 = vector.broadcast %cst : f32 to vector<2x18x18xf32>
    %c0 = arith.constant 0 : index
    %c0_0 = arith.constant 0 : index
    %c0_1 = arith.constant 0 : index
    %1 = vector.load %arg11[%c0, %c0_0, %c0_1] : memref<2x18x18xf32, #tpu.memory_space<vmem>>, vector<2x18x18xf32>
    tpu.vector_store %arg11[%c0, %c0_0, %c0_1], %0 {strides = array<i32>} : memref<2x18x18xf32, #tpu.memory_space<vmem>>, vector<2x18x18xf32>,
    %c0_2 = arith.constant 0 : index
    %c0_3 = arith.constant 0 : index
    %c0_4 = arith.constant 0 : index
    %2 = vector.load %arg1[%c0_2, %c0_3, %c0_4] : memref<2x16x16xf32, #tpu.memory_space<vmem>>, vector<2x16x16xf32>
    %c0_5 = arith.constant 0 : index
    %c1 = arith.constant 1 : index
    %c1_6 = arith.constant 1 : index
    %3 = vector.load %arg11[%c0_5, %c1, %c1_6] : memref<2x18x18xf32, #tpu.memory_space<vmem>>, vector<2x16x16xf32>
    tpu.vector_store %arg11[%c0_5, %c1, %c1_6], %2 {strides = array<i32>} : memref<2x18x18xf32, #tpu.memory_space<vmem>>, vector<2x16x16xf32>,
    %cst_7 = arith.constant 0.000000e+00 : bf16
    %4 = vector.broadcast %cst_7 : bf16 to vector<32x10xbf16>
    %c0_8 = arith.constant 0 : index
    %c54 = arith.constant 54 : index
    %5 = vector.load %arg12[%c0_8, %c54] : memref<32x64xbf16, #tpu.memory_space<vmem>>, vector<32x10xbf16>
    tpu.vector_store %arg12[%c0_8, %c54], %4 {strides = array<i32>} : memref<32x64xbf16, #tpu.memory_space<vmem>>, vector<32x10xbf16>,
    %c0_9 = arith.constant 0 : index
    %c0_10 = arith.constant 0 : index
    %c0_11 = arith.constant 0 : index
    %6 = vector.load %arg11[%c0_9, %c0_10, %c0_11] : memref<2x18x18xf32, #tpu.memory_space<vmem>>, vector<2x16x18xf32>
    %7 = vector.shape_cast %6 : vector<2x16x18xf32> to vector<32x18xf32>
    %8 = arith.truncf %7 : vector<32x18xf32> to vector<32x18xbf16>
    %c0_12 = arith.constant 0 : index
    %c0_13 = arith.constant 0 : index
    %9 = vector.load %arg12[%c0_12, %c0_13] : memref<32x64xbf16, #tpu.memory_space<vmem>>, vector<32x18xbf16>
    tpu.vector_store %arg12[%c0_12, %c0_13], %8 {strides = array<i32>} : memref<32x64xbf16, #tpu.memory_space<vmem>>, vector<32x18xbf16>,
    %c0_14 = arith.constant 0 : index
    %c1_15 = arith.constant 1 : index
    %c0_16 = arith.constant 0 : index
    %10 = vector.load %arg11[%c0_14, %c1_15, %c0_16] : memref<2x18x18xf32, #tpu.memory_space<vmem>>, vector<2x16x18xf32>
    %11 = vector.shape_cast %10 : vector<2x16x18xf32> to vector<32x18xf32>
    %12 = arith.truncf %11 : vector<32x18xf32> to vector<32x18xbf16>
    %c0_17 = arith.constant 0 : index
    %c18 = arith.constant 18 : index
    %13 = vector.load %arg12[%c0_17, %c18] : memref<32x64xbf16, #tpu.memory_space<vmem>>, vector<32x18xbf16>
    tpu.vector_store %arg12[%c0_17, %c18], %12 {strides = array<i32>} : memref<32x64xbf16, #tpu.memory_space<vmem>>, vector<32x18xbf16>,
    %c0_18 = arith.constant 0 : index
    %c2 = arith.constant 2 : index
    %c0_19 = arith.constant 0 : index
    %14 = vector.load %arg11[%c0_18, %c2, %c0_19] : memref<2x18x18xf32, #tpu.memory_space<vmem>>, vector<2x16x18xf32>
    %15 = vector.shape_cast %14 : vector<2x16x18xf32> to vector<32x18xf32>
    %16 = arith.truncf %15 : vector<32x18xf32> to vector<32x18xbf16>
    %c0_20 = arith.constant 0 : index
    %c36 = arith.constant 36 : index
    %17 = vector.load %arg12[%c0_20, %c36] : memref<32x64xbf16, #tpu.memory_space<vmem>>, vector<32x18xbf16>
    tpu.vector_store %arg12[%c0_20, %c36], %16 {strides = array<i32>} : memref<32x64xbf16, #tpu.memory_space<vmem>>, vector<32x18xbf16>,
    %c0_21 = arith.constant 0 : index
    %c0_22 = arith.constant 0 : index
    %18 = vector.load %arg12[%c0_21, %c0_22] : memref<32x64xbf16, #tpu.memory_space<vmem>>, vector<32x64xbf16>
    %c0_23 = arith.constant 0 : index
    %c0_24 = arith.constant 0 : index
    %19 = vector.load %arg2[%c0_23, %c0_24] : memref<64x256xbf16, #tpu.memory_space<vmem>>, vector<64x256xbf16>
    %cst_25 = arith.constant dense<0.000000e+00> : vector<32x256xf32>
    %20 = tpu.matmul %18, %19, %cst_25 {dimension_numbers = #tpu.dot_dimension_numbers<[1], [0], [0], [1], [0, 0, 1, 1], [], []>} : vector<32x64xbf16>, vector<64x256xbf16>, vector<32x256xf32> -> vector<32x256xf32>
    %c0_26 = arith.constant 0 : index
    %c0_27 = arith.constant 0 : index
    %21 = vector.load %arg3[%c0_26, %c0_27] : memref<1x256xf32, #tpu.memory_space<vmem>>, vector<1x256xf32>
    %22 = vector.broadcast %21 : vector<1x256xf32> to vector<32x256xf32>
    %23 = arith.addf %20, %22 : vector<32x256xf32>
    %24 = vector.extract_strided_slice %23 {offsets = [0, 0], sizes = [32, 128], strides = [1, 1]} : vector<32x256xf32> to vector<32x128xf32>
    %25 = vector.extract_strided_slice %23 {offsets = [0, 128], sizes = [32, 128], strides = [1, 1]} : vector<32x256xf32> to vector<32x128xf32>
    %26 = arith.maximumf %24, %25 : vector<32x128xf32>
    %27 = vector.shape_cast %26 : vector<32x128xf32> to vector<2x8x2x128xf32>
    %cst_28 = arith.constant dense<0xFF800000> : vector<2x8x128xf32>
    %28 = vector.multi_reduction <maximumf>, %27, %cst_28 [2] : vector<2x8x2x128xf32> to vector<2x8x128xf32>
    %cst_29 = arith.constant 0.000000e+00 : f32
    %29 = vector.broadcast %cst_29 : f32 to vector<2x8x128xf32>
    %30 = arith.maximumf %28, %29 : vector<2x8x128xf32>
    %cst_30 = arith.constant 0.000000e+00 : f32
    %31 = vector.broadcast %cst_30 : f32 to vector<2x10x160xf32>
    %c0_31 = arith.constant 0 : index
    %c0_32 = arith.constant 0 : index
    %c0_33 = arith.constant 0 : index
    %32 = vector.load %arg13[%c0_31, %c0_32, %c0_33] : memref<2x10x160xf32, #tpu.memory_space<vmem>>, vector<2x10x160xf32>
    tpu.vector_store %arg13[%c0_31, %c0_32, %c0_33], %31 {strides = array<i32>} : memref<2x10x160xf32, #tpu.memory_space<vmem>>, vector<2x10x160xf32>,
    %c0_34 = arith.constant 0 : index
    %c1_35 = arith.constant 1 : index
    %c16 = arith.constant 16 : index
    %33 = vector.load %arg13[%c0_34, %c1_35, %c16] : memref<2x10x160xf32, #tpu.memory_space<vmem>>, vector<2x8x128xf32>
    tpu.vector_store %arg13[%c0_34, %c1_35, %c16], %30 {strides = array<i32>} : memref<2x10x160xf32, #tpu.memory_space<vmem>>, vector<2x8x128xf32>,
    %cst_36 = arith.constant 0.000000e+00 : bf16
    %34 = vector.broadcast %cst_36 : bf16 to vector<16x32xbf16>
    %c0_37 = arith.constant 0 : index
    %c480 = arith.constant 480 : index
    %35 = vector.load %arg14[%c0_37, %c480] : memref<16x512xbf16, #tpu.memory_space<vmem>>, vector<16x32xbf16>
    tpu.vector_store %arg14[%c0_37, %c480], %34 {strides = array<i32>} : memref<16x512xbf16, #tpu.memory_space<vmem>>, vector<16x32xbf16>,
    %c0_38 = arith.constant 0 : index
    %c0_39 = arith.constant 0 : index
    %c0_40 = arith.constant 0 : index
    %36 = vector.load %arg13[%c0_38, %c0_39, %c0_40] : memref<2x10x160xf32, #tpu.memory_space<vmem>>, vector<2x8x160xf32>
    %37 = vector.shape_cast %36 : vector<2x8x160xf32> to vector<16x160xf32>
    %38 = arith.truncf %37 : vector<16x160xf32> to vector<16x160xbf16>
    %c0_41 = arith.constant 0 : index
    %c0_42 = arith.constant 0 : index
    %39 = vector.load %arg14[%c0_41, %c0_42] : memref<16x512xbf16, #tpu.memory_space<vmem>>, vector<16x160xbf16>
    tpu.vector_store %arg14[%c0_41, %c0_42], %38 {strides = array<i32>} : memref<16x512xbf16, #tpu.memory_space<vmem>>, vector<16x160xbf16>,
    %c0_43 = arith.constant 0 : index
    %c1_44 = arith.constant 1 : index
    %c0_45 = arith.constant 0 : index
    %40 = vector.load %arg13[%c0_43, %c1_44, %c0_45] : memref<2x10x160xf32, #tpu.memory_space<vmem>>, vector<2x8x160xf32>
    %41 = vector.shape_cast %40 : vector<2x8x160xf32> to vector<16x160xf32>
    %42 = arith.truncf %41 : vector<16x160xf32> to vector<16x160xbf16>
    %c0_46 = arith.constant 0 : index
    %c160 = arith.constant 160 : index
    %43 = vector.load %arg14[%c0_46, %c160] : memref<16x512xbf16, #tpu.memory_space<vmem>>, vector<16x160xbf16>
    tpu.vector_store %arg14[%c0_46, %c160], %42 {strides = array<i32>} : memref<16x512xbf16, #tpu.memory_space<vmem>>, vector<16x160xbf16>,
    %c0_47 = arith.constant 0 : index
    %c2_48 = arith.constant 2 : index
    %c0_49 = arith.constant 0 : index
    %44 = vector.load %arg13[%c0_47, %c2_48, %c0_49] : memref<2x10x160xf32, #tpu.memory_space<vmem>>, vector<2x8x160xf32>
    %45 = vector.shape_cast %44 : vector<2x8x160xf32> to vector<16x160xf32>
    %46 = arith.truncf %45 : vector<16x160xf32> to vector<16x160xbf16>
    %c0_50 = arith.constant 0 : index
    %c320 = arith.constant 320 : index
    %47 = vector.load %arg14[%c0_50, %c320] : memref<16x512xbf16, #tpu.memory_space<vmem>>, vector<16x160xbf16>
    tpu.vector_store %arg14[%c0_50, %c320], %46 {strides = array<i32>} : memref<16x512xbf16, #tpu.memory_space<vmem>>, vector<16x160xbf16>,
    %c0_51 = arith.constant 0 : index
    %c0_52 = arith.constant 0 : index
    %48 = vector.load %arg14[%c0_51, %c0_52] : memref<16x512xbf16, #tpu.memory_space<vmem>>, vector<16x512xbf16>
    %c0_53 = arith.constant 0 : index
    %c0_54 = arith.constant 0 : index
    %49 = vector.load %arg4[%c0_53, %c0_54] : memref<512x512xbf16, #tpu.memory_space<vmem>>, vector<512x512xbf16>
    %cst_55 = arith.constant dense<0.000000e+00> : vector<16x512xf32>
    %50 = tpu.matmul %48, %49, %cst_55 {dimension_numbers = #tpu.dot_dimension_numbers<[1], [0], [0], [1], [0, 0, 1, 1], [], []>} : vector<16x512xbf16>, vector<512x512xbf16>, vector<16x512xf32> -> vector<16x512xf32>
    %c0_56 = arith.constant 0 : index
    %c0_57 = arith.constant 0 : index
    %51 = vector.load %arg5[%c0_56, %c0_57] : memref<1x512xf32, #tpu.memory_space<vmem>>, vector<1x512xf32>
    %52 = vector.broadcast %51 : vector<1x512xf32> to vector<16x512xf32>
    %53 = arith.addf %50, %52 : vector<16x512xf32>
    %54 = vector.extract_strided_slice %53 {offsets = [0, 0], sizes = [16, 256], strides = [1, 1]} : vector<16x512xf32> to vector<16x256xf32>
    %55 = vector.extract_strided_slice %53 {offsets = [0, 256], sizes = [16, 256], strides = [1, 1]} : vector<16x512xf32> to vector<16x256xf32>
    %56 = arith.maximumf %54, %55 : vector<16x256xf32>
    %57 = vector.shape_cast %56 : vector<16x256xf32> to vector<2x4x2x256xf32>
    %cst_58 = arith.constant dense<0xFF800000> : vector<2x4x256xf32>
    %58 = vector.multi_reduction <maximumf>, %57, %cst_58 [2] : vector<2x4x2x256xf32> to vector<2x4x256xf32>
    %cst_59 = arith.constant 0.000000e+00 : f32
    %59 = vector.broadcast %cst_59 : f32 to vector<2x4x256xf32>
    %60 = arith.maximumf %58, %59 : vector<2x4x256xf32>
    %61 = vector.shape_cast %60 : vector<2x4x256xf32> to vector<2x1024xf32>
    %62 = arith.truncf %61 : vector<2x1024xf32> to vector<2x1024xbf16>
    %c0_60 = arith.constant 0 : index
    %c0_61 = arith.constant 0 : index
    %63 = vector.load %arg6[%c0_60, %c0_61] : memref<1024x1024xbf16, #tpu.memory_space<vmem>>, vector<1024x1024xbf16>
    %cst_62 = arith.constant dense<0.000000e+00> : vector<2x1024xf32>
    %64 = tpu.matmul %62, %63, %cst_62 {dimension_numbers = #tpu.dot_dimension_numbers<[1], [0], [0], [1], [0, 0, 1, 1], [], []>} : vector<2x1024xbf16>, vector<1024x1024xbf16>, vector<2x1024xf32> -> vector<2x1024xf32>
    %c0_63 = arith.constant 0 : index
    %c0_64 = arith.constant 0 : index
    %65 = vector.load %arg7[%c0_63, %c0_64] : memref<1x1024xf32, #tpu.memory_space<vmem>>, vector<1x1024xf32>
    %66 = vector.broadcast %65 : vector<1x1024xf32> to vector<2x1024xf32>
    %67 = arith.addf %64, %66 : vector<2x1024xf32>
    %cst_65 = arith.constant 0.000000e+00 : f32
    %68 = vector.broadcast %cst_65 : f32 to vector<2x1024xf32>
    %69 = arith.maximumf %67, %68 : vector<2x1024xf32>
    %70 = arith.truncf %69 : vector<2x1024xf32> to vector<2x1024xbf16>
    %c0_66 = arith.constant 0 : index
    %c0_67 = arith.constant 0 : index
    %71 = vector.load %arg8[%c0_66, %c0_67] : memref<1024x128xbf16, #tpu.memory_space<vmem>>, vector<1024x128xbf16>
    %cst_68 = arith.constant dense<0.000000e+00> : vector<2x128xf32>
    %72 = tpu.matmul %70, %71, %cst_68 {dimension_numbers = #tpu.dot_dimension_numbers<[1], [0], [0], [1], [0, 0, 1, 1], [], []>} : vector<2x1024xbf16>, vector<1024x128xbf16>, vector<2x128xf32> -> vector<2x128xf32>
    %c0_69 = arith.constant 0 : index
    %c0_70 = arith.constant 0 : index
    %73 = vector.load %arg9[%c0_69, %c0_70] : memref<1x128xf32, #tpu.memory_space<vmem>>, vector<1x128xf32>
    %74 = vector.broadcast %73 : vector<1x128xf32> to vector<2x128xf32>
    %75 = arith.addf %72, %74 : vector<2x128xf32>
    %c0_71 = arith.constant 0 : index
    %c0_72 = arith.constant 0 : index
    %76 = vector.load %arg10[%c0_71, %c0_72] : memref<2x128xf32, #tpu.memory_space<vmem>>, vector<2x128xf32>
    tpu.vector_store %arg10[%c0_71, %c0_72], %75 {strides = array<i32>} : memref<2x128xf32, #tpu.memory_space<vmem>>, vector<2x128xf32>,
    return
  }
  func.func @transform_0(%arg0: i32) -> (i32, i32, i32) {
    %c0_i32 = arith.constant 0 : i32
    %c0_i32_0 = arith.constant 0 : i32
    %c0_i32_1 = arith.constant 0 : i32
    return %arg0, %c0_i32, %c0_i32_0 : i32, i32, i32
  }
  func.func @transform_1(%arg0: i32) -> (i32, i32) {
    %c0_i32 = arith.constant 0 : i32
    %c0_i32_0 = arith.constant 0 : i32
    %c0_i32_1 = arith.constant 0 : i32
    return %c0_i32, %c0_i32_0 : i32, i32
  }
  func.func @transform_2(%arg0: i32) -> (i32, i32) {
    %c0_i32 = arith.constant 0 : i32
    %c0_i32_0 = arith.constant 0 : i32
    %c0_i32_1 = arith.constant 0 : i32
    return %c0_i32, %c0_i32_0 : i32, i32
  }
  func.func @transform_3(%arg0: i32) -> (i32, i32) {
    %c0_i32 = arith.constant 0 : i32
    %c0_i32_0 = arith.constant 0 : i32
    %c0_i32_1 = arith.constant 0 : i32
    return %c0_i32, %c0_i32_0 : i32, i32
  }
  func.func @transform_4(%arg0: i32) -> (i32, i32) {
    %c0_i32 = arith.constant 0 : i32
    %c0_i32_0 = arith.constant 0 : i32
    %c0_i32_1 = arith.constant 0 : i32
    return %c0_i32, %c0_i32_0 : i32, i32
  }
  func.func @transform_5(%arg0: i32) -> (i32, i32) {
    %c0_i32 = arith.constant 0 : i32
    %c0_i32_0 = arith.constant 0 : i32
    %c0_i32_1 = arith.constant 0 : i32
    return %c0_i32, %c0_i32_0 : i32, i32
  }
  func.func @transform_6(%arg0: i32) -> (i32, i32) {
    %c0_i32 = arith.constant 0 : i32
    %c0_i32_0 = arith.constant 0 : i32
    %c0_i32_1 = arith.constant 0 : i32
    return %c0_i32, %c0_i32_0 : i32, i32
  }
  func.func @transform_7(%arg0: i32) -> (i32, i32) {
    %c0_i32 = arith.constant 0 : i32
    %c0_i32_0 = arith.constant 0 : i32
    %c0_i32_1 = arith.constant 0 : i32
    return %c0_i32, %c0_i32_0 : i32, i32
  }
  func.func @transform_8(%arg0: i32) -> (i32, i32) {
    %c0_i32 = arith.constant 0 : i32
    %c0_i32_0 = arith.constant 0 : i32
    %c0_i32_1 = arith.constant 0 : i32
    return %c0_i32, %c0_i32_0 : i32, i32
  }
  func.func @transform_9(%arg0: i32) -> (i32, i32) {
    %c0_i32 = arith.constant 0 : i32
    %c0_i32_0 = arith.constant 0 : i32
    return %arg0, %c0_i32 : i32, i32
  }
}

</mosaic_0001>

<llo_original>
// kernel: fcnn_forward.1
$region0: #{fcnn_forward.1}
  #allocation0 [shape = 'u32[]', space=smem, size = 0x4, offset = 0x4, fixed_abs, tag = 'smem constant byte address 0x4 - core index']
  #allocation1 [shape = 'u32[144,128]{1,0:T(1,128)}', space=vmem, size = 0x12000, scoped, tag = 'internal scratch']
  #allocation2 [shape = 'f32[2,18,18]{2,1,0:T(8,128)}', space=vmem, size = 0x6000, scoped, tag = 'scratch operand']
  #allocation3 [shape = 'bf16[32,64]{1,0:T(16,128)(2,1)}', space=vmem, size = 0x2000, scoped, tag = 'scratch operand']
  #allocation4 [shape = 'f32[2,10,160]{2,1,0:T(8,128)}', space=vmem, size = 0x8000, scoped, tag = 'scratch operand']
  #allocation5 [shape = 'bf16[16,512]{1,0:T(16,128)(2,1)}', space=vmem, size = 0x4000, scoped, tag = 'scratch operand']
  %s0 = inlined_call_operand.hbm [shape: f32[2,16,16], index: 0, kind: input, shape index: {}]
  %s1 = inlined_call_operand.hbm [shape: bf16[64,256], index: 1, kind: input, shape index: {}]
  %s2 = inlined_call_operand.hbm [shape: f32[1,256], index: 2, kind: input, shape index: {}]
  %s3 = inlined_call_operand.hbm [shape: bf16[512,512], index: 3, kind: input, shape index: {}]
  %s4 = inlined_call_operand.hbm [shape: f32[1,512], index: 4, kind: input, shape index: {}]
  %s5 = inlined_call_operand.hbm [shape: bf16[1024,1024], index: 5, kind: input, shape index: {}]
  %s6 = inlined_call_operand.hbm [shape: f32[1,1024], index: 6, kind: input, shape index: {}]
  %s7 = inlined_call_operand.hbm [shape: bf16[1024,128], index: 7, kind: input, shape index: {}]
  %s8 = inlined_call_operand.hbm [shape: f32[1,128], index: 8, kind: input, shape index: {}]
  %s9 = inlined_call_operand.hbm [shape: f32[2,128], index: 9, kind: output, shape index: {}]
  %s10 = sld [smem:[#allocation0]]
  $region82: #{fcnn_forward.1} parent=0
    _
  %s12 = ssub.s32 1, %s10
  %s13 = scalar_select 0, %s12, %s10
  $region1: #{fcnn_forward.1} parent=0
    #allocation6 [shape = 'u8[16384]{0}', space=vmem, size = 0x4000, scoped, tag = 'input window, operand 0, single buffered']
    #allocation7 [shape = 's32[1]{0}', space=sflag, size = 0x4, scoped, tag = 'scoped memory for fcnn_forward.1']
    #allocation8 [shape = 's32[1]{0}', space=sflag, size = 0x4, scoped, tag = 'scoped memory for fcnn_forward.1']
    #allocation9 [shape = 'u8[32768]{0}', space=vmem, size = 0x8000, scoped, tag = 'input window, operand 1, single buffered']
    #allocation10 [shape = 's32[1]{0}', space=sflag, size = 0x4, scoped, tag = 'scoped memory for fcnn_forward.1']
    #allocation11 [shape = 'u8[1024]{0}', space=vmem, size = 0x400, scoped, tag = 'input window, operand 2, single buffered']
    #allocation12 [shape = 'u8[524288]{0}', space=vmem, size = 0x80000, scoped, tag = 'input window, operand 3, single buffered']
    #allocation13 [shape = 's32[1]{0}', space=sflag, size = 0x4, scoped, tag = 'scoped memory for fcnn_forward.1']
    #allocation14 [shape = 'u8[2048]{0}', space=vmem, size = 0x800, scoped, tag = 'input window, operand 4, single buffered']
    #allocation15 [shape = 'u8[2097152]{0}', space=vmem, size = 0x200000, scoped, tag = 'input window, operand 5, single buffered']
    #allocation16 [shape = 's32[1]{0}', space=sflag, size = 0x4, scoped, tag = 'scoped memory for fcnn_forward.1']
    #allocation17 [shape = 'u8[4096]{0}', space=vmem, size = 0x1000, scoped, tag = 'input window, operand 6, single buffered']
    #allocation18 [shape = 'u8[262144]{0}', space=vmem, size = 0x40000, scoped, tag = 'input window, operand 7, single buffered']
    #allocation19 [shape = 's32[1]{0}', space=sflag, size = 0x4, scoped, tag = 'scoped memory for fcnn_forward.1']
    #allocation20 [shape = 'u8[512]{0}', space=vmem, size = 0x400, scoped, tag = 'input window, operand 8, single buffered']
    #allocation21 [shape = 'u8[1024]{0}', space=vmem, size = 0x400, scoped, tag = 'output window, operand 0, single buffered']
    %14 = vsyncpa [#allocation7], 0
    %15 = vsyncpa [#allocation10], 0
    %16 = vsyncpa [#allocation13], 0
    %17 = vsyncpa [#allocation16], 0
    %18 = vsyncpa [#allocation19], 0
    %19 = vsyncpa [#allocation8], 0
    // Predicated region
    $region2: #{fcnn_forward.1} parent=1 // pred_check
      _
    $region3: #{fcnn_forward.1} parent=1 // pred_check_branch
      %21 = sbr.rel (0) target = $region5
    $region4: #{fcnn_forward.1} parent=1 // pred_region
      %s23 = ssub.s32 512, 512
      %24 = vsyncadd [#allocation7], %s23
      %s25 = sshll.u32 [#allocation6], 4
      %s26 = int_to_ptr.vmem [resolvable:$true] %s25
      %31 = dma.hbm_to_vmem [thread:$0]  %s0, 512, %s26, [#allocation7], 128, 128, 8
    $region5: #{fcnn_forward.1} parent=1 // pred_fallthru
      _
    // Predicated region
    $region6: #{fcnn_forward.1} parent=1 // pred_check
      _
    $region7: #{fcnn_forward.1} parent=1 // pred_check_branch
      %33 = sbr.rel (0) target = $region9
    $region8: #{fcnn_forward.1} parent=1 // pred_region
      %s35 = ssub.s32 1024, 1024
      %36 = vsyncadd [#allocation10], %s35
      %s37 = sshll.u32 [#allocation9], 4
      %s38 = int_to_ptr.vmem [resolvable:$true] %s37
      %43 = dma.hbm_to_vmem [thread:$0]  %s1, 1024, %s38, [#allocation10], 128, 128, 8
    $region9: #{fcnn_forward.1} parent=1 // pred_fallthru
      _
    // Predicated region
    $region10: #{fcnn_forward.1} parent=1 // pred_check
      _
    $region11: #{fcnn_forward.1} parent=1 // pred_check_branch
      %45 = sbr.rel (0) target = $region13
    $region12: #{fcnn_forward.1} parent=1 // pred_region
      %s47 = ssub.s32 32, 32
      %48 = vsyncadd [#allocation10], %s47
      %s50 = sshll.u32 [#allocation11], 4
      %s51 = int_to_ptr.vmem [resolvable:$true] %s50
      %53 = dma.hbm_to_vmem [thread:$0]  %s2, 32, %s51, [#allocation10]
    $region13: #{fcnn_forward.1} parent=1 // pred_fallthru
      _
    // Predicated region
    $region14: #{fcnn_forward.1} parent=1 // pred_check
      _
    $region15: #{fcnn_forward.1} parent=1 // pred_check_branch
      %55 = sbr.rel (0) target = $region17
    $region16: #{fcnn_forward.1} parent=1 // pred_region
      %s57 = ssub.s32 16384, 16384
      %58 = vsyncadd [#allocation13], %s57
      %s59 = sshll.u32 [#allocation12], 4
      %s60 = int_to_ptr.vmem [resolvable:$true] %s59
      %65 = dma.hbm_to_vmem [thread:$0]  %s3, 16384, %s60, [#allocation13], 256, 256, 16
    $region17: #{fcnn_forward.1} parent=1 // pred_fallthru
      _
    // Predicated region
    $region18: #{fcnn_forward.1} parent=1 // pred_check
      _
    $region19: #{fcnn_forward.1} parent=1 // pred_check_branch
      %67 = sbr.rel (0) target = $region21
    $region20: #{fcnn_forward.1} parent=1 // pred_region
      %s69 = ssub.s32 64, 64
      %70 = vsyncadd [#allocation13], %s69
      %s72 = sshll.u32 [#allocation14], 4
      %s73 = int_to_ptr.vmem [resolvable:$true] %s72
      %75 = dma.hbm_to_vmem [thread:$0]  %s4, 64, %s73, [#allocation13]
    $region21: #{fcnn_forward.1} parent=1 // pred_fallthru
      _
    // Predicated region
    $region22: #{fcnn_forward.1} parent=1 // pred_check
      _
    $region23: #{fcnn_forward.1} parent=1 // pred_check_branch
      %77 = sbr.rel (0) target = $region25
    $region24: #{fcnn_forward.1} parent=1 // pred_region
      %s79 = ssub.s32 65536, 65536
      %80 = vsyncadd [#allocation16], %s79
      %s81 = sshll.u32 [#allocation15], 4
      %s82 = int_to_ptr.vmem [resolvable:$true] %s81
      %87 = dma.hbm_to_vmem [thread:$0]  %s5, 65536, %s82, [#allocation16], 512, 512, 32
    $region25: #{fcnn_forward.1} parent=1 // pred_fallthru
      _
    // Predicated region
    $region26: #{fcnn_forward.1} parent=1 // pred_check
      _
    $region27: #{fcnn_forward.1} parent=1 // pred_check_branch
      %89 = sbr.rel (0) target = $region29
    $region28: #{fcnn_forward.1} parent=1 // pred_region
      %s91 = ssub.s32 128, 128
      %92 = vsyncadd [#allocation16], %s91
      %s94 = sshll.u32 [#allocation17], 4
      %s95 = int_to_ptr.vmem [resolvable:$true] %s94
      %97 = dma.hbm_to_vmem [thread:$0]  %s6, 128, %s95, [#allocation16]
    $region29: #{fcnn_forward.1} parent=1 // pred_fallthru
      _
    // Predicated region
    $region30: #{fcnn_forward.1} parent=1 // pred_check
      _
    $region31: #{fcnn_forward.1} parent=1 // pred_check_branch
      %99 = sbr.rel (0) target = $region33
    $region32: #{fcnn_forward.1} parent=1 // pred_region
      %s101 = ssub.s32 8192, 8192
      %102 = vsyncadd [#allocation19], %s101
      %s103 = sshll.u32 [#allocation18], 4
      %s104 = int_to_ptr.vmem [resolvable:$true] %s103
      %109 = dma.hbm_to_vmem [thread:$0]  %s7, 8192, %s104, [#allocation19], 64, 64, 4
    $region33: #{fcnn_forward.1} parent=1 // pred_fallthru
      _
    // Predicated region
    $region34: #{fcnn_forward.1} parent=1 // pred_check
      _
    $region35: #{fcnn_forward.1} parent=1 // pred_check_branch
      %111 = sbr.rel (0) target = $region37
    $region36: #{fcnn_forward.1} parent=1 // pred_region
      %s113 = ssub.s32 16, 16
      %114 = vsyncadd [#allocation19], %s113
      %s116 = sshll.u32 [#allocation20], 4
      %s117 = int_to_ptr.vmem [resolvable:$true] %s116
      %119 = dma.hbm_to_vmem [thread:$0]  %s8, 16, %s117, [#allocation19]
    $region37: #{fcnn_forward.1} parent=1 // pred_fallthru
      _
    // Predicated region
    $region38: #{fcnn_forward.1} parent=1 // pred_check
      _
    $region39: #{fcnn_forward.1} parent=1 // pred_check_branch
      %121 = sbr.rel (0) target = $region41
    $region40: #{fcnn_forward.1} parent=1 // pred_region
      %122 = dma.done [#allocation7], 512
    $region41: #{fcnn_forward.1} parent=1 // pred_fallthru
      _
    // Predicated region
    $region42: #{fcnn_forward.1} parent=1 // pred_check
      _
    $region43: #{fcnn_forward.1} parent=1 // pred_check_branch
      %124 = sbr.rel (0) target = $region45
    $region44: #{fcnn_forward.1} parent=1 // pred_region
      %125 = dma.done [#allocation10], 1024
    $region45: #{fcnn_forward.1} parent=1 // pred_fallthru
      _
    // Predicated region
    $region46: #{fcnn_forward.1} parent=1 // pred_check
      _
    $region47: #{fcnn_forward.1} parent=1 // pred_check_branch
      %127 = sbr.rel (0) target = $region49
    $region48: #{fcnn_forward.1} parent=1 // pred_region
      %128 = dma.done [#allocation10], 32
    $region49: #{fcnn_forward.1} parent=1 // pred_fallthru
      _
    // Predicated region
    $region50: #{fcnn_forward.1} parent=1 // pred_check
      _
    $region51: #{fcnn_forward.1} parent=1 // pred_check_branch
      %130 = sbr.rel (0) target = $region53
    $region52: #{fcnn_forward.1} parent=1 // pred_region
      %131 = dma.done [#allocation13], 16384
    $region53: #{fcnn_forward.1} parent=1 // pred_fallthru
      _
    // Predicated region
    $region54: #{fcnn_forward.1} parent=1 // pred_check
      _
    $region55: #{fcnn_forward.1} parent=1 // pred_check_branch
      %133 = sbr.rel (0) target = $region57
    $region56: #{fcnn_forward.1} parent=1 // pred_region
      %134 = dma.done [#allocation13], 64
    $region57: #{fcnn_forward.1} parent=1 // pred_fallthru
      _
    // Predicated region
    $region58: #{fcnn_forward.1} parent=1 // pred_check
      _
    $region59: #{fcnn_forward.1} parent=1 // pred_check_branch
      %136 = sbr.rel (0) target = $region61
    $region60: #{fcnn_forward.1} parent=1 // pred_region
      %137 = dma.done [#allocation16], 65536
    $region61: #{fcnn_forward.1} parent=1 // pred_fallthru
      _
    // Predicated region
    $region62: #{fcnn_forward.1} parent=1 // pred_check
      _
    $region63: #{fcnn_forward.1} parent=1 // pred_check_branch
      %139 = sbr.rel (0) target = $region65
    $region64: #{fcnn_forward.1} parent=1 // pred_region
      %140 = dma.done [#allocation16], 128
    $region65: #{fcnn_forward.1} parent=1 // pred_fallthru
      _
    // Predicated region
    $region66: #{fcnn_forward.1} parent=1 // pred_check
      _
    $region67: #{fcnn_forward.1} parent=1 // pred_check_branch
      %142 = sbr.rel (0) target = $region69
    $region68: #{fcnn_forward.1} parent=1 // pred_region
      %143 = dma.done [#allocation19], 8192
    $region69: #{fcnn_forward.1} parent=1 // pred_fallthru
      _
    // Predicated region
    $region70: #{fcnn_forward.1} parent=1 // pred_check
      _
    $region71: #{fcnn_forward.1} parent=1 // pred_check_branch
      %145 = sbr.rel (0) target = $region73
    $region72: #{fcnn_forward.1} parent=1 // pred_region
      %146 = dma.done [#allocation19], 16
    $region73: #{fcnn_forward.1} parent=1 // pred_fallthru
      _
    %vm148 = vcmask 146432
    %149 = vst.msk [vmem:[#allocation2] sm:$0xff] %vm148, 0.0
    %150 = vst.msk [vmem:[#allocation2 + $0x8] sm:$0xff] %vm148, 0.0
    %vm151 = vcmask 140288
    %152 = vst.msk [vmem:[#allocation2 + $0x10] sm:$0x3] %vm151, 0.0
    %153 = vst.msk [vmem:[#allocation2 + $0x18] sm:$0xff] %vm148, 0.0
    %154 = vst.msk [vmem:[#allocation2 + $0x20] sm:$0xff] %vm148, 0.0
    %155 = vst.msk [vmem:[#allocation2 + $0x28] sm:$0x3] %vm151, 0.0
    %v156 = vld [vmem:[#allocation6] sm:$0xff]
    %v157 = vld [vmem:[#allocation6 + $0x8] sm:$0xff]
    %v158 = vld [vmem:[#allocation6 + $0x10] sm:$0xff]
    %v159 = vld [vmem:[#allocation6 + $0x18] sm:$0xff]
    %164 = vrot.lane.b32.xlu0 %v156, 1
    %v165 = vpop.permute.xlu0 %164
    %166 = vrot.lane.b32.xlu0 %v157, 1
    %v167 = vpop.permute.xlu0 %166
    %168 = vrot.lane.b32.xlu0 %v158, 1
    %v169 = vpop.permute.xlu0 %168
    %170 = vrot.lane.b32.xlu0 %v159, 1
    %v171 = vpop.permute.xlu0 %170
    %vm176 = vcmask 138248
    %177 = vst.msk [vmem:[#allocation2 + $0x1] sm:$0xff] %vm176, %v165
    %178 = vst.msk [vmem:[#allocation2 + $0x9] sm:$0xff] %vm176, %v167
    %179 = vst.msk [vmem:[#allocation2 + $0x19] sm:$0xff] %vm176, %v169
    %180 = vst.msk [vmem:[#allocation2 + $0x21] sm:$0xff] %vm176, %v171
    %vm181 = vcmask 523696
    %182 = vst.msk [vmem:[#allocation3] sm:$0xff] %vm181, 0
    %183 = vst.msk [vmem:[#allocation3 + $0x8] sm:$0xff] %vm181, 0
    %v184 = vld [vmem:[#allocation2] sm:$0xff]
    %v185 = vld [vmem:[#allocation2 + $0x8] sm:$0xff]
    %v186 = vld [vmem:[#allocation2 + $0x18] sm:$0xff]
    %v187 = vld [vmem:[#allocation2 + $0x20] sm:$0xff]
    %v188 = vpack.c.bf16 %v185, %v184
    %v189 = vpack.c.bf16 %v187, %v186
    %190 = vst.msk [vmem:[#allocation3] sm:$0xff] %vm148, %v188
    %191 = vst.msk [vmem:[#allocation3 + $0x8] sm:$0xff] %vm148, %v189
    %v192 = vld [vmem:[#allocation2 + $0x1] sm:$0xff]
    %v193 = vld [vmem:[#allocation2 + $0x9] sm:$0xff]
    %v194 = vld [vmem:[#allocation2 + $0x19] sm:$0xff]
    %v195 = vld [vmem:[#allocation2 + $0x21] sm:$0xff]
    %v196 = vpack.c.bf16 %v193, %v192
    %v197 = vpack.c.bf16 %v195, %v194
    %200 = vrot.lane.b32.xlu0 %v196, 18
    %v201 = vpop.permute.xlu0 %200
    %202 = vrot.lane.b32.xlu0 %v197, 18
    %v203 = vpop.permute.xlu0 %202
    %vm206 = vcmask 294032
    %207 = vst.msk [vmem:[#allocation3] sm:$0xff] %vm206, %v201
    %208 = vst.msk [vmem:[#allocation3 + $0x8] sm:$0xff] %vm206, %v203
    %v209 = vld [vmem:[#allocation2 + $0x2] sm:$0xff]
    %v210 = vld [vmem:[#allocation2 + $0xa] sm:$0xff]
    %v211 = vld [vmem:[#allocation2 + $0x1a] sm:$0xff]
    %v212 = vld [vmem:[#allocation2 + $0x22] sm:$0xff]
    %v213 = vpack.c.bf16 %v210, %v209
    %v214 = vpack.c.bf16 %v212, %v211
    %217 = vrot.lane.b32.xlu0 %v213, 36
    %v218 = vpop.permute.xlu0 %217
    %219 = vrot.lane.b32.xlu0 %v214, 36
    %v220 = vpop.permute.xlu0 %219
    %vm223 = vcmask 441632
    %224 = vst.msk [vmem:[#allocation3] sm:$0xff] %vm223, %v218
    %225 = vst.msk [vmem:[#allocation3 + $0x8] sm:$0xff] %vm223, %v220
    %v226 = vld [vmem:[#allocation3] sm:$0xff]
    %v227 = vld [vmem:[#allocation3 + $0x8] sm:$0xff]
    %v228 = vld [vmem:[#allocation9] sm:$0xff]
    %v229 = vld [vmem:[#allocation9 + $0x8] sm:$0xff]
    %v230 = vld [vmem:[#allocation9 + $0x10] sm:$0xff]
    %v231 = vld [vmem:[#allocation9 + $0x18] sm:$0xff]
    %v232 = vld [vmem:[#allocation9 + $0x20] sm:$0xff]
    %v233 = vld [vmem:[#allocation9 + $0x28] sm:$0xff]
    %v234 = vld [vmem:[#allocation9 + $0x30] sm:$0xff]
    %v235 = vld [vmem:[#allocation9 + $0x38] sm:$0xff]
    %v236 = vld [vmem:[#allocation11] sm:$0x3]
    %v238 = vlaneseq
    %v239 = vshrl.u32 %v238, 7
    %v240 = vsub.s32 0, %v239
    %v241 = vrot.slane %v236, %v240
    %v242 = vlaneseq
    %v243 = vshrl.u32 %v242, 7
    %v244 = vsub.s32 1, %v243
    %v245 = vrot.slane %v236, %v244
    %v256 = vunpack.c.l.b16 %v228
    %v257 = vunpack.c.h.b16 %v228
    %v258 = vunpack.c.l.b16 %v229
    %v259 = vunpack.c.h.b16 %v229
    %v260 = vunpack.c.l.b16 %v230
    %v261 = vunpack.c.h.b16 %v230
    %v262 = vunpack.c.l.b16 %v231
    %v263 = vunpack.c.h.b16 %v231
    %v264 = vunpack.c.l.b16 %v232
    %v265 = vunpack.c.h.b16 %v232
    %v266 = vunpack.c.l.b16 %v233
    %v267 = vunpack.c.h.b16 %v233
    %v268 = vunpack.c.l.b16 %v234
    %v269 = vunpack.c.h.b16 %v234
    %v270 = vunpack.c.l.b16 %v235
    %v271 = vunpack.c.h.b16 %v235
    %v272 = vpack.c.b16 %v258, %v256
    %v273 = vpack.c.b16 %v259, %v257
    %v274 = vpack.c.b16 %v262, %v260
    %v275 = vpack.c.b16 %v263, %v261
    %v276 = vpack.c.b16 %v266, %v264
    %v277 = vpack.c.b16 %v267, %v265
    %v278 = vpack.c.b16 %v270, %v268
    %v279 = vpack.c.b16 %v271, %v269
    %vm288 = vcmask 523264
    %v290 = vsel %vm288, %v226, 0
    %v293 = vsel %vm288, %v227, 0
    %295 = vmatprep.subr.bf16.mxu0 %v273
    %296 = vmatpush1.bf16.msra.mxu0 %v272
    %297 = vmatprep.subr.bf16.mxu0 %v275
    %298 = vmatpush1.bf16.msra.mxu0 %v274
    %299 = vmatprep.subr.bf16.mxu0 %v277
    %300 = vmatpush1.bf16.msra.mxu0 %v276
    %301 = vmatprep.subr.bf16.mxu0 %v279
    %302 = vmatpush1.bf16.msra.mxu0 %v278
    %303 = vmatprep.subr.bf16.mxu0 0
    %304 = vmatpush1.bf16.msra.mxu0 0
    %305 = vmatprep.subr.bf16.mxu0 0
    %306 = vmatpush1.bf16.msra.mxu0 0
    %307 = vmatprep.subr.bf16.mxu0 0
    %308 = vmatpush1.bf16.msra.mxu0 0
    %309 = vmatprep.subr.bf16.mxu0 0
    %310 = vmatpush1.bf16.msra.mxu0 0
    %311 = vmatprep.subr.bf16.mxu0 0
    %312 = vmatpush1.bf16.msra.mxu0 0
    %313 = vmatprep.subr.bf16.mxu0 0
    %314 = vmatpush1.bf16.msra.mxu0 0
    %315 = vmatprep.subr.bf16.mxu0 0
    %316 = vmatpush1.bf16.msra.mxu0 0
    %317 = vmatprep.subr.bf16.mxu0 0
    %318 = vmatpush1.bf16.msra.mxu0 0
    %319 = vmatprep.subr.bf16.mxu0 0
    %320 = vmatpush1.bf16.msra.mxu0 0
    %321 = vmatprep.subr.bf16.mxu0 0
    %322 = vmatpush1.bf16.msra.mxu0 0
    %323 = vmatprep.subr.bf16.mxu0 0
    %324 = vmatpush1.bf16.msra.mxu0 0
    %325 = vmatprep.subr.bf16.mxu0 0
    %326 = vmatpush1.bf16.msra.mxu0 0
    %327 = vmatprep.mubr.bf16.mxu0 0
    %328 = vmatmul.mubr.bf16.gmra.mrb[0].mxu0 %v290
    %v329 = vpop.f32.mrb[0].mxu0
    %v330 = vadd.f32 %v241, %v329
    %v331 = vpop.f32.mrb[0].mxu0
    %v332 = vadd.f32 %v245, %v331
    %v333 = vpop.f32.mrb[0].mxu0
    %v334 = vadd.f32 %v241, %v333
    %v335 = vpop.f32.mrb[0].mxu0
    %v336 = vadd.f32 %v245, %v335
    %337 = vmatprep.mubr.bf16.mxu0 0
    %338 = vmatmul.mubr.bf16.gmra.mrb[0].mxu0 %v293
    %v339 = vpop.f32.mrb[0].mxu0
    %v340 = vadd.f32 %v241, %v339
    %v341 = vpop.f32.mrb[0].mxu0
    %v342 = vadd.f32 %v245, %v341
    %v343 = vpop.f32.mrb[0].mxu0
    %v344 = vadd.f32 %v241, %v343
    %v345 = vpop.f32.mrb[0].mxu0
    %v346 = vadd.f32 %v245, %v345
    %347 = vdwg.mxu0
    %v348 = vmax.f32 %v330, %v332
    %v349 = vmax.f32 %v334, %v336
    %v350 = vmax.f32 %v340, %v342
    %v351 = vmax.f32 %v344, %v346
    %v356 = vcombine.high %v348, %v348
    %v358 = vunpack.c.l.s4 1983009808
    %v359 = vunpack.c.0.s8 %v358
    %v360 = vlaneseq
    %v361 = vshrl.u32 %v360, 7
    %v362 = vsub.s32 %v359, %v361
    %v363 = vrot.slane %v348, %v362
    %v365 = vunpack.c.l.s4 1983009808
    %v366 = vunpack.c.0.s8 %v365
    %v367 = vlaneseq
    %v368 = vshrl.u32 %v367, 7
    %v369 = vsub.s32 %v366, %v368
    %v370 = vrot.slane %v356, %v369
    %v371 = vcombine.high %v363, %v363
    %v372 = vcombine.high %v370, %v370
    %v373 = vcombine.high %v349, %v349
    %v375 = vunpack.c.l.s4 1983009808
    %v376 = vunpack.c.0.s8 %v375
    %v377 = vlaneseq
    %v378 = vshrl.u32 %v377, 7
    %v379 = vsub.s32 %v376, %v378
    %v380 = vrot.slane %v349, %v379
    %v382 = vunpack.c.l.s4 1983009808
    %v383 = vunpack.c.0.s8 %v382
    %v384 = vlaneseq
    %v385 = vshrl.u32 %v384, 7
    %v386 = vsub.s32 %v383, %v385
    %v387 = vrot.slane %v373, %v386
    %v388 = vcombine.high %v380, %v380
    %v389 = vcombine.high %v387, %v387
    %v390 = vcombine.high %v350, %v350
    %v392 = vunpack.c.l.s4 1983009808
    %v393 = vunpack.c.0.s8 %v392
    %v394 = vlaneseq
    %v395 = vshrl.u32 %v394, 7
    %v396 = vsub.s32 %v393, %v395
    %v397 = vrot.slane %v350, %v396
    %v399 = vunpack.c.l.s4 1983009808
    %v400 = vunpack.c.0.s8 %v399
    %v401 = vlaneseq
    %v402 = vshrl.u32 %v401, 7
    %v403 = vsub.s32 %v400, %v402
    %v404 = vrot.slane %v390, %v403
    %v405 = vcombine.high %v397, %v397
    %v406 = vcombine.high %v404, %v404
    %v407 = vcombine.high %v351, %v351
    %v409 = vunpack.c.l.s4 1983009808
    %v410 = vunpack.c.0.s8 %v409
    %v411 = vlaneseq
    %v412 = vshrl.u32 %v411, 7
    %v413 = vsub.s32 %v410, %v412
    %v414 = vrot.slane %v351, %v413
    %v416 = vunpack.c.l.s4 1983009808
    %v417 = vunpack.c.0.s8 %v416
    %v418 = vlaneseq
    %v419 = vshrl.u32 %v418, 7
    %v420 = vsub.s32 %v417, %v419
    %v421 = vrot.slane %v407, %v420
    %v422 = vcombine.high %v414, %v414
    %v423 = vcombine.high %v421, %v421
    %vm440 = vcmask 1041408
    %v441 = vsel %vm440, %v363, -inf
    %v442 = vrot.slane %v441, 4
    %v443 = vmax.f32 %v441, %v442
    %v444 = vrot.slane %v443, 2
    %v445 = vmax.f32 %v443, %v444
    %v446 = vrot.slane %v445, 1
    %v447 = vmax.f32 %v445, %v446
    %v448 = vsel %vm440, %v371, -inf
    %v449 = vrot.slane %v448, 4
    %v450 = vmax.f32 %v448, %v449
    %v451 = vrot.slane %v450, 2
    %v452 = vmax.f32 %v450, %v451
    %v453 = vrot.slane %v452, 1
    %v454 = vmax.f32 %v452, %v453
    %v455 = vsel %vm440, %v370, -inf
    %v456 = vrot.slane %v455, 4
    %v457 = vmax.f32 %v455, %v456
    %v458 = vrot.slane %v457, 2
    %v459 = vmax.f32 %v457, %v458
    %v460 = vrot.slane %v459, 1
    %v461 = vmax.f32 %v459, %v460
    %v462 = vsel %vm440, %v372, -inf
    %v463 = vrot.slane %v462, 4
    %v464 = vmax.f32 %v462, %v463
    %v465 = vrot.slane %v464, 2
    %v466 = vmax.f32 %v464, %v465
    %v467 = vrot.slane %v466, 1
    %v468 = vmax.f32 %v466, %v467
    %v469 = vsel %vm440, %v380, -inf
    %v470 = vrot.slane %v469, 4
    %v471 = vmax.f32 %v469, %v470
    %v472 = vrot.slane %v471, 2
    %v473 = vmax.f32 %v471, %v472
    %v474 = vrot.slane %v473, 1
    %v475 = vmax.f32 %v473, %v474
    %v476 = vsel %vm440, %v388, -inf
    %v477 = vrot.slane %v476, 4
    %v478 = vmax.f32 %v476, %v477
    %v479 = vrot.slane %v478, 2
    %v480 = vmax.f32 %v478, %v479
    %v481 = vrot.slane %v480, 1
    %v482 = vmax.f32 %v480, %v481
    %v483 = vsel %vm440, %v387, -inf
    %v484 = vrot.slane %v483, 4
    %v485 = vmax.f32 %v483, %v484
    %v486 = vrot.slane %v485, 2
    %v487 = vmax.f32 %v485, %v486
    %v488 = vrot.slane %v487, 1
    %v489 = vmax.f32 %v487, %v488
    %v490 = vsel %vm440, %v389, -inf
    %v491 = vrot.slane %v490, 4
    %v492 = vmax.f32 %v490, %v491
    %v493 = vrot.slane %v492, 2
    %v494 = vmax.f32 %v492, %v493
    %v495 = vrot.slane %v494, 1
    %v496 = vmax.f32 %v494, %v495
    %v497 = vsel %vm440, %v397, -inf
    %v498 = vrot.slane %v497, 4
    %v499 = vmax.f32 %v497, %v498
    %v500 = vrot.slane %v499, 2
    %v501 = vmax.f32 %v499, %v500
    %v502 = vrot.slane %v501, 1
    %v503 = vmax.f32 %v501, %v502
    %v504 = vsel %vm440, %v405, -inf
    %v505 = vrot.slane %v504, 4
    %v506 = vmax.f32 %v504, %v505
    %v507 = vrot.slane %v506, 2
    %v508 = vmax.f32 %v506, %v507
    %v509 = vrot.slane %v508, 1
    %v510 = vmax.f32 %v508, %v509
    %v511 = vsel %vm440, %v404, -inf
    %v512 = vrot.slane %v511, 4
    %v513 = vmax.f32 %v511, %v512
    %v514 = vrot.slane %v513, 2
    %v515 = vmax.f32 %v513, %v514
    %v516 = vrot.slane %v515, 1
    %v517 = vmax.f32 %v515, %v516
    %v518 = vsel %vm440, %v406, -inf
    %v519 = vrot.slane %v518, 4
    %v520 = vmax.f32 %v518, %v519
    %v521 = vrot.slane %v520, 2
    %v522 = vmax.f32 %v520, %v521
    %v523 = vrot.slane %v522, 1
    %v524 = vmax.f32 %v522, %v523
    %v525 = vsel %vm440, %v414, -inf
    %v526 = vrot.slane %v525, 4
    %v527 = vmax.f32 %v525, %v526
    %v528 = vrot.slane %v527, 2
    %v529 = vmax.f32 %v527, %v528
    %v530 = vrot.slane %v529, 1
    %v531 = vmax.f32 %v529, %v530
    %v532 = vsel %vm440, %v422, -inf
    %v533 = vrot.slane %v532, 4
    %v534 = vmax.f32 %v532, %v533
    %v535 = vrot.slane %v534, 2
    %v536 = vmax.f32 %v534, %v535
    %v537 = vrot.slane %v536, 1
    %v538 = vmax.f32 %v536, %v537
    %v539 = vsel %vm440, %v421, -inf
    %v540 = vrot.slane %v539, 4
    %v541 = vmax.f32 %v539, %v540
    %v542 = vrot.slane %v541, 2
    %v543 = vmax.f32 %v541, %v542
    %v544 = vrot.slane %v543, 1
    %v545 = vmax.f32 %v543, %v544
    %v546 = vsel %vm440, %v423, -inf
    %v547 = vrot.slane %v546, 4
    %v548 = vmax.f32 %v546, %v547
    %v549 = vrot.slane %v548, 2
    %v550 = vmax.f32 %v548, %v549
    %v551 = vrot.slane %v550, 1
    %v552 = vmax.f32 %v550, %v551
    %v553 = vmax.f32 %v447, 0.0
    %v554 = vmax.f32 %v454, 0.0
    %v555 = vmax.f32 %v461, 0.0
    %v556 = vmax.f32 %v468, 0.0
    %v557 = vmax.f32 %v475, 0.0
    %v558 = vmax.f32 %v482, 0.0
    %v559 = vmax.f32 %v489, 0.0
    %v560 = vmax.f32 %v496, 0.0
    %v561 = vmax.f32 %v503, 0.0
    %v562 = vmax.f32 %v510, 0.0
    %v563 = vmax.f32 %v517, 0.0
    %v564 = vmax.f32 %v524, 0.0
    %v565 = vmax.f32 %v531, 0.0
    %v566 = vmax.f32 %v538, 0.0
    %v567 = vmax.f32 %v545, 0.0
    %v568 = vmax.f32 %v552, 0.0
    %569 = vst [vmem:[#allocation4] sm:$0xff] 0.0
    %vm570 = vcmask 261120
    %571 = vst.msk [vmem:[#allocation4 + $0x8] sm:$0xff] %vm570, 0.0
    %572 = vst [vmem:[#allocation4 + $0x10] sm:$0x3] 0.0
    %vm573 = vcmask 254976
    %574 = vst.msk [vmem:[#allocation4 + $0x18] sm:$0x3] %vm573, 0.0
    %575 = vst [vmem:[#allocation4 + $0x20] sm:$0xff] 0.0
    %576 = vst.msk [vmem:[#allocation4 + $0x28] sm:$0xff] %vm570, 0.0
    %577 = vst [vmem:[#allocation4 + $0x30] sm:$0x3] 0.0
    %578 = vst.msk [vmem:[#allocation4 + $0x38] sm:$0x3] %vm573, 0.0
    %vm595 = vcmask 1042434
    %v596 = vsel %vm595, %v554, %v553
    %vm597 = vcmask 1043459
    %v598 = vsel %vm597, %v555, %v596
    %vm599 = vcmask 1044484
    %v600 = vsel %vm599, %v556, %v598
    %vm601 = vcmask 1045509
    %v602 = vsel %vm601, %v557, %v600
    %vm603 = vcmask 1046534
    %v604 = vsel %vm603, %v558, %v602
    %vm605 = vcmask 1047559
    %v606 = vsel %vm605, %v559, %v604
    %v607 = vsel %vm595, %v562, %v561
    %v608 = vsel %vm597, %v563, %v607
    %v609 = vsel %vm599, %v564, %v608
    %v610 = vsel %vm601, %v565, %v609
    %v611 = vsel %vm603, %v566, %v610
    %v612 = vsel %vm605, %v567, %v611
    %613 = vrot.lane.b32.xlu0 %v606, 16
    %v614 = vpop.permute.xlu0 %613
    %615 = vrot.lane.b32.xlu0 %v560, 16
    %v616 = vpop.permute.xlu0 %615
    %617 = vrot.lane.b32.xlu0 %v612, 16
    %v618 = vpop.permute.xlu0 %617
    %619 = vrot.lane.b32.xlu0 %v568, 16
    %v620 = vpop.permute.xlu0 %619
    %vm625 = vcmask 1047681
    %626 = vst.msk [vmem:[#allocation4] sm:$0xfe] %vm625, %v614
    %vm627 = vcmask 130049
    %628 = vst.msk [vmem:[#allocation4 + $0x8] sm:$0xfe] %vm627, %v614
    %vm629 = vcmask 1040512
    %630 = vst.msk [vmem:[#allocation4 + $0x10] sm:$0x1] %vm629, %v616
    %vm631 = vcmask 122880
    %632 = vst.msk [vmem:[#allocation4 + $0x18] sm:$0x1] %vm631, %v616
    %633 = vst.msk [vmem:[#allocation4 + $0x20] sm:$0xfe] %vm625, %v618
    %634 = vst.msk [vmem:[#allocation4 + $0x28] sm:$0xfe] %vm627, %v618
    %635 = vst.msk [vmem:[#allocation4 + $0x30] sm:$0x1] %vm629, %v620
    %636 = vst.msk [vmem:[#allocation4 + $0x38] sm:$0x1] %vm631, %v620
    %vm637 = vcmask 1048320
    %638 = vst.msk [vmem:[#allocation5 + $0x18] sm:$0xff] %vm637, 0
    %v639 = vld [vmem:[#allocation4] sm:$0xff]
    %v640 = vld [vmem:[#allocation4 + $0x8] sm:$0xff]
    %v641 = vld [vmem:[#allocation4 + $0x20] sm:$0xff]
    %v642 = vld [vmem:[#allocation4 + $0x28] sm:$0xff]
    %v643 = vpack.c.bf16 %v641, %v639
    %v644 = vpack.c.bf16 %v642, %v640
    %645 = vst [vmem:[#allocation5] sm:$0xff] %v643
    %646 = vst.msk [vmem:[#allocation5 + $0x8] sm:$0xff] %vm570, %v644
    %v647 = vld [vmem:[#allocation4] sm:$0xfe]
    %v648 = vld [vmem:[#allocation4 + $0x8] sm:$0xfe]
    %v649 = vld [vmem:[#allocation4 + $0x10] sm:$0x1]
    %v650 = vld [vmem:[#allocation4 + $0x18] sm:$0x1]
    %v651 = vld [vmem:[#allocation4 + $0x20] sm:$0xfe]
    %v652 = vld [vmem:[#allocation4 + $0x28] sm:$0xfe]
    %v653 = vld [vmem:[#allocation4 + $0x30] sm:$0x1]
    %v654 = vld [vmem:[#allocation4 + $0x38] sm:$0x1]
    %vm663 = vcmask 1046528
    %v664 = vrot.slane %v647, 1
    %v665 = vrot.slane %v649, 1
    %v666 = vsel %vm663, %v664, %v665
    %v667 = vrot.slane %v648, 1
    %v668 = vrot.slane %v650, 1
    %v669 = vsel %vm663, %v667, %v668
    %v670 = vrot.slane %v651, 1
    %v671 = vrot.slane %v653, 1
    %v672 = vsel %vm663, %v670, %v671
    %v673 = vrot.slane %v652, 1
    %v674 = vrot.slane %v654, 1
    %v675 = vsel %vm663, %v673, %v674
    %v680 = vpack.c.bf16 %v672, %v666
    %v681 = vpack.c.bf16 %v675, %v669
    %684 = vrot.lane.b32.xlu0 %v680, 32
    %v685 = vpop.permute.xlu0 %684
    %686 = vrot.lane.b32.xlu0 %v681, 32
    %v687 = vpop.permute.xlu0 %686
    %vm688 = vcmask 261120
    %v689 = vsel %vm688, %v685, %v687
    %vm692 = vcmask 1047808
    %693 = vst.msk [vmem:[#allocation5 + $0x8] sm:$0xff] %vm692, %v685
    %694 = vst.msk [vmem:[#allocation5 + $0x10] sm:$0xff] %vm288, %v689
    %v695 = vld [vmem:[#allocation4] sm:$0xfc]
    %v696 = vld [vmem:[#allocation4 + $0x8] sm:$0xfc]
    %v697 = vld [vmem:[#allocation4 + $0x10] sm:$0x3]
    %v698 = vld [vmem:[#allocation4 + $0x18] sm:$0x3]
    %v699 = vld [vmem:[#allocation4 + $0x20] sm:$0xfc]
    %v700 = vld [vmem:[#allocation4 + $0x28] sm:$0xfc]
    %v701 = vld [vmem:[#allocation4 + $0x30] sm:$0x3]
    %v702 = vld [vmem:[#allocation4 + $0x38] sm:$0x3]
    %vm711 = vcmask 1045504
    %v712 = vrot.slane %v695, 2
    %v713 = vrot.slane %v697, 2
    %v714 = vsel %vm711, %v712, %v713
    %v715 = vrot.slane %v696, 2
    %v716 = vrot.slane %v698, 2
    %v717 = vsel %vm711, %v715, %v716
    %v718 = vrot.slane %v699, 2
    %v719 = vrot.slane %v701, 2
    %v720 = vsel %vm711, %v718, %v719
    %v721 = vrot.slane %v700, 2
    %v722 = vrot.slane %v702, 2
    %v723 = vsel %vm711, %v721, %v722
    %v728 = vpack.c.bf16 %v720, %v714
    %v729 = vpack.c.bf16 %v723, %v717
    %732 = vrot.lane.b32.xlu0 %v728, 64
    %v733 = vpop.permute.xlu0 %732
    %734 = vrot.lane.b32.xlu0 %v729, 64
    %v735 = vpop.permute.xlu0 %734
    %vm736 = vcmask 523264
    %v737 = vsel %vm736, %v733, %v735
    %vm740 = vcmask 1048064
    %741 = vst.msk [vmem:[#allocation5 + $0x10] sm:$0xff] %vm740, %v733
    %vm742 = vcmask 785408
    %743 = vst.msk [vmem:[#allocation5 + $0x18] sm:$0xff] %vm742, %v737
    %v744 = vld [vmem:[#allocation5] sm:$0xff]
    %v745 = vld [vmem:[#allocation5 + $0x8] sm:$0xff]
    %v746 = vld [vmem:[#allocation5 + $0x10] sm:$0xff]
    %v747 = vld [vmem:[#allocation5 + $0x18] sm:$0xff]
    %v748 = vld [vmem:[#allocation12] sm:$0xff]
    %v749 = vld [vmem:[#allocation12 + $0x8] sm:$0xff]
    %v750 = vld [vmem:[#allocation12 + $0x10] sm:$0xff]
    %v751 = vld [vmem:[#allocation12 + $0x18] sm:$0xff]
    %v752 = vld [vmem:[#allocation12 + $0x20] sm:$0xff]
    %v753 = vld [vmem:[#allocation12 + $0x28] sm:$0xff]
    %v754 = vld [vmem:[#allocation12 + $0x30] sm:$0xff]
    %v755 = vld [vmem:[#allocation12 + $0x38] sm:$0xff]
    %v756 = vld [vmem:[#allocation12 + $0x40] sm:$0xff]
    %v757 = vld [vmem:[#allocation12 + $0x48] sm:$0xff]
    %v758 = vld [vmem:[#allocation12 + $0x50] sm:$0xff]
    %v759 = vld [vmem:[#allocation12 + $0x58] sm:$0xff]
    %v760 = vld [vmem:[#allocation12 + $0x60] sm:$0xff]
    %v761 = vld [vmem:[#allocation12 + $0x68] sm:$0xff]
    %v762 = vld [vmem:[#allocation12 + $0x70] sm:$0xff]
    %v763 = vld [vmem:[#allocation12 + $0x78] sm:$0xff]
    %v764 = vld [vmem:[#allocation12 + $0x80] sm:$0xff]
    %v765 = vld [vmem:[#allocation12 + $0x88] sm:$0xff]
    %v766 = vld [vmem:[#allocation12 + $0x90] sm:$0xff]
    %v767 = vld [vmem:[#allocation12 + $0x98] sm:$0xff]
    %v768 = vld [vmem:[#allocation12 + $0xa0] sm:$0xff]
    %v769 = vld [vmem:[#allocation12 + $0xa8] sm:$0xff]
    %v770 = vld [vmem:[#allocation12 + $0xb0] sm:$0xff]
    %v771 = vld [vmem:[#allocation12 + $0xb8] sm:$0xff]
    %v772 = vld [vmem:[#allocation12 + $0xc0] sm:$0xff]
    %v773 = vld [vmem:[#allocation12 + $0xc8] sm:$0xff]
    %v774 = vld [vmem:[#allocation12 + $0xd0] sm:$0xff]
    %v775 = vld [vmem:[#allocation12 + $0xd8] sm:$0xff]
    %v776 = vld [vmem:[#allocation12 + $0xe0] sm:$0xff]
    %v777 = vld [vmem:[#allocation12 + $0xe8] sm:$0xff]
    %v778 = vld [vmem:[#allocation12 + $0xf0] sm:$0xff]
    %v779 = vld [vmem:[#allocation12 + $0xf8] sm:$0xff]
    %v780 = vld [vmem:[#allocation12 + $0x100] sm:$0xff]
    %v781 = vld [vmem:[#allocation12 + $0x108] sm:$0xff]
    %v782 = vld [vmem:[#allocation12 + $0x110] sm:$0xff]
    %v783 = vld [vmem:[#allocation12 + $0x118] sm:$0xff]
    %v784 = vld [vmem:[#allocation12 + $0x120] sm:$0xff]
    %v785 = vld [vmem:[#allocation12 + $0x128] sm:$0xff]
    %v786 = vld [vmem:[#allocation12 + $0x130] sm:$0xff]
    %v787 = vld [vmem:[#allocation12 + $0x138] sm:$0xff]
    %v788 = vld [vmem:[#allocation12 + $0x140] sm:$0xff]
    %v789 = vld [vmem:[#allocation12 + $0x148] sm:$0xff]
    %v790 = vld [vmem:[#allocation12 + $0x150] sm:$0xff]
    %v791 = vld [vmem:[#allocation12 + $0x158] sm:$0xff]
    %v792 = vld [vmem:[#allocation12 + $0x160] sm:$0xff]
    %v793 = vld [vmem:[#allocation12 + $0x168] sm:$0xff]
    %v794 = vld [vmem:[#allocation12 + $0x170] sm:$0xff]
    %v795 = vld [vmem:[#allocation12 + $0x178] sm:$0xff]
    %v796 = vld [vmem:[#allocation12 + $0x180] sm:$0xff]
    %v797 = vld [vmem:[#allocation12 + $0x188] sm:$0xff]
    %v798 = vld [vmem:[#allocation12 + $0x190] sm:$0xff]
    %v799 = vld [vmem:[#allocation12 + $0x198] sm:$0xff]
    %v800 = vld [vmem:[#allocation12 + $0x1a0] sm:$0xff]
    %v801 = vld [vmem:[#allocation12 + $0x1a8] sm:$0xff]
    %v802 = vld [vmem:[#allocation12 + $0x1b0] sm:$0xff]
    %v803 = vld [vmem:[#allocation12 + $0x1b8] sm:$0xff]
    %v804 = vld [vmem:[#allocation12 + $0x1c0] sm:$0xff]
    %v805 = vld [vmem:[#allocation12 + $0x1c8] sm:$0xff]
    %v806 = vld [vmem:[#allocation12 + $0x1d0] sm:$0xff]
    %v807 = vld [vmem:[#allocation12 + $0x1d8] sm:$0xff]
    %v808 = vld [vmem:[#allocation12 + $0x1e0] sm:$0xff]
    %v809 = vld [vmem:[#allocation12 + $0x1e8] sm:$0xff]
    %v810 = vld [vmem:[#allocation12 + $0x1f0] sm:$0xff]
    %v811 = vld [vmem:[#allocation12 + $0x1f8] sm:$0xff]
    %v812 = vld [vmem:[#allocation12 + $0x200] sm:$0xff]
    %v813 = vld [vmem:[#allocation12 + $0x208] sm:$0xff]
    %v814 = vld [vmem:[#allocation12 + $0x210] sm:$0xff]
    %v815 = vld [vmem:[#allocation12 + $0x218] sm:$0xff]
    %v816 = vld [vmem:[#allocation12 + $0x220] sm:$0xff]
    %v817 = vld [vmem:[#allocation12 + $0x228] sm:$0xff]
    %v818 = vld [vmem:[#allocation12 + $0x230] sm:$0xff]
    %v819 = vld [vmem:[#allocation12 + $0x238] sm:$0xff]
    %v820 = vld [vmem:[#allocation12 + $0x240] sm:$0xff]
    %v821 = vld [vmem:[#allocation12 + $0x248] sm:$0xff]
    %v822 = vld [vmem:[#allocation12 + $0x250] sm:$0xff]
    %v823 = vld [vmem:[#allocation12 + $0x258] sm:$0xff]
    %v824 = vld [vmem:[#allocation12 + $0x260] sm:$0xff]
    %v825 = vld [vmem:[#allocation12 + $0x268] sm:$0xff]
    %v826 = vld [vmem:[#allocation12 + $0x270] sm:$0xff]
    %v827 = vld [vmem:[#allocation12 + $0x278] sm:$0xff]
    %v828 = vld [vmem:[#allocation12 + $0x280] sm:$0xff]
    %v829 = vld [vmem:[#allocation12 + $0x288] sm:$0xff]
    %v830 = vld [vmem:[#allocation12 + $0x290] sm:$0xff]
    %v831 = vld [vmem:[#allocation12 + $0x298] sm:$0xff]
    %v832 = vld [vmem:[#allocation12 + $0x2a0] sm:$0xff]
    %v833 = vld [vmem:[#allocation12 + $0x2a8] sm:$0xff]
    %v834 = vld [vmem:[#allocation12 + $0x2b0] sm:$0xff]
    %v835 = vld [vmem:[#allocation12 + $0x2b8] sm:$0xff]
    %v836 = vld [vmem:[#allocation12 + $0x2c0] sm:$0xff]
    %v837 = vld [vmem:[#allocation12 + $0x2c8] sm:$0xff]
    %v838 = vld [vmem:[#allocation12 + $0x2d0] sm:$0xff]
    %v839 = vld [vmem:[#allocation12 + $0x2d8] sm:$0xff]
    %v840 = vld [vmem:[#allocation12 + $0x2e0] sm:$0xff]
    %v841 = vld [vmem:[#allocation12 + $0x2e8] sm:$0xff]
    %v842 = vld [vmem:[#allocation12 + $0x2f0] sm:$0xff]
    %v843 = vld [vmem:[#allocation12 + $0x2f8] sm:$0xff]
    %v844 = vld [vmem:[#allocation12 + $0x300] sm:$0xff]
    %v845 = vld [vmem:[#allocation12 + $0x308] sm:$0xff]
    %v846 = vld [vmem:[#allocation12 + $0x310] sm:$0xff]
    %v847 = vld [vmem:[#allocation12 + $0x318] sm:$0xff]
    %v848 = vld [vmem:[#allocation12 + $0x320] sm:$0xff]
    %v849 = vld [vmem:[#allocation12 + $0x328] sm:$0xff]
    %v850 = vld [vmem:[#allocation12 + $0x330] sm:$0xff]
    %v851 = vld [vmem:[#allocation12 + $0x338] sm:$0xff]
    %v852 = vld [vmem:[#allocation12 + $0x340] sm:$0xff]
    %v853 = vld [vmem:[#allocation12 + $0x348] sm:$0xff]
    %v854 = vld [vmem:[#allocation12 + $0x350] sm:$0xff]
    %v855 = vld [vmem:[#allocation12 + $0x358] sm:$0xff]
    %v856 = vld [vmem:[#allocation12 + $0x360] sm:$0xff]
    %v857 = vld [vmem:[#allocation12 + $0x368] sm:$0xff]
    %v858 = vld [vmem:[#allocation12 + $0x370] sm:$0xff]
    %v859 = vld [vmem:[#allocation12 + $0x378] sm:$0xff]
    %v860 = vld [vmem:[#allocation12 + $0x380] sm:$0xff]
    %v861 = vld [vmem:[#allocation12 + $0x388] sm:$0xff]
    %v862 = vld [vmem:[#allocation12 + $0x390] sm:$0xff]
    %v863 = vld [vmem:[#allocation12 + $0x398] sm:$0xff]
    %v864 = vld [vmem:[#allocation12 + $0x3a0] sm:$0xff]
    %v865 = vld [vmem:[#allocation12 + $0x3a8] sm:$0xff]
    %v866 = vld [vmem:[#allocation12 + $0x3b0] sm:$0xff]
    %v867 = vld [vmem:[#allocation12 + $0x3b8] sm:$0xff]
    %v868 = vld [vmem:[#allocation12 + $0x3c0] sm:$0xff]
    %v869 = vld [vmem:[#allocation12 + $0x3c8] sm:$0xff]
    %v870 = vld [vmem:[#allocation12 + $0x3d0] sm:$0xff]
    %v871 = vld [vmem:[#allocation12 + $0x3d8] sm:$0xff]
    %v872 = vld [vmem:[#allocation12 + $0x3e0] sm:$0xff]
    %v873 = vld [vmem:[#allocation12 + $0x3e8] sm:$0xff]
    %v874 = vld [vmem:[#allocation12 + $0x3f0] sm:$0xff]
    %v875 = vld [vmem:[#allocation12 + $0x3f8] sm:$0xff]
    %v876 = vld [vmem:[#allocation14] sm:$0xf]
    %v878 = vlaneseq
    %v879 = vshrl.u32 %v878, 7
    %v880 = vsub.s32 0, %v879
    %v881 = vrot.slane %v876, %v880
    %v882 = vlaneseq
    %v883 = vshrl.u32 %v882, 7
    %v884 = vsub.s32 1, %v883
    %v885 = vrot.slane %v876, %v884
    %v886 = vlaneseq
    %v887 = vshrl.u32 %v886, 7
    %v888 = vsub.s32 2, %v887
    %v889 = vrot.slane %v876, %v888
    %v890 = vlaneseq
    %v891 = vshrl.u32 %v890, 7
    %v892 = vsub.s32 3, %v891
    %v893 = vrot.slane %v876, %v892
    %v1026 = vunpack.c.l.b16 %v748
    %v1027 = vunpack.c.h.b16 %v748
    %v1028 = vunpack.c.l.b16 %v749
    %v1029 = vunpack.c.h.b16 %v749
    %v1030 = vunpack.c.l.b16 %v750
    %v1031 = vunpack.c.h.b16 %v750
    %v1032 = vunpack.c.l.b16 %v751
    %v1033 = vunpack.c.h.b16 %v751
    %v1034 = vunpack.c.l.b16 %v752
    %v1035 = vunpack.c.h.b16 %v752
    %v1036 = vunpack.c.l.b16 %v753
    %v1037 = vunpack.c.h.b16 %v753
    %v1038 = vunpack.c.l.b16 %v754
    %v1039 = vunpack.c.h.b16 %v754
    %v1040 = vunpack.c.l.b16 %v755
    %v1041 = vunpack.c.h.b16 %v755
    %v1042 = vunpack.c.l.b16 %v756
    %v1043 = vunpack.c.h.b16 %v756
    %v1044 = vunpack.c.l.b16 %v757
    %v1045 = vunpack.c.h.b16 %v757
    %v1046 = vunpack.c.l.b16 %v758
    %v1047 = vunpack.c.h.b16 %v758
    %v1048 = vunpack.c.l.b16 %v759
    %v1049 = vunpack.c.h.b16 %v759
    %v1050 = vunpack.c.l.b16 %v760
    %v1051 = vunpack.c.h.b16 %v760
    %v1052 = vunpack.c.l.b16 %v761
    %v1053 = vunpack.c.h.b16 %v761
    %v1054 = vunpack.c.l.b16 %v762
    %v1055 = vunpack.c.h.b16 %v762
    %v1056 = vunpack.c.l.b16 %v763
    %v1057 = vunpack.c.h.b16 %v763
    %v1058 = vunpack.c.l.b16 %v764
    %v1059 = vunpack.c.h.b16 %v764
    %v1060 = vunpack.c.l.b16 %v765
    %v1061 = vunpack.c.h.b16 %v765
    %v1062 = vunpack.c.l.b16 %v766
    %v1063 = vunpack.c.h.b16 %v766
    %v1064 = vunpack.c.l.b16 %v767
    %v1065 = vunpack.c.h.b16 %v767
    %v1066 = vunpack.c.l.b16 %v768
    %v1067 = vunpack.c.h.b16 %v768
    %v1068 = vunpack.c.l.b16 %v769
    %v1069 = vunpack.c.h.b16 %v769
    %v1070 = vunpack.c.l.b16 %v770
    %v1071 = vunpack.c.h.b16 %v770
    %v1072 = vunpack.c.l.b16 %v771
    %v1073 = vunpack.c.h.b16 %v771
    %v1074 = vunpack.c.l.b16 %v772
    %v1075 = vunpack.c.h.b16 %v772
    %v1076 = vunpack.c.l.b16 %v773
    %v1077 = vunpack.c.h.b16 %v773
    %v1078 = vunpack.c.l.b16 %v774
    %v1079 = vunpack.c.h.b16 %v774
    %v1080 = vunpack.c.l.b16 %v775
    %v1081 = vunpack.c.h.b16 %v775
    %v1082 = vunpack.c.l.b16 %v776
    %v1083 = vunpack.c.h.b16 %v776
    %v1084 = vunpack.c.l.b16 %v777
    %v1085 = vunpack.c.h.b16 %v777
    %v1086 = vunpack.c.l.b16 %v778
    %v1087 = vunpack.c.h.b16 %v778
    %v1088 = vunpack.c.l.b16 %v779
    %v1089 = vunpack.c.h.b16 %v779
    %v1090 = vunpack.c.l.b16 %v780
    %v1091 = vunpack.c.h.b16 %v780
    %v1092 = vunpack.c.l.b16 %v781
    %v1093 = vunpack.c.h.b16 %v781
    %v1094 = vunpack.c.l.b16 %v782
    %v1095 = vunpack.c.h.b16 %v782
    %v1096 = vunpack.c.l.b16 %v783
    %v1097 = vunpack.c.h.b16 %v783
    %v1098 = vunpack.c.l.b16 %v784
    %v1099 = vunpack.c.h.b16 %v784
    %v1100 = vunpack.c.l.b16 %v785
    %v1101 = vunpack.c.h.b16 %v785
    %v1102 = vunpack.c.l.b16 %v786
    %v1103 = vunpack.c.h.b16 %v786
    %v1104 = vunpack.c.l.b16 %v787
    %v1105 = vunpack.c.h.b16 %v787
    %v1106 = vunpack.c.l.b16 %v788
    %v1107 = vunpack.c.h.b16 %v788
    %v1108 = vunpack.c.l.b16 %v789
    %v1109 = vunpack.c.h.b16 %v789
    %v1110 = vunpack.c.l.b16 %v790
    %v1111 = vunpack.c.h.b16 %v790
    %v1112 = vunpack.c.l.b16 %v791
    %v1113 = vunpack.c.h.b16 %v791
    %v1114 = vunpack.c.l.b16 %v792
    %v1115 = vunpack.c.h.b16 %v792
    %v1116 = vunpack.c.l.b16 %v793
    %v1117 = vunpack.c.h.b16 %v793
    %v1118 = vunpack.c.l.b16 %v794
    %v1119 = vunpack.c.h.b16 %v794
    %v1120 = vunpack.c.l.b16 %v795
    %v1121 = vunpack.c.h.b16 %v795
    %v1122 = vunpack.c.l.b16 %v796
    %v1123 = vunpack.c.h.b16 %v796
    %v1124 = vunpack.c.l.b16 %v797
    %v1125 = vunpack.c.h.b16 %v797
    %v1126 = vunpack.c.l.b16 %v798
    %v1127 = vunpack.c.h.b16 %v798
    %v1128 = vunpack.c.l.b16 %v799
    %v1129 = vunpack.c.h.b16 %v799
    %v1130 = vunpack.c.l.b16 %v800
    %v1131 = vunpack.c.h.b16 %v800
    %v1132 = vunpack.c.l.b16 %v801
    %v1133 = vunpack.c.h.b16 %v801
    %v1134 = vunpack.c.l.b16 %v802
    %v1135 = vunpack.c.h.b16 %v802
    %v1136 = vunpack.c.l.b16 %v803
    %v1137 = vunpack.c.h.b16 %v803
    %v1138 = vunpack.c.l.b16 %v804
    %v1139 = vunpack.c.h.b16 %v804
    %v1140 = vunpack.c.l.b16 %v805
    %v1141 = vunpack.c.h.b16 %v805
    %v1142 = vunpack.c.l.b16 %v806
    %v1143 = vunpack.c.h.b16 %v806
    %v1144 = vunpack.c.l.b16 %v807
    %v1145 = vunpack.c.h.b16 %v807
    %v1146 = vunpack.c.l.b16 %v808
    %v1147 = vunpack.c.h.b16 %v808
    %v1148 = vunpack.c.l.b16 %v809
    %v1149 = vunpack.c.h.b16 %v809
    %v1150 = vunpack.c.l.b16 %v810
    %v1151 = vunpack.c.h.b16 %v810
    %v1152 = vunpack.c.l.b16 %v811
    %v1153 = vunpack.c.h.b16 %v811
    %v1154 = vunpack.c.l.b16 %v812
    %v1155 = vunpack.c.h.b16 %v812
    %v1156 = vunpack.c.l.b16 %v813
    %v1157 = vunpack.c.h.b16 %v813
    %v1158 = vunpack.c.l.b16 %v814
    %v1159 = vunpack.c.h.b16 %v814
    %v1160 = vunpack.c.l.b16 %v815
    %v1161 = vunpack.c.h.b16 %v815
    %v1162 = vunpack.c.l.b16 %v816
    %v1163 = vunpack.c.h.b16 %v816
    %v1164 = vunpack.c.l.b16 %v817
    %v1165 = vunpack.c.h.b16 %v817
    %v1166 = vunpack.c.l.b16 %v818
    %v1167 = vunpack.c.h.b16 %v818
    %v1168 = vunpack.c.l.b16 %v819
    %v1169 = vunpack.c.h.b16 %v819
    %v1170 = vunpack.c.l.b16 %v820
    %v1171 = vunpack.c.h.b16 %v820
    %v1172 = vunpack.c.l.b16 %v821
    %v1173 = vunpack.c.h.b16 %v821
    %v1174 = vunpack.c.l.b16 %v822
    %v1175 = vunpack.c.h.b16 %v822
    %v1176 = vunpack.c.l.b16 %v823
    %v1177 = vunpack.c.h.b16 %v823
    %v1178 = vunpack.c.l.b16 %v824
    %v1179 = vunpack.c.h.b16 %v824
    %v1180 = vunpack.c.l.b16 %v825
    %v1181 = vunpack.c.h.b16 %v825
    %v1182 = vunpack.c.l.b16 %v826
    %v1183 = vunpack.c.h.b16 %v826
    %v1184 = vunpack.c.l.b16 %v827
    %v1185 = vunpack.c.h.b16 %v827
    %v1186 = vunpack.c.l.b16 %v828
    %v1187 = vunpack.c.h.b16 %v828
    %v1188 = vunpack.c.l.b16 %v829
    %v1189 = vunpack.c.h.b16 %v829
    %v1190 = vunpack.c.l.b16 %v830
    %v1191 = vunpack.c.h.b16 %v830
    %v1192 = vunpack.c.l.b16 %v831
    %v1193 = vunpack.c.h.b16 %v831
    %v1194 = vunpack.c.l.b16 %v832
    %v1195 = vunpack.c.h.b16 %v832
    %v1196 = vunpack.c.l.b16 %v833
    %v1197 = vunpack.c.h.b16 %v833
    %v1198 = vunpack.c.l.b16 %v834
    %v1199 = vunpack.c.h.b16 %v834
    %v1200 = vunpack.c.l.b16 %v835
    %v1201 = vunpack.c.h.b16 %v835
    %v1202 = vunpack.c.l.b16 %v836
    %v1203 = vunpack.c.h.b16 %v836
    %v1204 = vunpack.c.l.b16 %v837
    %v1205 = vunpack.c.h.b16 %v837
    %v1206 = vunpack.c.l.b16 %v838
    %v1207 = vunpack.c.h.b16 %v838
    %v1208 = vunpack.c.l.b16 %v839
    %v1209 = vunpack.c.h.b16 %v839
    %v1210 = vunpack.c.l.b16 %v840
    %v1211 = vunpack.c.h.b16 %v840
    %v1212 = vunpack.c.l.b16 %v841
    %v1213 = vunpack.c.h.b16 %v841
    %v1214 = vunpack.c.l.b16 %v842
    %v1215 = vunpack.c.h.b16 %v842
    %v1216 = vunpack.c.l.b16 %v843
    %v1217 = vunpack.c.h.b16 %v843
    %v1218 = vunpack.c.l.b16 %v844
    %v1219 = vunpack.c.h.b16 %v844
    %v1220 = vunpack.c.l.b16 %v845
    %v1221 = vunpack.c.h.b16 %v845
    %v1222 = vunpack.c.l.b16 %v846
    %v1223 = vunpack.c.h.b16 %v846
    %v1224 = vunpack.c.l.b16 %v847
    %v1225 = vunpack.c.h.b16 %v847
    %v1226 = vunpack.c.l.b16 %v848
    %v1227 = vunpack.c.h.b16 %v848
    %v1228 = vunpack.c.l.b16 %v849
    %v1229 = vunpack.c.h.b16 %v849
    %v1230 = vunpack.c.l.b16 %v850
    %v1231 = vunpack.c.h.b16 %v850
    %v1232 = vunpack.c.l.b16 %v851
    %v1233 = vunpack.c.h.b16 %v851
    %v1234 = vunpack.c.l.b16 %v852
    %v1235 = vunpack.c.h.b16 %v852
    %v1236 = vunpack.c.l.b16 %v853
    %v1237 = vunpack.c.h.b16 %v853
    %v1238 = vunpack.c.l.b16 %v854
    %v1239 = vunpack.c.h.b16 %v854
    %v1240 = vunpack.c.l.b16 %v855
    %v1241 = vunpack.c.h.b16 %v855
    %v1242 = vunpack.c.l.b16 %v856
    %v1243 = vunpack.c.h.b16 %v856
    %v1244 = vunpack.c.l.b16 %v857
    %v1245 = vunpack.c.h.b16 %v857
    %v1246 = vunpack.c.l.b16 %v858
    %v1247 = vunpack.c.h.b16 %v858
    %v1248 = vunpack.c.l.b16 %v859
    %v1249 = vunpack.c.h.b16 %v859
    %v1250 = vunpack.c.l.b16 %v860
    %v1251 = vunpack.c.h.b16 %v860
    %v1252 = vunpack.c.l.b16 %v861
    %v1253 = vunpack.c.h.b16 %v861
    %v1254 = vunpack.c.l.b16 %v862
    %v1255 = vunpack.c.h.b16 %v862
    %v1256 = vunpack.c.l.b16 %v863
    %v1257 = vunpack.c.h.b16 %v863
    %v1258 = vunpack.c.l.b16 %v864
    %v1259 = vunpack.c.h.b16 %v864
    %v1260 = vunpack.c.l.b16 %v865
    %v1261 = vunpack.c.h.b16 %v865
    %v1262 = vunpack.c.l.b16 %v866
    %v1263 = vunpack.c.h.b16 %v866
    %v1264 = vunpack.c.l.b16 %v867
    %v1265 = vunpack.c.h.b16 %v867
    %v1266 = vunpack.c.l.b16 %v868
    %v1267 = vunpack.c.h.b16 %v868
    %v1268 = vunpack.c.l.b16 %v869
    %v1269 = vunpack.c.h.b16 %v869
    %v1270 = vunpack.c.l.b16 %v870
    %v1271 = vunpack.c.h.b16 %v870
    %v1272 = vunpack.c.l.b16 %v871
    %v1273 = vunpack.c.h.b16 %v871
    %v1274 = vunpack.c.l.b16 %v872
    %v1275 = vunpack.c.h.b16 %v872
    %v1276 = vunpack.c.l.b16 %v873
    %v1277 = vunpack.c.h.b16 %v873
    %v1278 = vunpack.c.l.b16 %v874
    %v1279 = vunpack.c.h.b16 %v874
    %v1280 = vunpack.c.l.b16 %v875
    %v1281 = vunpack.c.h.b16 %v875
    %v1282 = vpack.c.b16 %v1030, %v1026
    %v1283 = vpack.c.b16 %v1031, %v1027
    %v1284 = vpack.c.b16 %v1032, %v1028
    %v1285 = vpack.c.b16 %v1033, %v1029
    %v1286 = vpack.c.b16 %v1038, %v1034
    %v1287 = vpack.c.b16 %v1039, %v1035
    %v1288 = vpack.c.b16 %v1040, %v1036
    %v1289 = vpack.c.b16 %v1041, %v1037
    %v1290 = vpack.c.b16 %v1046, %v1042
    %v1291 = vpack.c.b16 %v1047, %v1043
    %v1292 = vpack.c.b16 %v1048, %v1044
    %v1293 = vpack.c.b16 %v1049, %v1045
    %v1294 = vpack.c.b16 %v1054, %v1050
    %v1295 = vpack.c.b16 %v1055, %v1051
    %v1296 = vpack.c.b16 %v1056, %v1052
    %v1297 = vpack.c.b16 %v1057, %v1053
    %v1298 = vpack.c.b16 %v1062, %v1058
    %v1299 = vpack.c.b16 %v1063, %v1059
    %v1300 = vpack.c.b16 %v1064, %v1060
    %v1301 = vpack.c.b16 %v1065, %v1061
    %v1302 = vpack.c.b16 %v1070, %v1066
    %v1303 = vpack.c.b16 %v1071, %v1067
    %v1304 = vpack.c.b16 %v1072, %v1068
    %v1305 = vpack.c.b16 %v1073, %v1069
    %v1306 = vpack.c.b16 %v1078, %v1074
    %v1307 = vpack.c.b16 %v1079, %v1075
    %v1308 = vpack.c.b16 %v1080, %v1076
    %v1309 = vpack.c.b16 %v1081, %v1077
    %v1310 = vpack.c.b16 %v1086, %v1082
    %v1311 = vpack.c.b16 %v1087, %v1083
    %v1312 = vpack.c.b16 %v1088, %v1084
    %v1313 = vpack.c.b16 %v1089, %v1085
    %v1314 = vpack.c.b16 %v1094, %v1090
    %v1315 = vpack.c.b16 %v1095, %v1091
    %v1316 = vpack.c.b16 %v1096, %v1092
    %v1317 = vpack.c.b16 %v1097, %v1093
    %v1318 = vpack.c.b16 %v1102, %v1098
    %v1319 = vpack.c.b16 %v1103, %v1099
    %v1320 = vpack.c.b16 %v1104, %v1100
    %v1321 = vpack.c.b16 %v1105, %v1101
    %v1322 = vpack.c.b16 %v1110, %v1106
    %v1323 = vpack.c.b16 %v1111, %v1107
    %v1324 = vpack.c.b16 %v1112, %v1108
    %v1325 = vpack.c.b16 %v1113, %v1109
    %v1326 = vpack.c.b16 %v1118, %v1114
    %v1327 = vpack.c.b16 %v1119, %v1115
    %v1328 = vpack.c.b16 %v1120, %v1116
    %v1329 = vpack.c.b16 %v1121, %v1117
    %v1330 = vpack.c.b16 %v1126, %v1122
    %v1331 = vpack.c.b16 %v1127, %v1123
    %v1332 = vpack.c.b16 %v1128, %v1124
    %v1333 = vpack.c.b16 %v1129, %v1125
    %v1334 = vpack.c.b16 %v1134, %v1130
    %v1335 = vpack.c.b16 %v1135, %v1131
    %v1336 = vpack.c.b16 %v1136, %v1132
    %v1337 = vpack.c.b16 %v1137, %v1133
    %v1338 = vpack.c.b16 %v1142, %v1138
    %v1339 = vpack.c.b16 %v1143, %v1139
    %v1340 = vpack.c.b16 %v1144, %v1140
    %v1341 = vpack.c.b16 %v1145, %v1141
    %v1342 = vpack.c.b16 %v1150, %v1146
    %v1343 = vpack.c.b16 %v1151, %v1147
    %v1344 = vpack.c.b16 %v1152, %v1148
    %v1345 = vpack.c.b16 %v1153, %v1149
    %v1346 = vpack.c.b16 %v1158, %v1154
    %v1347 = vpack.c.b16 %v1159, %v1155
    %v1348 = vpack.c.b16 %v1160, %v1156
    %v1349 = vpack.c.b16 %v1161, %v1157
    %v1350 = vpack.c.b16 %v1166, %v1162
    %v1351 = vpack.c.b16 %v1167, %v1163
    %v1352 = vpack.c.b16 %v1168, %v1164
    %v1353 = vpack.c.b16 %v1169, %v1165
    %v1354 = vpack.c.b16 %v1174, %v1170
    %v1355 = vpack.c.b16 %v1175, %v1171
    %v1356 = vpack.c.b16 %v1176, %v1172
    %v1357 = vpack.c.b16 %v1177, %v1173
    %v1358 = vpack.c.b16 %v1182, %v1178
    %v1359 = vpack.c.b16 %v1183, %v1179
    %v1360 = vpack.c.b16 %v1184, %v1180
    %v1361 = vpack.c.b16 %v1185, %v1181
    %v1362 = vpack.c.b16 %v1190, %v1186
    %v1363 = vpack.c.b16 %v1191, %v1187
    %v1364 = vpack.c.b16 %v1192, %v1188
    %v1365 = vpack.c.b16 %v1193, %v1189
    %v1366 = vpack.c.b16 %v1198, %v1194
    %v1367 = vpack.c.b16 %v1199, %v1195
    %v1368 = vpack.c.b16 %v1200, %v1196
    %v1369 = vpack.c.b16 %v1201, %v1197
    %v1370 = vpack.c.b16 %v1206, %v1202
    %v1371 = vpack.c.b16 %v1207, %v1203
    %v1372 = vpack.c.b16 %v1208, %v1204
    %v1373 = vpack.c.b16 %v1209, %v1205
    %v1374 = vpack.c.b16 %v1214, %v1210
    %v1375 = vpack.c.b16 %v1215, %v1211
    %v1376 = vpack.c.b16 %v1216, %v1212
    %v1377 = vpack.c.b16 %v1217, %v1213
    %v1378 = vpack.c.b16 %v1222, %v1218
    %v1379 = vpack.c.b16 %v1223, %v1219
    %v1380 = vpack.c.b16 %v1224, %v1220
    %v1381 = vpack.c.b16 %v1225, %v1221
    %v1382 = vpack.c.b16 %v1230, %v1226
    %v1383 = vpack.c.b16 %v1231, %v1227
    %v1384 = vpack.c.b16 %v1232, %v1228
    %v1385 = vpack.c.b16 %v1233, %v1229
    %v1386 = vpack.c.b16 %v1238, %v1234
    %v1387 = vpack.c.b16 %v1239, %v1235
    %v1388 = vpack.c.b16 %v1240, %v1236
    %v1389 = vpack.c.b16 %v1241, %v1237
    %v1390 = vpack.c.b16 %v1246, %v1242
    %v1391 = vpack.c.b16 %v1247, %v1243
    %v1392 = vpack.c.b16 %v1248, %v1244
    %v1393 = vpack.c.b16 %v1249, %v1245
    %v1394 = vpack.c.b16 %v1254, %v1250
    %v1395 = vpack.c.b16 %v1255, %v1251
    %v1396 = vpack.c.b16 %v1256, %v1252
    %v1397 = vpack.c.b16 %v1257, %v1253
    %v1398 = vpack.c.b16 %v1262, %v1258
    %v1399 = vpack.c.b16 %v1263, %v1259
    %v1400 = vpack.c.b16 %v1264, %v1260
    %v1401 = vpack.c.b16 %v1265, %v1261
    %v1402 = vpack.c.b16 %v1270, %v1266
    %v1403 = vpack.c.b16 %v1271, %v1267
    %v1404 = vpack.c.b16 %v1272, %v1268
    %v1405 = vpack.c.b16 %v1273, %v1269
    %v1406 = vpack.c.b16 %v1278, %v1274
    %v1407 = vpack.c.b16 %v1279, %v1275
    %v1408 = vpack.c.b16 %v1280, %v1276
    %v1409 = vpack.c.b16 %v1281, %v1277
    %1538 = vmatprep.subr.bf16.mxu0 %v1283
    %1539 = vmatpush1.bf16.msra.mxu0 %v1282
    %1540 = vmatprep.subr.bf16.mxu0 %v1287
    %1541 = vmatpush1.bf16.msra.mxu0 %v1286
    %1542 = vmatprep.subr.bf16.mxu0 %v1291
    %1543 = vmatpush1.bf16.msra.mxu0 %v1290
    %1544 = vmatprep.subr.bf16.mxu0 %v1295
    %1545 = vmatpush1.bf16.msra.mxu0 %v1294
    %1546 = vmatprep.subr.bf16.mxu0 %v1299
    %1547 = vmatpush1.bf16.msra.mxu0 %v1298
    %1548 = vmatprep.subr.bf16.mxu0 %v1303
    %1549 = vmatpush1.bf16.msra.mxu0 %v1302
    %1550 = vmatprep.subr.bf16.mxu0 %v1307
    %1551 = vmatpush1.bf16.msra.mxu0 %v1306
    %1552 = vmatprep.subr.bf16.mxu0 %v1311
    %1553 = vmatpush1.bf16.msra.mxu0 %v1310
    %1554 = vmatprep.subr.bf16.mxu0 %v1315
    %1555 = vmatpush1.bf16.msra.mxu0 %v1314
    %1556 = vmatprep.subr.bf16.mxu0 %v1319
    %1557 = vmatpush1.bf16.msra.mxu0 %v1318
    %1558 = vmatprep.subr.bf16.mxu0 %v1323
    %1559 = vmatpush1.bf16.msra.mxu0 %v1322
    %1560 = vmatprep.subr.bf16.mxu0 %v1327
    %1561 = vmatpush1.bf16.msra.mxu0 %v1326
    %1562 = vmatprep.subr.bf16.mxu0 %v1331
    %1563 = vmatpush1.bf16.msra.mxu0 %v1330
    %1564 = vmatprep.subr.bf16.mxu0 %v1335
    %1565 = vmatpush1.bf16.msra.mxu0 %v1334
    %1566 = vmatprep.subr.bf16.mxu0 %v1339
    %1567 = vmatpush1.bf16.msra.mxu0 %v1338
    %1568 = vmatprep.subr.bf16.mxu0 %v1343
    %1569 = vmatpush1.bf16.msra.mxu0 %v1342
    %1570 = vmatprep.mubr.bf16.mxu0 %v745
    %1571 = vmatmul.mubr.bf16.gmra.mrb[0].mxu0 %v744
    %v1572 = vpop.f32.mrb[0].mxu0
    %v1573 = vadd.f32 %v881, %v1572
    %v1574 = vpop.f32.mrb[0].mxu0
    %v1575 = vadd.f32 %v885, %v1574
    %v1576 = vpop.f32.mrb[0].mxu0
    %v1577 = vadd.f32 %v881, %v1576
    %v1578 = vpop.f32.mrb[0].mxu0
    %v1579 = vadd.f32 %v885, %v1578
    %1580 = vdwg.mxu0
    %1581 = vmatprep.subr.bf16.mxu0 %v1347
    %1582 = vmatpush1.bf16.msra.mxu0 %v1346
    %1583 = vmatprep.subr.bf16.mxu0 %v1351
    %1584 = vmatpush1.bf16.msra.mxu0 %v1350
    %1585 = vmatprep.subr.bf16.mxu0 %v1355
    %1586 = vmatpush1.bf16.msra.mxu0 %v1354
    %1587 = vmatprep.subr.bf16.mxu0 %v1359
    %1588 = vmatpush1.bf16.msra.mxu0 %v1358
    %1589 = vmatprep.subr.bf16.mxu0 %v1363
    %1590 = vmatpush1.bf16.msra.mxu0 %v1362
    %1591 = vmatprep.subr.bf16.mxu0 %v1367
    %1592 = vmatpush1.bf16.msra.mxu0 %v1366
    %1593 = vmatprep.subr.bf16.mxu0 %v1371
    %1594 = vmatpush1.bf16.msra.mxu0 %v1370
    %1595 = vmatprep.subr.bf16.mxu0 %v1375
    %1596 = vmatpush1.bf16.msra.mxu0 %v1374
    %1597 = vmatprep.subr.bf16.mxu0 %v1379
    %1598 = vmatpush1.bf16.msra.mxu0 %v1378
    %1599 = vmatprep.subr.bf16.mxu0 %v1383
    %1600 = vmatpush1.bf16.msra.mxu0 %v1382
    %1601 = vmatprep.subr.bf16.mxu0 %v1387
    %1602 = vmatpush1.bf16.msra.mxu0 %v1386
    %1603 = vmatprep.subr.bf16.mxu0 %v1391
    %1604 = vmatpush1.bf16.msra.mxu0 %v1390
    %1605 = vmatprep.subr.bf16.mxu0 %v1395
    %1606 = vmatpush1.bf16.msra.mxu0 %v1394
    %1607 = vmatprep.subr.bf16.mxu0 %v1399
    %1608 = vmatpush1.bf16.msra.mxu0 %v1398
    %1609 = vmatprep.subr.bf16.mxu0 %v1403
    %1610 = vmatpush1.bf16.msra.mxu0 %v1402
    %1611 = vmatprep.subr.bf16.mxu0 %v1407
    %1612 = vmatpush1.bf16.msra.mxu0 %v1406
    %1613 = vmatprep.mubr.bf16.mxu0 %v747
    %1614 = vmatmul.mubr.bf16.gmra.mrb[0].mxu0 %v746
    %v1615 = vpop.f32.mrb[0].mxu0
    %v1616 = vadd.f32 %v1573, %v1615
    %v1617 = vpop.f32.mrb[0].mxu0
    %v1618 = vadd.f32 %v1575, %v1617
    %v1619 = vpop.f32.mrb[0].mxu0
    %v1620 = vadd.f32 %v1577, %v1619
    %v1621 = vpop.f32.mrb[0].mxu0
    %v1622 = vadd.f32 %v1579, %v1621
    %1623 = vdwg.mxu0
    %1624 = vmatprep.subr.bf16.mxu0 %v1285
    %1625 = vmatpush1.bf16.msra.mxu0 %v1284
    %1626 = vmatprep.subr.bf16.mxu0 %v1289
    %1627 = vmatpush1.bf16.msra.mxu0 %v1288
    %1628 = vmatprep.subr.bf16.mxu0 %v1293
    %1629 = vmatpush1.bf16.msra.mxu0 %v1292
    %1630 = vmatprep.subr.bf16.mxu0 %v1297
    %1631 = vmatpush1.bf16.msra.mxu0 %v1296
    %1632 = vmatprep.subr.bf16.mxu0 %v1301
    %1633 = vmatpush1.bf16.msra.mxu0 %v1300
    %1634 = vmatprep.subr.bf16.mxu0 %v1305
    %1635 = vmatpush1.bf16.msra.mxu0 %v1304
    %1636 = vmatprep.subr.bf16.mxu0 %v1309
    %1637 = vmatpush1.bf16.msra.mxu0 %v1308
    %1638 = vmatprep.subr.bf16.mxu0 %v1313
    %1639 = vmatpush1.bf16.msra.mxu0 %v1312
    %1640 = vmatprep.subr.bf16.mxu0 %v1317
    %1641 = vmatpush1.bf16.msra.mxu0 %v1316
    %1642 = vmatprep.subr.bf16.mxu0 %v1321
    %1643 = vmatpush1.bf16.msra.mxu0 %v1320
    %1644 = vmatprep.subr.bf16.mxu0 %v1325
    %1645 = vmatpush1.bf16.msra.mxu0 %v1324
    %1646 = vmatprep.subr.bf16.mxu0 %v1329
    %1647 = vmatpush1.bf16.msra.mxu0 %v1328
    %1648 = vmatprep.subr.bf16.mxu0 %v1333
    %1649 = vmatpush1.bf16.msra.mxu0 %v1332
    %1650 = vmatprep.subr.bf16.mxu0 %v1337
    %1651 = vmatpush1.bf16.msra.mxu0 %v1336
    %1652 = vmatprep.subr.bf16.mxu0 %v1341
    %1653 = vmatpush1.bf16.msra.mxu0 %v1340
    %1654 = vmatprep.subr.bf16.mxu0 %v1345
    %1655 = vmatpush1.bf16.msra.mxu0 %v1344
    %1656 = vmatprep.mubr.bf16.mxu0 %v745
    %1657 = vmatmul.mubr.bf16.gmra.mrb[0].mxu0 %v744
    %v1658 = vpop.f32.mrb[0].mxu0
    %v1659 = vadd.f32 %v889, %v1658
    %v1660 = vpop.f32.mrb[0].mxu0
    %v1661 = vadd.f32 %v893, %v1660
    %v1662 = vpop.f32.mrb[0].mxu0
    %v1663 = vadd.f32 %v889, %v1662
    %v1664 = vpop.f32.mrb[0].mxu0
    %v1665 = vadd.f32 %v893, %v1664
    %1666 = vdwg.mxu0
    %1667 = vmatprep.subr.bf16.mxu0 %v1349
    %1668 = vmatpush1.bf16.msra.mxu0 %v1348
    %1669 = vmatprep.subr.bf16.mxu0 %v1353
    %1670 = vmatpush1.bf16.msra.mxu0 %v1352
    %1671 = vmatprep.subr.bf16.mxu0 %v1357
    %1672 = vmatpush1.bf16.msra.mxu0 %v1356
    %1673 = vmatprep.subr.bf16.mxu0 %v1361
    %1674 = vmatpush1.bf16.msra.mxu0 %v1360
    %1675 = vmatprep.subr.bf16.mxu0 %v1365
    %1676 = vmatpush1.bf16.msra.mxu0 %v1364
    %1677 = vmatprep.subr.bf16.mxu0 %v1369
    %1678 = vmatpush1.bf16.msra.mxu0 %v1368
    %1679 = vmatprep.subr.bf16.mxu0 %v1373
    %1680 = vmatpush1.bf16.msra.mxu0 %v1372
    %1681 = vmatprep.subr.bf16.mxu0 %v1377
    %1682 = vmatpush1.bf16.msra.mxu0 %v1376
    %1683 = vmatprep.subr.bf16.mxu0 %v1381
    %1684 = vmatpush1.bf16.msra.mxu0 %v1380
    %1685 = vmatprep.subr.bf16.mxu0 %v1385
    %1686 = vmatpush1.bf16.msra.mxu0 %v1384
    %1687 = vmatprep.subr.bf16.mxu0 %v1389
    %1688 = vmatpush1.bf16.msra.mxu0 %v1388
    %1689 = vmatprep.subr.bf16.mxu0 %v1393
    %1690 = vmatpush1.bf16.msra.mxu0 %v1392
    %1691 = vmatprep.subr.bf16.mxu0 %v1397
    %1692 = vmatpush1.bf16.msra.mxu0 %v1396
    %1693 = vmatprep.subr.bf16.mxu0 %v1401
    %1694 = vmatpush1.bf16.msra.mxu0 %v1400
    %1695 = vmatprep.subr.bf16.mxu0 %v1405
    %1696 = vmatpush1.bf16.msra.mxu0 %v1404
    %1697 = vmatprep.subr.bf16.mxu0 %v1409
    %1698 = vmatpush1.bf16.msra.mxu0 %v1408
    %1699 = vmatprep.mubr.bf16.mxu0 %v747
    %1700 = vmatmul.mubr.bf16.gmra.mrb[0].mxu0 %v746
    %v1701 = vpop.f32.mrb[0].mxu0
    %v1702 = vadd.f32 %v1659, %v1701
    %v1703 = vpop.f32.mrb[0].mxu0
    %v1704 = vadd.f32 %v1661, %v1703
    %v1705 = vpop.f32.mrb[0].mxu0
    %v1706 = vadd.f32 %v1663, %v1705
    %v1707 = vpop.f32.mrb[0].mxu0
    %v1708 = vadd.f32 %v1665, %v1707
    %1709 = vdwg.mxu0
    %v1710 = vmax.f32 %v1616, %v1702
    %v1711 = vmax.f32 %v1618, %v1704
    %v1712 = vmax.f32 %v1620, %v1706
    %v1713 = vmax.f32 %v1622, %v1708
    %v1718 = vcombine.low %v1710, %v1711
    %v1719 = vcombine.high %v1710, %v1711
    %v1721 = vunpack.c.l.s4 1983009808
    %v1722 = vunpack.c.0.s8 %v1721
    %v1723 = vlaneseq
    %v1724 = vshrl.u32 %v1723, 7
    %v1725 = vsub.s32 %v1722, %v1724
    %v1726 = vrot.slane %v1718, %v1725
    %v1728 = vunpack.c.l.s4 1983009808
    %v1729 = vunpack.c.0.s8 %v1728
    %v1730 = vlaneseq
    %v1731 = vshrl.u32 %v1730, 7
    %v1732 = vsub.s32 %v1729, %v1731
    %v1733 = vrot.slane %v1719, %v1732
    %v1734 = vcombine.high %v1726, %v1726
    %v1735 = vcombine.high %v1733, %v1733
    %v1736 = vcombine.low %v1712, %v1713
    %v1737 = vcombine.high %v1712, %v1713
    %v1739 = vunpack.c.l.s4 1983009808
    %v1740 = vunpack.c.0.s8 %v1739
    %v1741 = vlaneseq
    %v1742 = vshrl.u32 %v1741, 7
    %v1743 = vsub.s32 %v1740, %v1742
    %v1744 = vrot.slane %v1736, %v1743
    %v1746 = vunpack.c.l.s4 1983009808
    %v1747 = vunpack.c.0.s8 %v1746
    %v1748 = vlaneseq
    %v1749 = vshrl.u32 %v1748, 7
    %v1750 = vsub.s32 %v1747, %v1749
    %v1751 = vrot.slane %v1737, %v1750
    %v1752 = vcombine.high %v1744, %v1744
    %v1753 = vcombine.high %v1751, %v1751
    %v1755 = vunpack.c.l.s4 1983009808
    %v1756 = vunpack.c.0.s8 %v1755
    %v1757 = vlaneseq
    %v1758 = vshrl.u32 %v1757, 7
    %v1759 = vsub.s32 %v1756, %v1758
    %v1760 = vrot.slane %v1726, %v1759
    %v1761 = vcombine.high %v1760, %v1760
    %v1763 = vunpack.c.l.s4 1983009808
    %v1764 = vunpack.c.0.s8 %v1763
    %v1765 = vlaneseq
    %v1766 = vshrl.u32 %v1765, 7
    %v1767 = vsub.s32 %v1764, %v1766
    %v1768 = vrot.slane %v1734, %v1767
    %v1769 = vcombine.high %v1768, %v1768
    %v1771 = vunpack.c.l.s4 1983009808
    %v1772 = vunpack.c.0.s8 %v1771
    %v1773 = vlaneseq
    %v1774 = vshrl.u32 %v1773, 7
    %v1775 = vsub.s32 %v1772, %v1774
    %v1776 = vrot.slane %v1733, %v1775
    %v1777 = vcombine.high %v1776, %v1776
    %v1779 = vunpack.c.l.s4 1983009808
    %v1780 = vunpack.c.0.s8 %v1779
    %v1781 = vlaneseq
    %v1782 = vshrl.u32 %v1781, 7
    %v1783 = vsub.s32 %v1780, %v1782
    %v1784 = vrot.slane %v1735, %v1783
    %v1785 = vcombine.high %v1784, %v1784
    %v1787 = vunpack.c.l.s4 1983009808
    %v1788 = vunpack.c.0.s8 %v1787
    %v1789 = vlaneseq
    %v1790 = vshrl.u32 %v1789, 7
    %v1791 = vsub.s32 %v1788, %v1790
    %v1792 = vrot.slane %v1744, %v1791
    %v1793 = vcombine.high %v1792, %v1792
    %v1795 = vunpack.c.l.s4 1983009808
    %v1796 = vunpack.c.0.s8 %v1795
    %v1797 = vlaneseq
    %v1798 = vshrl.u32 %v1797, 7
    %v1799 = vsub.s32 %v1796, %v1798
    %v1800 = vrot.slane %v1752, %v1799
    %v1801 = vcombine.high %v1800, %v1800
    %v1803 = vunpack.c.l.s4 1983009808
    %v1804 = vunpack.c.0.s8 %v1803
    %v1805 = vlaneseq
    %v1806 = vshrl.u32 %v1805, 7
    %v1807 = vsub.s32 %v1804, %v1806
    %v1808 = vrot.slane %v1751, %v1807
    %v1809 = vcombine.high %v1808, %v1808
    %v1811 = vunpack.c.l.s4 1983009808
    %v1812 = vunpack.c.0.s8 %v1811
    %v1813 = vlaneseq
    %v1814 = vshrl.u32 %v1813, 7
    %v1815 = vsub.s32 %v1812, %v1814
    %v1816 = vrot.slane %v1753, %v1815
    %v1817 = vcombine.high %v1816, %v1816
    %v1834 = vsel %vm440, %v1760, -inf
    %v1835 = vrot.slane %v1834, 4
    %v1836 = vmax.f32 %v1834, %v1835
    %v1837 = vrot.slane %v1836, 2
    %v1838 = vmax.f32 %v1836, %v1837
    %v1839 = vrot.slane %v1838, 1
    %v1840 = vmax.f32 %v1838, %v1839
    %v1841 = vsel %vm440, %v1761, -inf
    %v1842 = vrot.slane %v1841, 4
    %v1843 = vmax.f32 %v1841, %v1842
    %v1844 = vrot.slane %v1843, 2
    %v1845 = vmax.f32 %v1843, %v1844
    %v1846 = vrot.slane %v1845, 1
    %v1847 = vmax.f32 %v1845, %v1846
    %v1848 = vsel %vm440, %v1768, -inf
    %v1849 = vrot.slane %v1848, 4
    %v1850 = vmax.f32 %v1848, %v1849
    %v1851 = vrot.slane %v1850, 2
    %v1852 = vmax.f32 %v1850, %v1851
    %v1853 = vrot.slane %v1852, 1
    %v1854 = vmax.f32 %v1852, %v1853
    %v1855 = vsel %vm440, %v1769, -inf
    %v1856 = vrot.slane %v1855, 4
    %v1857 = vmax.f32 %v1855, %v1856
    %v1858 = vrot.slane %v1857, 2
    %v1859 = vmax.f32 %v1857, %v1858
    %v1860 = vrot.slane %v1859, 1
    %v1861 = vmax.f32 %v1859, %v1860
    %v1862 = vsel %vm440, %v1776, -inf
    %v1863 = vrot.slane %v1862, 4
    %v1864 = vmax.f32 %v1862, %v1863
    %v1865 = vrot.slane %v1864, 2
    %v1866 = vmax.f32 %v1864, %v1865
    %v1867 = vrot.slane %v1866, 1
    %v1868 = vmax.f32 %v1866, %v1867
    %v1869 = vsel %vm440, %v1777, -inf
    %v1870 = vrot.slane %v1869, 4
    %v1871 = vmax.f32 %v1869, %v1870
    %v1872 = vrot.slane %v1871, 2
    %v1873 = vmax.f32 %v1871, %v1872
    %v1874 = vrot.slane %v1873, 1
    %v1875 = vmax.f32 %v1873, %v1874
    %v1876 = vsel %vm440, %v1784, -inf
    %v1877 = vrot.slane %v1876, 4
    %v1878 = vmax.f32 %v1876, %v1877
    %v1879 = vrot.slane %v1878, 2
    %v1880 = vmax.f32 %v1878, %v1879
    %v1881 = vrot.slane %v1880, 1
    %v1882 = vmax.f32 %v1880, %v1881
    %v1883 = vsel %vm440, %v1785, -inf
    %v1884 = vrot.slane %v1883, 4
    %v1885 = vmax.f32 %v1883, %v1884
    %v1886 = vrot.slane %v1885, 2
    %v1887 = vmax.f32 %v1885, %v1886
    %v1888 = vrot.slane %v1887, 1
    %v1889 = vmax.f32 %v1887, %v1888
    %v1890 = vsel %vm440, %v1792, -inf
    %v1891 = vrot.slane %v1890, 4
    %v1892 = vmax.f32 %v1890, %v1891
    %v1893 = vrot.slane %v1892, 2
    %v1894 = vmax.f32 %v1892, %v1893
    %v1895 = vrot.slane %v1894, 1
    %v1896 = vmax.f32 %v1894, %v1895
    %v1897 = vsel %vm440, %v1793, -inf
    %v1898 = vrot.slane %v1897, 4
    %v1899 = vmax.f32 %v1897, %v1898
    %v1900 = vrot.slane %v1899, 2
    %v1901 = vmax.f32 %v1899, %v1900
    %v1902 = vrot.slane %v1901, 1
    %v1903 = vmax.f32 %v1901, %v1902
    %v1904 = vsel %vm440, %v1800, -inf
    %v1905 = vrot.slane %v1904, 4
    %v1906 = vmax.f32 %v1904, %v1905
    %v1907 = vrot.slane %v1906, 2
    %v1908 = vmax.f32 %v1906, %v1907
    %v1909 = vrot.slane %v1908, 1
    %v1910 = vmax.f32 %v1908, %v1909
    %v1911 = vsel %vm440, %v1801, -inf
    %v1912 = vrot.slane %v1911, 4
    %v1913 = vmax.f32 %v1911, %v1912
    %v1914 = vrot.slane %v1913, 2
    %v1915 = vmax.f32 %v1913, %v1914
    %v1916 = vrot.slane %v1915, 1
    %v1917 = vmax.f32 %v1915, %v1916
    %v1918 = vsel %vm440, %v1808, -inf
    %v1919 = vrot.slane %v1918, 4
    %v1920 = vmax.f32 %v1918, %v1919
    %v1921 = vrot.slane %v1920, 2
    %v1922 = vmax.f32 %v1920, %v1921
    %v1923 = vrot.slane %v1922, 1
    %v1924 = vmax.f32 %v1922, %v1923
    %v1925 = vsel %vm440, %v1809, -inf
    %v1926 = vrot.slane %v1925, 4
    %v1927 = vmax.f32 %v1925, %v1926
    %v1928 = vrot.slane %v1927, 2
    %v1929 = vmax.f32 %v1927, %v1928
    %v1930 = vrot.slane %v1929, 1
    %v1931 = vmax.f32 %v1929, %v1930
    %v1932 = vsel %vm440, %v1816, -inf
    %v1933 = vrot.slane %v1932, 4
    %v1934 = vmax.f32 %v1932, %v1933
    %v1935 = vrot.slane %v1934, 2
    %v1936 = vmax.f32 %v1934, %v1935
    %v1937 = vrot.slane %v1936, 1
    %v1938 = vmax.f32 %v1936, %v1937
    %v1939 = vsel %vm440, %v1817, -inf
    %v1940 = vrot.slane %v1939, 4
    %v1941 = vmax.f32 %v1939, %v1940
    %v1942 = vrot.slane %v1941, 2
    %v1943 = vmax.f32 %v1941, %v1942
    %v1944 = vrot.slane %v1943, 1
    %v1945 = vmax.f32 %v1943, %v1944
    %v1946 = vmax.f32 %v1840, 0.0
    %v1947 = vmax.f32 %v1847, 0.0
    %v1948 = vmax.f32 %v1854, 0.0
    %v1949 = vmax.f32 %v1861, 0.0
    %v1950 = vmax.f32 %v1868, 0.0
    %v1951 = vmax.f32 %v1875, 0.0
    %v1952 = vmax.f32 %v1882, 0.0
    %v1953 = vmax.f32 %v1889, 0.0
    %v1954 = vmax.f32 %v1896, 0.0
    %v1955 = vmax.f32 %v1903, 0.0
    %v1956 = vmax.f32 %v1910, 0.0
    %v1957 = vmax.f32 %v1917, 0.0
    %v1958 = vmax.f32 %v1924, 0.0
    %v1959 = vmax.f32 %v1931, 0.0
    %v1960 = vmax.f32 %v1938, 0.0
    %v1961 = vmax.f32 %v1945, 0.0
    %vm1978 = vcmask 1041409
    %v1979 = vsel %vm1978, %v1948, %v1946
    %v1980 = vsel %vm595, %v1950, %v1979
    %v1981 = vsel %vm597, %v1952, %v1980
    %v1982 = vsel %vm1978, %v1949, %v1947
    %v1983 = vsel %vm595, %v1951, %v1982
    %v1984 = vsel %vm597, %v1953, %v1983
    %v1985 = vsel %vm1978, %v1956, %v1954
    %v1986 = vsel %vm595, %v1958, %v1985
    %v1987 = vsel %vm597, %v1960, %v1986
    %v1988 = vsel %vm1978, %v1957, %v1955
    %v1989 = vsel %vm595, %v1959, %v1988
    %v1990 = vsel %vm597, %v1961, %v1989
    %v1993 = vunpack.c.l.s4 1983009808
    %v1994 = vunpack.c.0.s8 %v1993
    %v1995 = vlaneseq
    %v1996 = vshrl.u32 %v1995, 7
    %v1997 = vsub.s32 %v1994, %v1996
    %v1998 = vrot.slane %v1981, %v1997
    %v2001 = vunpack.c.l.s4 1983009808
    %v2002 = vunpack.c.0.s8 %v2001
    %v2003 = vlaneseq
    %v2004 = vshrl.u32 %v2003, 7
    %v2005 = vsub.s32 %v2002, %v2004
    %v2006 = vrot.slane %v1987, %v2005
    %v2007 = vcombine.low %v1998, %v2006
    %v2008 = vcombine.high %v1998, %v2006
    %v2010 = vunpack.c.l.s4 1934713408
    %v2011 = vunpack.c.0.s8 %v2010
    %v2012 = vlaneseq
    %v2013 = vshrl.u32 %v2012, 7
    %v2014 = vsub.s32 %v2011, %v2013
    %v2015 = vrot.slane %v2007, %v2014
    %v2017 = vunpack.c.l.s4 1934713408
    %v2018 = vunpack.c.0.s8 %v2017
    %v2019 = vlaneseq
    %v2020 = vshrl.u32 %v2019, 7
    %v2021 = vsub.s32 %v2018, %v2020
    %v2022 = vrot.slane %v2008, %v2021
    %v2023 = vcombine.high %v2015, 0.0
    %v2024 = vcombine.high %v2022, 0.0
    %v2027 = vunpack.c.l.s4 1983009808
    %v2028 = vunpack.c.0.s8 %v2027
    %v2029 = vlaneseq
    %v2030 = vshrl.u32 %v2029, 7
    %v2031 = vsub.s32 %v2028, %v2030
    %v2032 = vrot.slane %v1984, %v2031
    %v2035 = vunpack.c.l.s4 1983009808
    %v2036 = vunpack.c.0.s8 %v2035
    %v2037 = vlaneseq
    %v2038 = vshrl.u32 %v2037, 7
    %v2039 = vsub.s32 %v2036, %v2038
    %v2040 = vrot.slane %v1990, %v2039
    %v2041 = vcombine.low %v2032, %v2040
    %v2042 = vcombine.high %v2032, %v2040
    %v2044 = vunpack.c.l.s4 1934713408
    %v2045 = vunpack.c.0.s8 %v2044
    %v2046 = vlaneseq
    %v2047 = vshrl.u32 %v2046, 7
    %v2048 = vsub.s32 %v2045, %v2047
    %v2049 = vrot.slane %v2041, %v2048
    %v2051 = vunpack.c.l.s4 1934713408
    %v2052 = vunpack.c.0.s8 %v2051
    %v2053 = vlaneseq
    %v2054 = vshrl.u32 %v2053, 7
    %v2055 = vsub.s32 %v2052, %v2054
    %v2056 = vrot.slane %v2042, %v2055
    %v2057 = vcombine.high %v2049, 0.0
    %v2058 = vcombine.high %v2056, 0.0
    %v2059 = vpack.c.bf16 %v2015, %v2015
    %v2060 = vpack.c.bf16 %v2049, %v2049
    %v2061 = vpack.c.bf16 %v2023, %v2023
    %v2062 = vpack.c.bf16 %v2057, %v2057
    %v2063 = vpack.c.bf16 %v2022, %v2022
    %v2064 = vpack.c.bf16 %v2056, %v2056
    %v2065 = vpack.c.bf16 %v2024, %v2024
    %v2066 = vpack.c.bf16 %v2058, %v2058
    %v2067 = vld [vmem:[#allocation15] sm:$0xff]
    %v2068 = vld [vmem:[#allocation15 + $0x8] sm:$0xff]
    %v2069 = vld [vmem:[#allocation15 + $0x10] sm:$0xff]
    %v2070 = vld [vmem:[#allocation15 + $0x18] sm:$0xff]
    %v2071 = vld [vmem:[#allocation15 + $0x20] sm:$0xff]
    %v2072 = vld [vmem:[#allocation15 + $0x28] sm:$0xff]
    %v2073 = vld [vmem:[#allocation15 + $0x30] sm:$0xff]
    %v2074 = vld [vmem:[#allocation15 + $0x38] sm:$0xff]
    %v2075 = vld [vmem:[#allocation15 + $0x40] sm:$0xff]
    %v2076 = vld [vmem:[#allocation15 + $0x48] sm:$0xff]
    %v2077 = vld [vmem:[#allocation15 + $0x50] sm:$0xff]
    %v2078 = vld [vmem:[#allocation15 + $0x58] sm:$0xff]
    %v2079 = vld [vmem:[#allocation15 + $0x60] sm:$0xff]
    %v2080 = vld [vmem:[#allocation15 + $0x68] sm:$0xff]
    %v2081 = vld [vmem:[#allocation15 + $0x70] sm:$0xff]
    %v2082 = vld [vmem:[#allocation15 + $0x78] sm:$0xff]
    %v2083 = vld [vmem:[#allocation15 + $0x80] sm:$0xff]
    %v2084 = vld [vmem:[#allocation15 + $0x88] sm:$0xff]
    %v2085 = vld [vmem:[#allocation15 + $0x90] sm:$0xff]
    %v2086 = vld [vmem:[#allocation15 + $0x98] sm:$0xff]
    %v2087 = vld [vmem:[#allocation15 + $0xa0] sm:$0xff]
    %v2088 = vld [vmem:[#allocation15 + $0xa8] sm:$0xff]
    %v2089 = vld [vmem:[#allocation15 + $0xb0] sm:$0xff]
    %v2090 = vld [vmem:[#allocation15 + $0xb8] sm:$0xff]
    %v2091 = vld [vmem:[#allocation15 + $0xc0] sm:$0xff]
    %v2092 = vld [vmem:[#allocation15 + $0xc8] sm:$0xff]
    %v2093 = vld [vmem:[#allocation15 + $0xd0] sm:$0xff]
    %v2094 = vld [vmem:[#allocation15 + $0xd8] sm:$0xff]
    %v2095 = vld [vmem:[#allocation15 + $0xe0] sm:$0xff]
    %v2096 = vld [vmem:[#allocation15 + $0xe8] sm:$0xff]
    %v2097 = vld [vmem:[#allocation15 + $0xf0] sm:$0xff]
    %v2098 = vld [vmem:[#allocation15 + $0xf8] sm:$0xff]
    %v2099 = vld [vmem:[#allocation15 + $0x100] sm:$0xff]
    %v2100 = vld [vmem:[#allocation15 + $0x108] sm:$0xff]
    %v2101 = vld [vmem:[#allocation15 + $0x110] sm:$0xff]
    %v2102 = vld [vmem:[#allocation15 + $0x118] sm:$0xff]
    %v2103 = vld [vmem:[#allocation15 + $0x120] sm:$0xff]
    %v2104 = vld [vmem:[#allocation15 + $0x128] sm:$0xff]
    %v2105 = vld [vmem:[#allocation15 + $0x130] sm:$0xff]
    %v2106 = vld [vmem:[#allocation15 + $0x138] sm:$0xff]
    %v2107 = vld [vmem:[#allocation15 + $0x140] sm:$0xff]
    %v2108 = vld [vmem:[#allocation15 + $0x148] sm:$0xff]
    %v2109 = vld [vmem:[#allocation15 + $0x150] sm:$0xff]
    %v2110 = vld [vmem:[#allocation15 + $0x158] sm:$0xff]
    %v2111 = vld [vmem:[#allocation15 + $0x160] sm:$0xff]
    %v2112 = vld [vmem:[#allocation15 + $0x168] sm:$0xff]
    %v2113 = vld [vmem:[#allocation15 + $0x170] sm:$0xff]
    %v2114 = vld [vmem:[#allocation15 + $0x178] sm:$0xff]
    %v2115 = vld [vmem:[#allocation15 + $0x180] sm:$0xff]
    %v2116 = vld [vmem:[#allocation15 + $0x188] sm:$0xff]
    %v2117 = vld [vmem:[#allocation15 + $0x190] sm:$0xff]
    %v2118 = vld [vmem:[#allocation15 + $0x198] sm:$0xff]
    %v2119 = vld [vmem:[#allocation15 + $0x1a0] sm:$0xff]
    %v2120 = vld [vmem:[#allocation15 + $0x1a8] sm:$0xff]
    %v2121 = vld [vmem:[#allocation15 + $0x1b0] sm:$0xff]
    %v2122 = vld [vmem:[#allocation15 + $0x1b8] sm:$0xff]
    %v2123 = vld [vmem:[#allocation15 + $0x1c0] sm:$0xff]
    %v2124 = vld [vmem:[#allocation15 + $0x1c8] sm:$0xff]
    %v2125 = vld [vmem:[#allocation15 + $0x1d0] sm:$0xff]
    %v2126 = vld [vmem:[#allocation15 + $0x1d8] sm:$0xff]
    %v2127 = vld [vmem:[#allocation15 + $0x1e0] sm:$0xff]
    %v2128 = vld [vmem:[#allocation15 + $0x1e8] sm:$0xff]
    %v2129 = vld [vmem:[#allocation15 + $0x1f0] sm:$0xff]
    %v2130 = vld [vmem:[#allocation15 + $0x1f8] sm:$0xff]
    %v2131 = vld [vmem:[#allocation15 + $0x200] sm:$0xff]
    %v2132 = vld [vmem:[#allocation15 + $0x208] sm:$0xff]
    %v2133 = vld [vmem:[#allocation15 + $0x210] sm:$0xff]
    %v2134 = vld [vmem:[#allocation15 + $0x218] sm:$0xff]
    %v2135 = vld [vmem:[#allocation15 + $0x220] sm:$0xff]
    %v2136 = vld [vmem:[#allocation15 + $0x228] sm:$0xff]
    %v2137 = vld [vmem:[#allocation15 + $0x230] sm:$0xff]
    %v2138 = vld [vmem:[#allocation15 + $0x238] sm:$0xff]
    %v2139 = vld [vmem:[#allocation15 + $0x240] sm:$0xff]
    %v2140 = vld [vmem:[#allocation15 + $0x248] sm:$0xff]
    %v2141 = vld [vmem:[#allocation15 + $0x250] sm:$0xff]
    %v2142 = vld [vmem:[#allocation15 + $0x258] sm:$0xff]
    %v2143 = vld [vmem:[#allocation15 + $0x260] sm:$0xff]
    %v2144 = vld [vmem:[#allocation15 + $0x268] sm:$0xff]
    %v2145 = vld [vmem:[#allocation15 + $0x270] sm:$0xff]
    %v2146 = vld [vmem:[#allocation15 + $0x278] sm:$0xff]
    %v2147 = vld [vmem:[#allocation15 + $0x280] sm:$0xff]
    %v2148 = vld [vmem:[#allocation15 + $0x288] sm:$0xff]
    %v2149 = vld [vmem:[#allocation15 + $0x290] sm:$0xff]
    %v2150 = vld [vmem:[#allocation15 + $0x298] sm:$0xff]
    %v2151 = vld [vmem:[#allocation15 + $0x2a0] sm:$0xff]
    %v2152 = vld [vmem:[#allocation15 + $0x2a8] sm:$0xff]
    %v2153 = vld [vmem:[#allocation15 + $0x2b0] sm:$0xff]
    %v2154 = vld [vmem:[#allocation15 + $0x2b8] sm:$0xff]
    %v2155 = vld [vmem:[#allocation15 + $0x2c0] sm:$0xff]
    %v2156 = vld [vmem:[#allocation15 + $0x2c8] sm:$0xff]
    %v2157 = vld [vmem:[#allocation15 + $0x2d0] sm:$0xff]
    %v2158 = vld [vmem:[#allocation15 + $0x2d8] sm:$0xff]
    %v2159 = vld [vmem:[#allocation15 + $0x2e0] sm:$0xff]
    %v2160 = vld [vmem:[#allocation15 + $0x2e8] sm:$0xff]
    %v2161 = vld [vmem:[#allocation15 + $0x2f0] sm:$0xff]
    %v2162 = vld [vmem:[#allocation15 + $0x2f8] sm:$0xff]
    %v2163 = vld [vmem:[#allocation15 + $0x300] sm:$0xff]
    %v2164 = vld [vmem:[#allocation15 + $0x308] sm:$0xff]
    %v2165 = vld [vmem:[#allocation15 + $0x310] sm:$0xff]
    %v2166 = vld [vmem:[#allocation15 + $0x318] sm:$0xff]
    %v2167 = vld [vmem:[#allocation15 + $0x320] sm:$0xff]
    %v2168 = vld [vmem:[#allocation15 + $0x328] sm:$0xff]
    %v2169 = vld [vmem:[#allocation15 + $0x330] sm:$0xff]
    %v2170 = vld [vmem:[#allocation15 + $0x338] sm:$0xff]
    %v2171 = vld [vmem:[#allocation15 + $0x340] sm:$0xff]
    %v2172 = vld [vmem:[#allocation15 + $0x348] sm:$0xff]
    %v2173 = vld [vmem:[#allocation15 + $0x350] sm:$0xff]
    %v2174 = vld [vmem:[#allocation15 + $0x358] sm:$0xff]
    %v2175 = vld [vmem:[#allocation15 + $0x360] sm:$0xff]
    %v2176 = vld [vmem:[#allocation15 + $0x368] sm:$0xff]
    %v2177 = vld [vmem:[#allocation15 + $0x370] sm:$0xff]
    %v2178 = vld [vmem:[#allocation15 + $0x378] sm:$0xff]
    %v2179 = vld [vmem:[#allocation15 + $0x380] sm:$0xff]
    %v2180 = vld [vmem:[#allocation15 + $0x388] sm:$0xff]
    %v2181 = vld [vmem:[#allocation15 + $0x390] sm:$0xff]
    %v2182 = vld [vmem:[#allocation15 + $0x398] sm:$0xff]
    %v2183 = vld [vmem:[#allocation15 + $0x3a0] sm:$0xff]
    %v2184 = vld [vmem:[#allocation15 + $0x3a8] sm:$0xff]
    %v2185 = vld [vmem:[#allocation15 + $0x3b0] sm:$0xff]
    %v2186 = vld [vmem:[#allocation15 + $0x3b8] sm:$0xff]
    %v2187 = vld [vmem:[#allocation15 + $0x3c0] sm:$0xff]
    %v2188 = vld [vmem:[#allocation15 + $0x3c8] sm:$0xff]
    %v2189 = vld [vmem:[#allocation15 + $0x3d0] sm:$0xff]
    %v2190 = vld [vmem:[#allocation15 + $0x3d8] sm:$0xff]
    %v2191 = vld [vmem:[#allocation15 + $0x3e0] sm:$0xff]
    %v2192 = vld [vmem:[#allocation15 + $0x3e8] sm:$0xff]
    %v2193 = vld [vmem:[#allocation15 + $0x3f0] sm:$0xff]
    %v2194 = vld [vmem:[#allocation15 + $0x3f8] sm:$0xff]
    %v2195 = vld [vmem:[#allocation15 + $0x400] sm:$0xff]
    %v2196 = vld [vmem:[#allocation15 + $0x408] sm:$0xff]
    %v2197 = vld [vmem:[#allocation15 + $0x410] sm:$0xff]
    %v2198 = vld [vmem:[#allocation15 + $0x418] sm:$0xff]
    %v2199 = vld [vmem:[#allocation15 + $0x420] sm:$0xff]
    %v2200 = vld [vmem:[#allocation15 + $0x428] sm:$0xff]
    %v2201 = vld [vmem:[#allocation15 + $0x430] sm:$0xff]
    %v2202 = vld [vmem:[#allocation15 + $0x438] sm:$0xff]
    %v2203 = vld [vmem:[#allocation15 + $0x440] sm:$0xff]
    %v2204 = vld [vmem:[#allocation15 + $0x448] sm:$0xff]
    %v2205 = vld [vmem:[#allocation15 + $0x450] sm:$0xff]
    %v2206 = vld [vmem:[#allocation15 + $0x458] sm:$0xff]
    %v2207 = vld [vmem:[#allocation15 + $0x460] sm:$0xff]
    %v2208 = vld [vmem:[#allocation15 + $0x468] sm:$0xff]
    %v2209 = vld [vmem:[#allocation15 + $0x470] sm:$0xff]
    %v2210 = vld [vmem:[#allocation15 + $0x478] sm:$0xff]
    %v2211 = vld [vmem:[#allocation15 + $0x480] sm:$0xff]
    %v2212 = vld [vmem:[#allocation15 + $0x488] sm:$0xff]
    %v2213 = vld [vmem:[#allocation15 + $0x490] sm:$0xff]
    %v2214 = vld [vmem:[#allocation15 + $0x498] sm:$0xff]
    %v2215 = vld [vmem:[#allocation15 + $0x4a0] sm:$0xff]
    %v2216 = vld [vmem:[#allocation15 + $0x4a8] sm:$0xff]
    %v2217 = vld [vmem:[#allocation15 + $0x4b0] sm:$0xff]
    %v2218 = vld [vmem:[#allocation15 + $0x4b8] sm:$0xff]
    %v2219 = vld [vmem:[#allocation15 + $0x4c0] sm:$0xff]
    %v2220 = vld [vmem:[#allocation15 + $0x4c8] sm:$0xff]
    %v2221 = vld [vmem:[#allocation15 + $0x4d0] sm:$0xff]
    %v2222 = vld [vmem:[#allocation15 + $0x4d8] sm:$0xff]
    %v2223 = vld [vmem:[#allocation15 + $0x4e0] sm:$0xff]
    %v2224 = vld [vmem:[#allocation15 + $0x4e8] sm:$0xff]
    %v2225 = vld [vmem:[#allocation15 + $0x4f0] sm:$0xff]
    %v2226 = vld [vmem:[#allocation15 + $0x4f8] sm:$0xff]
    %v2227 = vld [vmem:[#allocation15 + $0x500] sm:$0xff]
    %v2228 = vld [vmem:[#allocation15 + $0x508] sm:$0xff]
    %v2229 = vld [vmem:[#allocation15 + $0x510] sm:$0xff]
    %v2230 = vld [vmem:[#allocation15 + $0x518] sm:$0xff]
    %v2231 = vld [vmem:[#allocation15 + $0x520] sm:$0xff]
    %v2232 = vld [vmem:[#allocation15 + $0x528] sm:$0xff]
    %v2233 = vld [vmem:[#allocation15 + $0x530] sm:$0xff]
    %v2234 = vld [vmem:[#allocation15 + $0x538] sm:$0xff]
    %v2235 = vld [vmem:[#allocation15 + $0x540] sm:$0xff]
    %v2236 = vld [vmem:[#allocation15 + $0x548] sm:$0xff]
    %v2237 = vld [vmem:[#allocation15 + $0x550] sm:$0xff]
    %v2238 = vld [vmem:[#allocation15 + $0x558] sm:$0xff]
    %v2239 = vld [vmem:[#allocation15 + $0x560] sm:$0xff]
    %v2240 = vld [vmem:[#allocation15 + $0x568] sm:$0xff]
    %v2241 = vld [vmem:[#allocation15 + $0x570] sm:$0xff]
    %v2242 = vld [vmem:[#allocation15 + $0x578] sm:$0xff]
    %v2243 = vld [vmem:[#allocation15 + $0x580] sm:$0xff]
    %v2244 = vld [vmem:[#allocation15 + $0x588] sm:$0xff]
    %v2245 = vld [vmem:[#allocation15 + $0x590] sm:$0xff]
    %v2246 = vld [vmem:[#allocation15 + $0x598] sm:$0xff]
    %v2247 = vld [vmem:[#allocation15 + $0x5a0] sm:$0xff]
    %v2248 = vld [vmem:[#allocation15 + $0x5a8] sm:$0xff]
    %v2249 = vld [vmem:[#allocation15 + $0x5b0] sm:$0xff]
    %v2250 = vld [vmem:[#allocation15 + $0x5b8] sm:$0xff]
    %v2251 = vld [vmem:[#allocation15 + $0x5c0] sm:$0xff]
    %v2252 = vld [vmem:[#allocation15 + $0x5c8] sm:$0xff]
    %v2253 = vld [vmem:[#allocation15 + $0x5d0] sm:$0xff]
    %v2254 = vld [vmem:[#allocation15 + $0x5d8] sm:$0xff]
    %v2255 = vld [vmem:[#allocation15 + $0x5e0] sm:$0xff]
    %v2256 = vld [vmem:[#allocation15 + $0x5e8] sm:$0xff]
    %v2257 = vld [vmem:[#allocation15 + $0x5f0] sm:$0xff]
    %v2258 = vld [vmem:[#allocation15 + $0x5f8] sm:$0xff]
    %v2259 = vld [vmem:[#allocation15 + $0x600] sm:$0xff]
    %v2260 = vld [vmem:[#allocation15 + $0x608] sm:$0xff]
    %v2261 = vld [vmem:[#allocation15 + $0x610] sm:$0xff]
    %v2262 = vld [vmem:[#allocation15 + $0x618] sm:$0xff]
    %v2263 = vld [vmem:[#allocation15 + $0x620] sm:$0xff]
    %v2264 = vld [vmem:[#allocation15 + $0x628] sm:$0xff]
    %v2265 = vld [vmem:[#allocation15 + $0x630] sm:$0xff]
    %v2266 = vld [vmem:[#allocation15 + $0x638] sm:$0xff]
    %v2267 = vld [vmem:[#allocation15 + $0x640] sm:$0xff]
    %v2268 = vld [vmem:[#allocation15 + $0x648] sm:$0xff]
    %v2269 = vld [vmem:[#allocation15 + $0x650] sm:$0xff]
    %v2270 = vld [vmem:[#allocation15 + $0x658] sm:$0xff]
    %v2271 = vld [vmem:[#allocation15 + $0x660] sm:$0xff]
    %v2272 = vld [vmem:[#allocation15 + $0x668] sm:$0xff]
    %v2273 = vld [vmem:[#allocation15 + $0x670] sm:$0xff]
    %v2274 = vld [vmem:[#allocation15 + $0x678] sm:$0xff]
    %v2275 = vld [vmem:[#allocation15 + $0x680] sm:$0xff]
    %v2276 = vld [vmem:[#allocation15 + $0x688] sm:$0xff]
    %v2277 = vld [vmem:[#allocation15 + $0x690] sm:$0xff]
    %v2278 = vld [vmem:[#allocation15 + $0x698] sm:$0xff]
    %v2279 = vld [vmem:[#allocation15 + $0x6a0] sm:$0xff]
    %v2280 = vld [vmem:[#allocation15 + $0x6a8] sm:$0xff]
    %v2281 = vld [vmem:[#allocation15 + $0x6b0] sm:$0xff]
    %v2282 = vld [vmem:[#allocation15 + $0x6b8] sm:$0xff]
    %v2283 = vld [vmem:[#allocation15 + $0x6c0] sm:$0xff]
    %v2284 = vld [vmem:[#allocation15 + $0x6c8] sm:$0xff]
    %v2285 = vld [vmem:[#allocation15 + $0x6d0] sm:$0xff]
    %v2286 = vld [vmem:[#allocation15 + $0x6d8] sm:$0xff]
    %v2287 = vld [vmem:[#allocation15 + $0x6e0] sm:$0xff]
    %v2288 = vld [vmem:[#allocation15 + $0x6e8] sm:$0xff]
    %v2289 = vld [vmem:[#allocation15 + $0x6f0] sm:$0xff]
    %v2290 = vld [vmem:[#allocation15 + $0x6f8] sm:$0xff]
    %v2291 = vld [vmem:[#allocation15 + $0x700] sm:$0xff]
    %v2292 = vld [vmem:[#allocation15 + $0x708] sm:$0xff]
    %v2293 = vld [vmem:[#allocation15 + $0x710] sm:$0xff]
    %v2294 = vld [vmem:[#allocation15 + $0x718] sm:$0xff]
    %v2295 = vld [vmem:[#allocation15 + $0x720] sm:$0xff]
    %v2296 = vld [vmem:[#allocation15 + $0x728] sm:$0xff]
    %v2297 = vld [vmem:[#allocation15 + $0x730] sm:$0xff]
    %v2298 = vld [vmem:[#allocation15 + $0x738] sm:$0xff]
    %v2299 = vld [vmem:[#allocation15 + $0x740] sm:$0xff]
    %v2300 = vld [vmem:[#allocation15 + $0x748] sm:$0xff]
    %v2301 = vld [vmem:[#allocation15 + $0x750] sm:$0xff]
    %v2302 = vld [vmem:[#allocation15 + $0x758] sm:$0xff]
    %v2303 = vld [vmem:[#allocation15 + $0x760] sm:$0xff]
    %v2304 = vld [vmem:[#allocation15 + $0x768] sm:$0xff]
    %v2305 = vld [vmem:[#allocation15 + $0x770] sm:$0xff]
    %v2306 = vld [vmem:[#allocation15 + $0x778] sm:$0xff]
    %v2307 = vld [vmem:[#allocation15 + $0x780] sm:$0xff]
    %v2308 = vld [vmem:[#allocation15 + $0x788] sm:$0xff]
    %v2309 = vld [vmem:[#allocation15 + $0x790] sm:$0xff]
    %v2310 = vld [vmem:[#allocation15 + $0x798] sm:$0xff]
    %v2311 = vld [vmem:[#allocation15 + $0x7a0] sm:$0xff]
    %v2312 = vld [vmem:[#allocation15 + $0x7a8] sm:$0xff]
    %v2313 = vld [vmem:[#allocation15 + $0x7b0] sm:$0xff]
    %v2314 = vld [vmem:[#allocation15 + $0x7b8] sm:$0xff]
    %v2315 = vld [vmem:[#allocation15 + $0x7c0] sm:$0xff]
    %v2316 = vld [vmem:[#allocation15 + $0x7c8] sm:$0xff]
    %v2317 = vld [vmem:[#allocation15 + $0x7d0] sm:$0xff]
    %v2318 = vld [vmem:[#allocation15 + $0x7d8] sm:$0xff]
    %v2319 = vld [vmem:[#allocation15 + $0x7e0] sm:$0xff]
    %v2320 = vld [vmem:[#allocation15 + $0x7e8] sm:$0xff]
    %v2321 = vld [vmem:[#allocation15 + $0x7f0] sm:$0xff]
    %v2322 = vld [vmem:[#allocation15 + $0x7f8] sm:$0xff]
    %v2323 = vld [vmem:[#allocation15 + $0x800] sm:$0xff]
    %v2324 = vld [vmem:[#allocation15 + $0x808] sm:$0xff]
    %v2325 = vld [vmem:[#allocation15 + $0x810] sm:$0xff]
    %v2326 = vld [vmem:[#allocation15 + $0x818] sm:$0xff]
    %v2327 = vld [vmem:[#allocation15 + $0x820] sm:$0xff]
    %v2328 = vld [vmem:[#allocation15 + $0x828] sm:$0xff]
    %v2329 = vld [vmem:[#allocation15 + $0x830] sm:$0xff]
    %v2330 = vld [vmem:[#allocation15 + $0x838] sm:$0xff]
    %v2331 = vld [vmem:[#allocation15 + $0x840] sm:$0xff]
    %v2332 = vld [vmem:[#allocation15 + $0x848] sm:$0xff]
    %v2333 = vld [vmem:[#allocation15 + $0x850] sm:$0xff]
    %v2334 = vld [vmem:[#allocation15 + $0x858] sm:$0xff]
    %v2335 = vld [vmem:[#allocation15 + $0x860] sm:$0xff]
    %v2336 = vld [vmem:[#allocation15 + $0x868] sm:$0xff]
    %v2337 = vld [vmem:[#allocation15 + $0x870] sm:$0xff]
    %v2338 = vld [vmem:[#allocation15 + $0x878] sm:$0xff]
    %v2339 = vld [vmem:[#allocation15 + $0x880] sm:$0xff]
    %v2340 = vld [vmem:[#allocation15 + $0x888] sm:$0xff]
    %v2341 = vld [vmem:[#allocation15 + $0x890] sm:$0xff]
    %v2342 = vld [vmem:[#allocation15 + $0x898] sm:$0xff]
    %v2343 = vld [vmem:[#allocation15 + $0x8a0] sm:$0xff]
    %v2344 = vld [vmem:[#allocation15 + $0x8a8] sm:$0xff]
    %v2345 = vld [vmem:[#allocation15 + $0x8b0] sm:$0xff]
    %v2346 = vld [vmem:[#allocation15 + $0x8b8] sm:$0xff]
    %v2347 = vld [vmem:[#allocation15 + $0x8c0] sm:$0xff]
    %v2348 = vld [vmem:[#allocation15 + $0x8c8] sm:$0xff]
    %v2349 = vld [vmem:[#allocation15 + $0x8d0] sm:$0xff]
    %v2350 = vld [vmem:[#allocation15 + $0x8d8] sm:$0xff]
    %v2351 = vld [vmem:[#allocation15 + $0x8e0] sm:$0xff]
    %v2352 = vld [vmem:[#allocation15 + $0x8e8] sm:$0xff]
    %v2353 = vld [vmem:[#allocation15 + $0x8f0] sm:$0xff]
    %v2354 = vld [vmem:[#allocation15 + $0x8f8] sm:$0xff]
    %v2355 = vld [vmem:[#allocation15 + $0x900] sm:$0xff]
    %v2356 = vld [vmem:[#allocation15 + $0x908] sm:$0xff]
    %v2357 = vld [vmem:[#allocation15 + $0x910] sm:$0xff]
    %v2358 = vld [vmem:[#allocation15 + $0x918] sm:$0xff]
    %v2359 = vld [vmem:[#allocation15 + $0x920] sm:$0xff]
    %v2360 = vld [vmem:[#allocation15 + $0x928] sm:$0xff]
    %v2361 = vld [vmem:[#allocation15 + $0x930] sm:$0xff]
    %v2362 = vld [vmem:[#allocation15 + $0x938] sm:$0xff]
    %v2363 = vld [vmem:[#allocation15 + $0x940] sm:$0xff]
    %v2364 = vld [vmem:[#allocation15 + $0x948] sm:$0xff]
    %v2365 = vld [vmem:[#allocation15 + $0x950] sm:$0xff]
    %v2366 = vld [vmem:[#allocation15 + $0x958] sm:$0xff]
    %v2367 = vld [vmem:[#allocation15 + $0x960] sm:$0xff]
    %v2368 = vld [vmem:[#allocation15 + $0x968] sm:$0xff]
    %v2369 = vld [vmem:[#allocation15 + $0x970] sm:$0xff]
    %v2370 = vld [vmem:[#allocation15 + $0x978] sm:$0xff]
    %v2371 = vld [vmem:[#allocation15 + $0x980] sm:$0xff]
    %v2372 = vld [vmem:[#allocation15 + $0x988] sm:$0xff]
    %v2373 = vld [vmem:[#allocation15 + $0x990] sm:$0xff]
    %v2374 = vld [vmem:[#allocation15 + $0x998] sm:$0xff]
    %v2375 = vld [vmem:[#allocation15 + $0x9a0] sm:$0xff]
    %v2376 = vld [vmem:[#allocation15 + $0x9a8] sm:$0xff]
    %v2377 = vld [vmem:[#allocation15 + $0x9b0] sm:$0xff]
    %v2378 = vld [vmem:[#allocation15 + $0x9b8] sm:$0xff]
    %v2379 = vld [vmem:[#allocation15 + $0x9c0] sm:$0xff]
    %v2380 = vld [vmem:[#allocation15 + $0x9c8] sm:$0xff]
    %v2381 = vld [vmem:[#allocation15 + $0x9d0] sm:$0xff]
    %v2382 = vld [vmem:[#allocation15 + $0x9d8] sm:$0xff]
    %v2383 = vld [vmem:[#allocation15 + $0x9e0] sm:$0xff]
    %v2384 = vld [vmem:[#allocation15 + $0x9e8] sm:$0xff]
    %v2385 = vld [vmem:[#allocation15 + $0x9f0] sm:$0xff]
    %v2386 = vld [vmem:[#allocation15 + $0x9f8] sm:$0xff]
    %v2387 = vld [vmem:[#allocation15 + $0xa00] sm:$0xff]
    %v2388 = vld [vmem:[#allocation15 + $0xa08] sm:$0xff]
    %v2389 = vld [vmem:[#allocation15 + $0xa10] sm:$0xff]
    %v2390 = vld [vmem:[#allocation15 + $0xa18] sm:$0xff]
    %v2391 = vld [vmem:[#allocation15 + $0xa20] sm:$0xff]
    %v2392 = vld [vmem:[#allocation15 + $0xa28] sm:$0xff]
    %v2393 = vld [vmem:[#allocation15 + $0xa30] sm:$0xff]
    %v2394 = vld [vmem:[#allocation15 + $0xa38] sm:$0xff]
    %v2395 = vld [vmem:[#allocation15 + $0xa40] sm:$0xff]
    %v2396 = vld [vmem:[#allocation15 + $0xa48] sm:$0xff]
    %v2397 = vld [vmem:[#allocation15 + $0xa50] sm:$0xff]
    %v2398 = vld [vmem:[#allocation15 + $0xa58] sm:$0xff]
    %v2399 = vld [vmem:[#allocation15 + $0xa60] sm:$0xff]
    %v2400 = vld [vmem:[#allocation15 + $0xa68] sm:$0xff]
    %v2401 = vld [vmem:[#allocation15 + $0xa70] sm:$0xff]
    %v2402 = vld [vmem:[#allocation15 + $0xa78] sm:$0xff]
    %v2403 = vld [vmem:[#allocation15 + $0xa80] sm:$0xff]
    %v2404 = vld [vmem:[#allocation15 + $0xa88] sm:$0xff]
    %v2405 = vld [vmem:[#allocation15 + $0xa90] sm:$0xff]
    %v2406 = vld [vmem:[#allocation15 + $0xa98] sm:$0xff]
    %v2407 = vld [vmem:[#allocation15 + $0xaa0] sm:$0xff]
    %v2408 = vld [vmem:[#allocation15 + $0xaa8] sm:$0xff]
    %v2409 = vld [vmem:[#allocation15 + $0xab0] sm:$0xff]
    %v2410 = vld [vmem:[#allocation15 + $0xab8] sm:$0xff]
    %v2411 = vld [vmem:[#allocation15 + $0xac0] sm:$0xff]
    %v2412 = vld [vmem:[#allocation15 + $0xac8] sm:$0xff]
    %v2413 = vld [vmem:[#allocation15 + $0xad0] sm:$0xff]
    %v2414 = vld [vmem:[#allocation15 + $0xad8] sm:$0xff]
    %v2415 = vld [vmem:[#allocation15 + $0xae0] sm:$0xff]
    %v2416 = vld [vmem:[#allocation15 + $0xae8] sm:$0xff]
    %v2417 = vld [vmem:[#allocation15 + $0xaf0] sm:$0xff]
    %v2418 = vld [vmem:[#allocation15 + $0xaf8] sm:$0xff]
    %v2419 = vld [vmem:[#allocation15 + $0xb00] sm:$0xff]
    %v2420 = vld [vmem:[#allocation15 + $0xb08] sm:$0xff]
    %v2421 = vld [vmem:[#allocation15 + $0xb10] sm:$0xff]
    %v2422 = vld [vmem:[#allocation15 + $0xb18] sm:$0xff]
    %v2423 = vld [vmem:[#allocation15 + $0xb20] sm:$0xff]
    %v2424 = vld [vmem:[#allocation15 + $0xb28] sm:$0xff]
    %v2425 = vld [vmem:[#allocation15 + $0xb30] sm:$0xff]
    %v2426 = vld [vmem:[#allocation15 + $0xb38] sm:$0xff]
    %v2427 = vld [vmem:[#allocation15 + $0xb40] sm:$0xff]
    %v2428 = vld [vmem:[#allocation15 + $0xb48] sm:$0xff]
    %v2429 = vld [vmem:[#allocation15 + $0xb50] sm:$0xff]
    %v2430 = vld [vmem:[#allocation15 + $0xb58] sm:$0xff]
    %v2431 = vld [vmem:[#allocation15 + $0xb60] sm:$0xff]
    %v2432 = vld [vmem:[#allocation15 + $0xb68] sm:$0xff]
    %v2433 = vld [vmem:[#allocation15 + $0xb70] sm:$0xff]
    %v2434 = vld [vmem:[#allocation15 + $0xb78] sm:$0xff]
    %v2435 = vld [vmem:[#allocation15 + $0xb80] sm:$0xff]
    %v2436 = vld [vmem:[#allocation15 + $0xb88] sm:$0xff]
    %v2437 = vld [vmem:[#allocation15 + $0xb90] sm:$0xff]
    %v2438 = vld [vmem:[#allocation15 + $0xb98] sm:$0xff]
    %v2439 = vld [vmem:[#allocation15 + $0xba0] sm:$0xff]
    %v2440 = vld [vmem:[#allocation15 + $0xba8] sm:$0xff]
    %v2441 = vld [vmem:[#allocation15 + $0xbb0] sm:$0xff]
    %v2442 = vld [vmem:[#allocation15 + $0xbb8] sm:$0xff]
    %v2443 = vld [vmem:[#allocation15 + $0xbc0] sm:$0xff]
    %v2444 = vld [vmem:[#allocation15 + $0xbc8] sm:$0xff]
    %v2445 = vld [vmem:[#allocation15 + $0xbd0] sm:$0xff]
    %v2446 = vld [vmem:[#allocation15 + $0xbd8] sm:$0xff]
    %v2447 = vld [vmem:[#allocation15 + $0xbe0] sm:$0xff]
    %v2448 = vld [vmem:[#allocation15 + $0xbe8] sm:$0xff]
    %v2449 = vld [vmem:[#allocation15 + $0xbf0] sm:$0xff]
    %v2450 = vld [vmem:[#allocation15 + $0xbf8] sm:$0xff]
    %v2451 = vld [vmem:[#allocation15 + $0xc00] sm:$0xff]
    %v2452 = vld [vmem:[#allocation15 + $0xc08] sm:$0xff]
    %v2453 = vld [vmem:[#allocation15 + $0xc10] sm:$0xff]
    %v2454 = vld [vmem:[#allocation15 + $0xc18] sm:$0xff]
    %v2455 = vld [vmem:[#allocation15 + $0xc20] sm:$0xff]
    %v2456 = vld [vmem:[#allocation15 + $0xc28] sm:$0xff]
    %v2457 = vld [vmem:[#allocation15 + $0xc30] sm:$0xff]
    %v2458 = vld [vmem:[#allocation15 + $0xc38] sm:$0xff]
    %v2459 = vld [vmem:[#allocation15 + $0xc40] sm:$0xff]
    %v2460 = vld [vmem:[#allocation15 + $0xc48] sm:$0xff]
    %v2461 = vld [vmem:[#allocation15 + $0xc50] sm:$0xff]
    %v2462 = vld [vmem:[#allocation15 + $0xc58] sm:$0xff]
    %v2463 = vld [vmem:[#allocation15 + $0xc60] sm:$0xff]
    %v2464 = vld [vmem:[#allocation15 + $0xc68] sm:$0xff]
    %v2465 = vld [vmem:[#allocation15 + $0xc70] sm:$0xff]
    %v2466 = vld [vmem:[#allocation15 + $0xc78] sm:$0xff]
    %v2467 = vld [vmem:[#allocation15 + $0xc80] sm:$0xff]
    %v2468 = vld [vmem:[#allocation15 + $0xc88] sm:$0xff]
    %v2469 = vld [vmem:[#allocation15 + $0xc90] sm:$0xff]
    %v2470 = vld [vmem:[#allocation15 + $0xc98] sm:$0xff]
    %v2471 = vld [vmem:[#allocation15 + $0xca0] sm:$0xff]
    %v2472 = vld [vmem:[#allocation15 + $0xca8] sm:$0xff]
    %v2473 = vld [vmem:[#allocation15 + $0xcb0] sm:$0xff]
    %v2474 = vld [vmem:[#allocation15 + $0xcb8] sm:$0xff]
    %v2475 = vld [vmem:[#allocation15 + $0xcc0] sm:$0xff]
    %v2476 = vld [vmem:[#allocation15 + $0xcc8] sm:$0xff]
    %v2477 = vld [vmem:[#allocation15 + $0xcd0] sm:$0xff]
    %v2478 = vld [vmem:[#allocation15 + $0xcd8] sm:$0xff]
    %v2479 = vld [vmem:[#allocation15 + $0xce0] sm:$0xff]
    %v2480 = vld [vmem:[#allocation15 + $0xce8] sm:$0xff]
    %v2481 = vld [vmem:[#allocation15 + $0xcf0] sm:$0xff]
    %v2482 = vld [vmem:[#allocation15 + $0xcf8] sm:$0xff]
    %v2483 = vld [vmem:[#allocation15 + $0xd00] sm:$0xff]
    %v2484 = vld [vmem:[#allocation15 + $0xd08] sm:$0xff]
    %v2485 = vld [vmem:[#allocation15 + $0xd10] sm:$0xff]
    %v2486 = vld [vmem:[#allocation15 + $0xd18] sm:$0xff]
    %v2487 = vld [vmem:[#allocation15 + $0xd20] sm:$0xff]
    %v2488 = vld [vmem:[#allocation15 + $0xd28] sm:$0xff]
    %v2489 = vld [vmem:[#allocation15 + $0xd30] sm:$0xff]
    %v2490 = vld [vmem:[#allocation15 + $0xd38] sm:$0xff]
    %v2491 = vld [vmem:[#allocation15 + $0xd40] sm:$0xff]
    %v2492 = vld [vmem:[#allocation15 + $0xd48] sm:$0xff]
    %v2493 = vld [vmem:[#allocation15 + $0xd50] sm:$0xff]
    %v2494 = vld [vmem:[#allocation15 + $0xd58] sm:$0xff]
    %v2495 = vld [vmem:[#allocation15 + $0xd60] sm:$0xff]
    %v2496 = vld [vmem:[#allocation15 + $0xd68] sm:$0xff]
    %v2497 = vld [vmem:[#allocation15 + $0xd70] sm:$0xff]
    %v2498 = vld [vmem:[#allocation15 + $0xd78] sm:$0xff]
    %v2499 = vld [vmem:[#allocation15 + $0xd80] sm:$0xff]
    %v2500 = vld [vmem:[#allocation15 + $0xd88] sm:$0xff]
    %v2501 = vld [vmem:[#allocation15 + $0xd90] sm:$0xff]
    %v2502 = vld [vmem:[#allocation15 + $0xd98] sm:$0xff]
    %v2503 = vld [vmem:[#allocation15 + $0xda0] sm:$0xff]
    %v2504 = vld [vmem:[#allocation15 + $0xda8] sm:$0xff]
    %v2505 = vld [vmem:[#allocation15 + $0xdb0] sm:$0xff]
    %v2506 = vld [vmem:[#allocation15 + $0xdb8] sm:$0xff]
    %v2507 = vld [vmem:[#allocation15 + $0xdc0] sm:$0xff]
    %v2508 = vld [vmem:[#allocation15 + $0xdc8] sm:$0xff]
    %v2509 = vld [vmem:[#allocation15 + $0xdd0] sm:$0xff]
    %v2510 = vld [vmem:[#allocation15 + $0xdd8] sm:$0xff]
    %v2511 = vld [vmem:[#allocation15 + $0xde0] sm:$0xff]
    %v2512 = vld [vmem:[#allocation15 + $0xde8] sm:$0xff]
    %v2513 = vld [vmem:[#allocation15 + $0xdf0] sm:$0xff]
    %v2514 = vld [vmem:[#allocation15 + $0xdf8] sm:$0xff]
    %v2515 = vld [vmem:[#allocation15 + $0xe00] sm:$0xff]
    %v2516 = vld [vmem:[#allocation15 + $0xe08] sm:$0xff]
    %v2517 = vld [vmem:[#allocation15 + $0xe10] sm:$0xff]
    %v2518 = vld [vmem:[#allocation15 + $0xe18] sm:$0xff]
    %v2519 = vld [vmem:[#allocation15 + $0xe20] sm:$0xff]
    %v2520 = vld [vmem:[#allocation15 + $0xe28] sm:$0xff]
    %v2521 = vld [vmem:[#allocation15 + $0xe30] sm:$0xff]
    %v2522 = vld [vmem:[#allocation15 + $0xe38] sm:$0xff]
    %v2523 = vld [vmem:[#allocation15 + $0xe40] sm:$0xff]
    %v2524 = vld [vmem:[#allocation15 + $0xe48] sm:$0xff]
    %v2525 = vld [vmem:[#allocation15 + $0xe50] sm:$0xff]
    %v2526 = vld [vmem:[#allocation15 + $0xe58] sm:$0xff]
    %v2527 = vld [vmem:[#allocation15 + $0xe60] sm:$0xff]
    %v2528 = vld [vmem:[#allocation15 + $0xe68] sm:$0xff]
    %v2529 = vld [vmem:[#allocation15 + $0xe70] sm:$0xff]
    %v2530 = vld [vmem:[#allocation15 + $0xe78] sm:$0xff]
    %v2531 = vld [vmem:[#allocation15 + $0xe80] sm:$0xff]
    %v2532 = vld [vmem:[#allocation15 + $0xe88] sm:$0xff]
    %v2533 = vld [vmem:[#allocation15 + $0xe90] sm:$0xff]
    %v2534 = vld [vmem:[#allocation15 + $0xe98] sm:$0xff]
    %v2535 = vld [vmem:[#allocation15 + $0xea0] sm:$0xff]
    %v2536 = vld [vmem:[#allocation15 + $0xea8] sm:$0xff]
    %v2537 = vld [vmem:[#allocation15 + $0xeb0] sm:$0xff]
    %v2538 = vld [vmem:[#allocation15 + $0xeb8] sm:$0xff]
    %v2539 = vld [vmem:[#allocation15 + $0xec0] sm:$0xff]
    %v2540 = vld [vmem:[#allocation15 + $0xec8] sm:$0xff]
    %v2541 = vld [vmem:[#allocation15 + $0xed0] sm:$0xff]
    %v2542 = vld [vmem:[#allocation15 + $0xed8] sm:$0xff]
    %v2543 = vld [vmem:[#allocation15 + $0xee0] sm:$0xff]
    %v2544 = vld [vmem:[#allocation15 + $0xee8] sm:$0xff]
    %v2545 = vld [vmem:[#allocation15 + $0xef0] sm:$0xff]
    %v2546 = vld [vmem:[#allocation15 + $0xef8] sm:$0xff]
    %v2547 = vld [vmem:[#allocation15 + $0xf00] sm:$0xff]
    %v2548 = vld [vmem:[#allocation15 + $0xf08] sm:$0xff]
    %v2549 = vld [vmem:[#allocation15 + $0xf10] sm:$0xff]
    %v2550 = vld [vmem:[#allocation15 + $0xf18] sm:$0xff]
    %v2551 = vld [vmem:[#allocation15 + $0xf20] sm:$0xff]
    %v2552 = vld [vmem:[#allocation15 + $0xf28] sm:$0xff]
    %v2553 = vld [vmem:[#allocation15 + $0xf30] sm:$0xff]
    %v2554 = vld [vmem:[#allocation15 + $0xf38] sm:$0xff]
    %v2555 = vld [vmem:[#allocation15 + $0xf40] sm:$0xff]
    %v2556 = vld [vmem:[#allocation15 + $0xf48] sm:$0xff]
    %v2557 = vld [vmem:[#allocation15 + $0xf50] sm:$0xff]
    %v2558 = vld [vmem:[#allocation15 + $0xf58] sm:$0xff]
    %v2559 = vld [vmem:[#allocation15 + $0xf60] sm:$0xff]
    %v2560 = vld [vmem:[#allocation15 + $0xf68] sm:$0xff]
    %v2561 = vld [vmem:[#allocation15 + $0xf70] sm:$0xff]
    %v2562 = vld [vmem:[#allocation15 + $0xf78] sm:$0xff]
    %v2563 = vld [vmem:[#allocation15 + $0xf80] sm:$0xff]
    %v2564 = vld [vmem:[#allocation15 + $0xf88] sm:$0xff]
    %v2565 = vld [vmem:[#allocation15 + $0xf90] sm:$0xff]
    %v2566 = vld [vmem:[#allocation15 + $0xf98] sm:$0xff]
    %v2567 = vld [vmem:[#allocation15 + $0xfa0] sm:$0xff]
    %v2568 = vld [vmem:[#allocation15 + $0xfa8] sm:$0xff]
    %v2569 = vld [vmem:[#allocation15 + $0xfb0] sm:$0xff]
    %v2570 = vld [vmem:[#allocation15 + $0xfb8] sm:$0xff]
    %v2571 = vld [vmem:[#allocation15 + $0xfc0] sm:$0xff]
    %v2572 = vld [vmem:[#allocation15 + $0xfc8] sm:$0xff]
    %v2573 = vld [vmem:[#allocation15 + $0xfd0] sm:$0xff]
    %v2574 = vld [vmem:[#allocation15 + $0xfd8] sm:$0xff]
    %v2575 = vld [vmem:[#allocation15 + $0xfe0] sm:$0xff]
    %v2576 = vld [vmem:[#allocation15 + $0xfe8] sm:$0xff]
    %v2577 = vld [vmem:[#allocation15 + $0xff0] sm:$0xff]
    %v2578 = vld [vmem:[#allocation15 + $0xff8] sm:$0xff]
    %v2579 = vld [vmem:[#allocation17] sm:$0xff]
    %v2581 = vlaneseq
    %v2582 = vshrl.u32 %v2581, 7
    %v2583 = vsub.s32 0, %v2582
    %v2584 = vrot.slane %v2579, %v2583
    %v2585 = vlaneseq
    %v2586 = vshrl.u32 %v2585, 7
    %v2587 = vsub.s32 1, %v2586
    %v2588 = vrot.slane %v2579, %v2587
    %v2589 = vlaneseq
    %v2590 = vshrl.u32 %v2589, 7
    %v2591 = vsub.s32 2, %v2590
    %v2592 = vrot.slane %v2579, %v2591
    %v2593 = vlaneseq
    %v2594 = vshrl.u32 %v2593, 7
    %v2595 = vsub.s32 3, %v2594
    %v2596 = vrot.slane %v2579, %v2595
    %v2597 = vlaneseq
    %v2598 = vshrl.u32 %v2597, 7
    %v2599 = vsub.s32 4, %v2598
    %v2600 = vrot.slane %v2579, %v2599
    %v2601 = vlaneseq
    %v2602 = vshrl.u32 %v2601, 7
    %v2603 = vsub.s32 5, %v2602
    %v2604 = vrot.slane %v2579, %v2603
    %v2605 = vlaneseq
    %v2606 = vshrl.u32 %v2605, 7
    %v2607 = vsub.s32 6, %v2606
    %v2608 = vrot.slane %v2579, %v2607
    %v2609 = vlaneseq
    %v2610 = vshrl.u32 %v2609, 7
    %v2611 = vsub.s32 7, %v2610
    %v2612 = vrot.slane %v2579, %v2611
    %v3133 = vunpack.c.l.b16 %v2067
    %v3134 = vunpack.c.h.b16 %v2067
    %v3135 = vunpack.c.l.b16 %v2068
    %v3136 = vunpack.c.h.b16 %v2068
    %v3137 = vunpack.c.l.b16 %v2069
    %v3138 = vunpack.c.h.b16 %v2069
    %v3139 = vunpack.c.l.b16 %v2070
    %v3140 = vunpack.c.h.b16 %v2070
    %v3141 = vunpack.c.l.b16 %v2071
    %v3142 = vunpack.c.h.b16 %v2071
    %v3143 = vunpack.c.l.b16 %v2072
    %v3144 = vunpack.c.h.b16 %v2072
    %v3145 = vunpack.c.l.b16 %v2073
    %v3146 = vunpack.c.h.b16 %v2073
    %v3147 = vunpack.c.l.b16 %v2074
    %v3148 = vunpack.c.h.b16 %v2074
    %v3149 = vunpack.c.l.b16 %v2075
    %v3150 = vunpack.c.h.b16 %v2075
    %v3151 = vunpack.c.l.b16 %v2076
    %v3152 = vunpack.c.h.b16 %v2076
    %v3153 = vunpack.c.l.b16 %v2077
    %v3154 = vunpack.c.h.b16 %v2077
    %v3155 = vunpack.c.l.b16 %v2078
    %v3156 = vunpack.c.h.b16 %v2078
    %v3157 = vunpack.c.l.b16 %v2079
    %v3158 = vunpack.c.h.b16 %v2079
    %v3159 = vunpack.c.l.b16 %v2080
    %v3160 = vunpack.c.h.b16 %v2080
    %v3161 = vunpack.c.l.b16 %v2081
    %v3162 = vunpack.c.h.b16 %v2081
    %v3163 = vunpack.c.l.b16 %v2082
    %v3164 = vunpack.c.h.b16 %v2082
    %v3165 = vunpack.c.l.b16 %v2083
    %v3166 = vunpack.c.h.b16 %v2083
    %v3167 = vunpack.c.l.b16 %v2084
    %v3168 = vunpack.c.h.b16 %v2084
    %v3169 = vunpack.c.l.b16 %v2085
    %v3170 = vunpack.c.h.b16 %v2085
    %v3171 = vunpack.c.l.b16 %v2086
    %v3172 = vunpack.c.h.b16 %v2086
    %v3173 = vunpack.c.l.b16 %v2087
    %v3174 = vunpack.c.h.b16 %v2087
    %v3175 = vunpack.c.l.b16 %v2088
    %v3176 = vunpack.c.h.b16 %v2088
    %v3177 = vunpack.c.l.b16 %v2089
    %v3178 = vunpack.c.h.b16 %v2089
    %v3179 = vunpack.c.l.b16 %v2090
    %v3180 = vunpack.c.h.b16 %v2090
    %v3181 = vunpack.c.l.b16 %v2091
    %v3182 = vunpack.c.h.b16 %v2091
    %v3183 = vunpack.c.l.b16 %v2092
    %v3184 = vunpack.c.h.b16 %v2092
    %v3185 = vunpack.c.l.b16 %v2093
    %v3186 = vunpack.c.h.b16 %v2093
    %v3187 = vunpack.c.l.b16 %v2094
    %v3188 = vunpack.c.h.b16 %v2094
    %v3189 = vunpack.c.l.b16 %v2095
    %v3190 = vunpack.c.h.b16 %v2095
    %v3191 = vunpack.c.l.b16 %v2096
    %v3192 = vunpack.c.h.b16 %v2096
    %v3193 = vunpack.c.l.b16 %v2097
    %v3194 = vunpack.c.h.b16 %v2097
    %v3195 = vunpack.c.l.b16 %v2098
    %v3196 = vunpack.c.h.b16 %v2098
    %v3197 = vunpack.c.l.b16 %v2099
    %v3198 = vunpack.c.h.b16 %v2099
    %v3199 = vunpack.c.l.b16 %v2100
    %v3200 = vunpack.c.h.b16 %v2100
    %v3201 = vunpack.c.l.b16 %v2101
    %v3202 = vunpack.c.h.b16 %v2101
    %v3203 = vunpack.c.l.b16 %v2102
    %v3204 = vunpack.c.h.b16 %v2102
    %v3205 = vunpack.c.l.b16 %v2103
    %v3206 = vunpack.c.h.b16 %v2103
    %v3207 = vunpack.c.l.b16 %v2104
    %v3208 = vunpack.c.h.b16 %v2104
    %v3209 = vunpack.c.l.b16 %v2105
    %v3210 = vunpack.c.h.b16 %v2105
    %v3211 = vunpack.c.l.b16 %v2106
    %v3212 = vunpack.c.h.b16 %v2106
    %v3213 = vunpack.c.l.b16 %v2107
    %v3214 = vunpack.c.h.b16 %v2107
    %v3215 = vunpack.c.l.b16 %v2108
    %v3216 = vunpack.c.h.b16 %v2108
    %v3217 = vunpack.c.l.b16 %v2109
    %v3218 = vunpack.c.h.b16 %v2109
    %v3219 = vunpack.c.l.b16 %v2110
    %v3220 = vunpack.c.h.b16 %v2110
    %v3221 = vunpack.c.l.b16 %v2111
    %v3222 = vunpack.c.h.b16 %v2111
    %v3223 = vunpack.c.l.b16 %v2112
    %v3224 = vunpack.c.h.b16 %v2112
    %v3225 = vunpack.c.l.b16 %v2113
    %v3226 = vunpack.c.h.b16 %v2113
    %v3227 = vunpack.c.l.b16 %v2114
    %v3228 = vunpack.c.h.b16 %v2114
    %v3229 = vunpack.c.l.b16 %v2115
    %v3230 = vunpack.c.h.b16 %v2115
    %v3231 = vunpack.c.l.b16 %v2116
    %v3232 = vunpack.c.h.b16 %v2116
    %v3233 = vunpack.c.l.b16 %v2117
    %v3234 = vunpack.c.h.b16 %v2117
    %v3235 = vunpack.c.l.b16 %v2118
    %v3236 = vunpack.c.h.b16 %v2118
    %v3237 = vunpack.c.l.b16 %v2119
    %v3238 = vunpack.c.h.b16 %v2119
    %v3239 = vunpack.c.l.b16 %v2120
    %v3240 = vunpack.c.h.b16 %v2120
    %v3241 = vunpack.c.l.b16 %v2121
    %v3242 = vunpack.c.h.b16 %v2121
    %v3243 = vunpack.c.l.b16 %v2122
    %v3244 = vunpack.c.h.b16 %v2122
    %v3245 = vunpack.c.l.b16 %v2123
    %v3246 = vunpack.c.h.b16 %v2123
    %v3247 = vunpack.c.l.b16 %v2124
    %v3248 = vunpack.c.h.b16 %v2124
    %v3249 = vunpack.c.l.b16 %v2125
    %v3250 = vunpack.c.h.b16 %v2125
    %v3251 = vunpack.c.l.b16 %v2126
    %v3252 = vunpack.c.h.b16 %v2126
    %v3253 = vunpack.c.l.b16 %v2127
    %v3254 = vunpack.c.h.b16 %v2127
    %v3255 = vunpack.c.l.b16 %v2128
    %v3256 = vunpack.c.h.b16 %v2128
    %v3257 = vunpack.c.l.b16 %v2129
    %v3258 = vunpack.c.h.b16 %v2129
    %v3259 = vunpack.c.l.b16 %v2130
    %v3260 = vunpack.c.h.b16 %v2130
    %v3261 = vunpack.c.l.b16 %v2131
    %v3262 = vunpack.c.h.b16 %v2131
    %v3263 = vunpack.c.l.b16 %v2132
    %v3264 = vunpack.c.h.b16 %v2132
    %v3265 = vunpack.c.l.b16 %v2133
    %v3266 = vunpack.c.h.b16 %v2133
    %v3267 = vunpack.c.l.b16 %v2134
    %v3268 = vunpack.c.h.b16 %v2134
    %v3269 = vunpack.c.l.b16 %v2135
    %v3270 = vunpack.c.h.b16 %v2135
    %v3271 = vunpack.c.l.b16 %v2136
    %v3272 = vunpack.c.h.b16 %v2136
    %v3273 = vunpack.c.l.b16 %v2137
    %v3274 = vunpack.c.h.b16 %v2137
    %v3275 = vunpack.c.l.b16 %v2138
    %v3276 = vunpack.c.h.b16 %v2138
    %v3277 = vunpack.c.l.b16 %v2139
    %v3278 = vunpack.c.h.b16 %v2139
    %v3279 = vunpack.c.l.b16 %v2140
    %v3280 = vunpack.c.h.b16 %v2140
    %v3281 = vunpack.c.l.b16 %v2141
    %v3282 = vunpack.c.h.b16 %v2141
    %v3283 = vunpack.c.l.b16 %v2142
    %v3284 = vunpack.c.h.b16 %v2142
    %v3285 = vunpack.c.l.b16 %v2143
    %v3286 = vunpack.c.h.b16 %v2143
    %v3287 = vunpack.c.l.b16 %v2144
    %v3288 = vunpack.c.h.b16 %v2144
    %v3289 = vunpack.c.l.b16 %v2145
    %v3290 = vunpack.c.h.b16 %v2145
    %v3291 = vunpack.c.l.b16 %v2146
    %v3292 = vunpack.c.h.b16 %v2146
    %v3293 = vunpack.c.l.b16 %v2147
    %v3294 = vunpack.c.h.b16 %v2147
    %v3295 = vunpack.c.l.b16 %v2148
    %v3296 = vunpack.c.h.b16 %v2148
    %v3297 = vunpack.c.l.b16 %v2149
    %v3298 = vunpack.c.h.b16 %v2149
    %v3299 = vunpack.c.l.b16 %v2150
    %v3300 = vunpack.c.h.b16 %v2150
    %v3301 = vunpack.c.l.b16 %v2151
    %v3302 = vunpack.c.h.b16 %v2151
    %v3303 = vunpack.c.l.b16 %v2152
    %v3304 = vunpack.c.h.b16 %v2152
    %v3305 = vunpack.c.l.b16 %v2153
    %v3306 = vunpack.c.h.b16 %v2153
    %v3307 = vunpack.c.l.b16 %v2154
    %v3308 = vunpack.c.h.b16 %v2154
    %v3309 = vunpack.c.l.b16 %v2155
    %v3310 = vunpack.c.h.b16 %v2155
    %v3311 = vunpack.c.l.b16 %v2156
    %v3312 = vunpack.c.h.b16 %v2156
    %v3313 = vunpack.c.l.b16 %v2157
    %v3314 = vunpack.c.h.b16 %v2157
    %v3315 = vunpack.c.l.b16 %v2158
    %v3316 = vunpack.c.h.b16 %v2158
    %v3317 = vunpack.c.l.b16 %v2159
    %v3318 = vunpack.c.h.b16 %v2159
    %v3319 = vunpack.c.l.b16 %v2160
    %v3320 = vunpack.c.h.b16 %v2160
    %v3321 = vunpack.c.l.b16 %v2161
    %v3322 = vunpack.c.h.b16 %v2161
    %v3323 = vunpack.c.l.b16 %v2162
    %v3324 = vunpack.c.h.b16 %v2162
    %v3325 = vunpack.c.l.b16 %v2163
    %v3326 = vunpack.c.h.b16 %v2163
    %v3327 = vunpack.c.l.b16 %v2164
    %v3328 = vunpack.c.h.b16 %v2164
    %v3329 = vunpack.c.l.b16 %v2165
    %v3330 = vunpack.c.h.b16 %v2165
    %v3331 = vunpack.c.l.b16 %v2166
    %v3332 = vunpack.c.h.b16 %v2166
    %v3333 = vunpack.c.l.b16 %v2167
    %v3334 = vunpack.c.h.b16 %v2167
    %v3335 = vunpack.c.l.b16 %v2168
    %v3336 = vunpack.c.h.b16 %v2168
    %v3337 = vunpack.c.l.b16 %v2169
    %v3338 = vunpack.c.h.b16 %v2169
    %v3339 = vunpack.c.l.b16 %v2170
    %v3340 = vunpack.c.h.b16 %v2170
    %v3341 = vunpack.c.l.b16 %v2171
    %v3342 = vunpack.c.h.b16 %v2171
    %v3343 = vunpack.c.l.b16 %v2172
    %v3344 = vunpack.c.h.b16 %v2172
    %v3345 = vunpack.c.l.b16 %v2173
    %v3346 = vunpack.c.h.b16 %v2173
    %v3347 = vunpack.c.l.b16 %v2174
    %v3348 = vunpack.c.h.b16 %v2174
    %v3349 = vunpack.c.l.b16 %v2175
    %v3350 = vunpack.c.h.b16 %v2175
    %v3351 = vunpack.c.l.b16 %v2176
    %v3352 = vunpack.c.h.b16 %v2176
    %v3353 = vunpack.c.l.b16 %v2177
    %v3354 = vunpack.c.h.b16 %v2177
    %v3355 = vunpack.c.l.b16 %v2178
    %v3356 = vunpack.c.h.b16 %v2178
    %v3357 = vunpack.c.l.b16 %v2179
    %v3358 = vunpack.c.h.b16 %v2179
    %v3359 = vunpack.c.l.b16 %v2180
    %v3360 = vunpack.c.h.b16 %v2180
    %v3361 = vunpack.c.l.b16 %v2181
    %v3362 = vunpack.c.h.b16 %v2181
    %v3363 = vunpack.c.l.b16 %v2182
    %v3364 = vunpack.c.h.b16 %v2182
    %v3365 = vunpack.c.l.b16 %v2183
    %v3366 = vunpack.c.h.b16 %v2183
    %v3367 = vunpack.c.l.b16 %v2184
    %v3368 = vunpack.c.h.b16 %v2184
    %v3369 = vunpack.c.l.b16 %v2185
    %v3370 = vunpack.c.h.b16 %v2185
    %v3371 = vunpack.c.l.b16 %v2186
    %v3372 = vunpack.c.h.b16 %v2186
    %v3373 = vunpack.c.l.b16 %v2187
    %v3374 = vunpack.c.h.b16 %v2187
    %v3375 = vunpack.c.l.b16 %v2188
    %v3376 = vunpack.c.h.b16 %v2188
    %v3377 = vunpack.c.l.b16 %v2189
    %v3378 = vunpack.c.h.b16 %v2189
    %v3379 = vunpack.c.l.b16 %v2190
    %v3380 = vunpack.c.h.b16 %v2190
    %v3381 = vunpack.c.l.b16 %v2191
    %v3382 = vunpack.c.h.b16 %v2191
    %v3383 = vunpack.c.l.b16 %v2192
    %v3384 = vunpack.c.h.b16 %v2192
    %v3385 = vunpack.c.l.b16 %v2193
    %v3386 = vunpack.c.h.b16 %v2193
    %v3387 = vunpack.c.l.b16 %v2194
    %v3388 = vunpack.c.h.b16 %v2194
    %v3389 = vunpack.c.l.b16 %v2195
    %v3390 = vunpack.c.h.b16 %v2195
    %v3391 = vunpack.c.l.b16 %v2196
    %v3392 = vunpack.c.h.b16 %v2196
    %v3393 = vunpack.c.l.b16 %v2197
    %v3394 = vunpack.c.h.b16 %v2197
    %v3395 = vunpack.c.l.b16 %v2198
    %v3396 = vunpack.c.h.b16 %v2198
    %v3397 = vunpack.c.l.b16 %v2199
    %v3398 = vunpack.c.h.b16 %v2199
    %v3399 = vunpack.c.l.b16 %v2200
    %v3400 = vunpack.c.h.b16 %v2200
    %v3401 = vunpack.c.l.b16 %v2201
    %v3402 = vunpack.c.h.b16 %v2201
    %v3403 = vunpack.c.l.b16 %v2202
    %v3404 = vunpack.c.h.b16 %v2202
    %v3405 = vunpack.c.l.b16 %v2203
    %v3406 = vunpack.c.h.b16 %v2203
    %v3407 = vunpack.c.l.b16 %v2204
    %v3408 = vunpack.c.h.b16 %v2204
    %v3409 = vunpack.c.l.b16 %v2205
    %v3410 = vunpack.c.h.b16 %v2205
    %v3411 = vunpack.c.l.b16 %v2206
    %v3412 = vunpack.c.h.b16 %v2206
    %v3413 = vunpack.c.l.b16 %v2207
    %v3414 = vunpack.c.h.b16 %v2207
    %v3415 = vunpack.c.l.b16 %v2208
    %v3416 = vunpack.c.h.b16 %v2208
    %v3417 = vunpack.c.l.b16 %v2209
    %v3418 = vunpack.c.h.b16 %v2209
    %v3419 = vunpack.c.l.b16 %v2210
    %v3420 = vunpack.c.h.b16 %v2210
    %v3421 = vunpack.c.l.b16 %v2211
    %v3422 = vunpack.c.h.b16 %v2211
    %v3423 = vunpack.c.l.b16 %v2212
    %v3424 = vunpack.c.h.b16 %v2212
    %v3425 = vunpack.c.l.b16 %v2213
    %v3426 = vunpack.c.h.b16 %v2213
    %v3427 = vunpack.c.l.b16 %v2214
    %v3428 = vunpack.c.h.b16 %v2214
    %v3429 = vunpack.c.l.b16 %v2215
    %v3430 = vunpack.c.h.b16 %v2215
    %v3431 = vunpack.c.l.b16 %v2216
    %v3432 = vunpack.c.h.b16 %v2216
    %v3433 = vunpack.c.l.b16 %v2217
    %v3434 = vunpack.c.h.b16 %v2217
    %v3435 = vunpack.c.l.b16 %v2218
    %v3436 = vunpack.c.h.b16 %v2218
    %v3437 = vunpack.c.l.b16 %v2219
    %v3438 = vunpack.c.h.b16 %v2219
    %v3439 = vunpack.c.l.b16 %v2220
    %v3440 = vunpack.c.h.b16 %v2220
    %v3441 = vunpack.c.l.b16 %v2221
    %v3442 = vunpack.c.h.b16 %v2221
    %v3443 = vunpack.c.l.b16 %v2222
    %v3444 = vunpack.c.h.b16 %v2222
    %v3445 = vunpack.c.l.b16 %v2223
    %v3446 = vunpack.c.h.b16 %v2223
    %v3447 = vunpack.c.l.b16 %v2224
    %v3448 = vunpack.c.h.b16 %v2224
    %v3449 = vunpack.c.l.b16 %v2225
    %v3450 = vunpack.c.h.b16 %v2225
    %v3451 = vunpack.c.l.b16 %v2226
    %v3452 = vunpack.c.h.b16 %v2226
    %v3453 = vunpack.c.l.b16 %v2227
    %v3454 = vunpack.c.h.b16 %v2227
    %v3455 = vunpack.c.l.b16 %v2228
    %v3456 = vunpack.c.h.b16 %v2228
    %v3457 = vunpack.c.l.b16 %v2229
    %v3458 = vunpack.c.h.b16 %v2229
    %v3459 = vunpack.c.l.b16 %v2230
    %v3460 = vunpack.c.h.b16 %v2230
    %v3461 = vunpack.c.l.b16 %v2231
    %v3462 = vunpack.c.h.b16 %v2231
    %v3463 = vunpack.c.l.b16 %v2232
    %v3464 = vunpack.c.h.b16 %v2232
    %v3465 = vunpack.c.l.b16 %v2233
    %v3466 = vunpack.c.h.b16 %v2233
    %v3467 = vunpack.c.l.b16 %v2234
    %v3468 = vunpack.c.h.b16 %v2234
    %v3469 = vunpack.c.l.b16 %v2235
    %v3470 = vunpack.c.h.b16 %v2235
    %v3471 = vunpack.c.l.b16 %v2236
    %v3472 = vunpack.c.h.b16 %v2236
    %v3473 = vunpack.c.l.b16 %v2237
    %v3474 = vunpack.c.h.b16 %v2237
    %v3475 = vunpack.c.l.b16 %v2238
    %v3476 = vunpack.c.h.b16 %v2238
    %v3477 = vunpack.c.l.b16 %v2239
    %v3478 = vunpack.c.h.b16 %v2239
    %v3479 = vunpack.c.l.b16 %v2240
    %v3480 = vunpack.c.h.b16 %v2240
    %v3481 = vunpack.c.l.b16 %v2241
    %v3482 = vunpack.c.h.b16 %v2241
    %v3483 = vunpack.c.l.b16 %v2242
    %v3484 = vunpack.c.h.b16 %v2242
    %v3485 = vunpack.c.l.b16 %v2243
    %v3486 = vunpack.c.h.b16 %v2243
    %v3487 = vunpack.c.l.b16 %v2244
    %v3488 = vunpack.c.h.b16 %v2244
    %v3489 = vunpack.c.l.b16 %v2245
    %v3490 = vunpack.c.h.b16 %v2245
    %v3491 = vunpack.c.l.b16 %v2246
    %v3492 = vunpack.c.h.b16 %v2246
    %v3493 = vunpack.c.l.b16 %v2247
    %v3494 = vunpack.c.h.b16 %v2247
    %v3495 = vunpack.c.l.b16 %v2248
    %v3496 = vunpack.c.h.b16 %v2248
    %v3497 = vunpack.c.l.b16 %v2249
    %v3498 = vunpack.c.h.b16 %v2249
    %v3499 = vunpack.c.l.b16 %v2250
    %v3500 = vunpack.c.h.b16 %v2250
    %v3501 = vunpack.c.l.b16 %v2251
    %v3502 = vunpack.c.h.b16 %v2251
    %v3503 = vunpack.c.l.b16 %v2252
    %v3504 = vunpack.c.h.b16 %v2252
    %v3505 = vunpack.c.l.b16 %v2253
    %v3506 = vunpack.c.h.b16 %v2253
    %v3507 = vunpack.c.l.b16 %v2254
    %v3508 = vunpack.c.h.b16 %v2254
    %v3509 = vunpack.c.l.b16 %v2255
    %v3510 = vunpack.c.h.b16 %v2255
    %v3511 = vunpack.c.l.b16 %v2256
    %v3512 = vunpack.c.h.b16 %v2256
    %v3513 = vunpack.c.l.b16 %v2257
    %v3514 = vunpack.c.h.b16 %v2257
    %v3515 = vunpack.c.l.b16 %v2258
    %v3516 = vunpack.c.h.b16 %v2258
    %v3517 = vunpack.c.l.b16 %v2259
    %v3518 = vunpack.c.h.b16 %v2259
    %v3519 = vunpack.c.l.b16 %v2260
    %v3520 = vunpack.c.h.b16 %v2260
    %v3521 = vunpack.c.l.b16 %v2261
    %v3522 = vunpack.c.h.b16 %v2261
    %v3523 = vunpack.c.l.b16 %v2262
    %v3524 = vunpack.c.h.b16 %v2262
    %v3525 = vunpack.c.l.b16 %v2263
    %v3526 = vunpack.c.h.b16 %v2263
    %v3527 = vunpack.c.l.b16 %v2264
    %v3528 = vunpack.c.h.b16 %v2264
    %v3529 = vunpack.c.l.b16 %v2265
    %v3530 = vunpack.c.h.b16 %v2265
    %v3531 = vunpack.c.l.b16 %v2266
    %v3532 = vunpack.c.h.b16 %v2266
    %v3533 = vunpack.c.l.b16 %v2267
    %v3534 = vunpack.c.h.b16 %v2267
    %v3535 = vunpack.c.l.b16 %v2268
    %v3536 = vunpack.c.h.b16 %v2268
    %v3537 = vunpack.c.l.b16 %v2269
    %v3538 = vunpack.c.h.b16 %v2269
    %v3539 = vunpack.c.l.b16 %v2270
    %v3540 = vunpack.c.h.b16 %v2270
    %v3541 = vunpack.c.l.b16 %v2271
    %v3542 = vunpack.c.h.b16 %v2271
    %v3543 = vunpack.c.l.b16 %v2272
    %v3544 = vunpack.c.h.b16 %v2272
    %v3545 = vunpack.c.l.b16 %v2273
    %v3546 = vunpack.c.h.b16 %v2273
    %v3547 = vunpack.c.l.b16 %v2274
    %v3548 = vunpack.c.h.b16 %v2274
    %v3549 = vunpack.c.l.b16 %v2275
    %v3550 = vunpack.c.h.b16 %v2275
    %v3551 = vunpack.c.l.b16 %v2276
    %v3552 = vunpack.c.h.b16 %v2276
    %v3553 = vunpack.c.l.b16 %v2277
    %v3554 = vunpack.c.h.b16 %v2277
    %v3555 = vunpack.c.l.b16 %v2278
    %v3556 = vunpack.c.h.b16 %v2278
    %v3557 = vunpack.c.l.b16 %v2279
    %v3558 = vunpack.c.h.b16 %v2279
    %v3559 = vunpack.c.l.b16 %v2280
    %v3560 = vunpack.c.h.b16 %v2280
    %v3561 = vunpack.c.l.b16 %v2281
    %v3562 = vunpack.c.h.b16 %v2281
    %v3563 = vunpack.c.l.b16 %v2282
    %v3564 = vunpack.c.h.b16 %v2282
    %v3565 = vunpack.c.l.b16 %v2283
    %v3566 = vunpack.c.h.b16 %v2283
    %v3567 = vunpack.c.l.b16 %v2284
    %v3568 = vunpack.c.h.b16 %v2284
    %v3569 = vunpack.c.l.b16 %v2285
    %v3570 = vunpack.c.h.b16 %v2285
    %v3571 = vunpack.c.l.b16 %v2286
    %v3572 = vunpack.c.h.b16 %v2286
    %v3573 = vunpack.c.l.b16 %v2287
    %v3574 = vunpack.c.h.b16 %v2287
    %v3575 = vunpack.c.l.b16 %v2288
    %v3576 = vunpack.c.h.b16 %v2288
    %v3577 = vunpack.c.l.b16 %v2289
    %v3578 = vunpack.c.h.b16 %v2289
    %v3579 = vunpack.c.l.b16 %v2290
    %v3580 = vunpack.c.h.b16 %v2290
    %v3581 = vunpack.c.l.b16 %v2291
    %v3582 = vunpack.c.h.b16 %v2291
    %v3583 = vunpack.c.l.b16 %v2292
    %v3584 = vunpack.c.h.b16 %v2292
    %v3585 = vunpack.c.l.b16 %v2293
    %v3586 = vunpack.c.h.b16 %v2293
    %v3587 = vunpack.c.l.b16 %v2294
    %v3588 = vunpack.c.h.b16 %v2294
    %v3589 = vunpack.c.l.b16 %v2295
    %v3590 = vunpack.c.h.b16 %v2295
    %v3591 = vunpack.c.l.b16 %v2296
    %v3592 = vunpack.c.h.b16 %v2296
    %v3593 = vunpack.c.l.b16 %v2297
    %v3594 = vunpack.c.h.b16 %v2297
    %v3595 = vunpack.c.l.b16 %v2298
    %v3596 = vunpack.c.h.b16 %v2298
    %v3597 = vunpack.c.l.b16 %v2299
    %v3598 = vunpack.c.h.b16 %v2299
    %v3599 = vunpack.c.l.b16 %v2300
    %v3600 = vunpack.c.h.b16 %v2300
    %v3601 = vunpack.c.l.b16 %v2301
    %v3602 = vunpack.c.h.b16 %v2301
    %v3603 = vunpack.c.l.b16 %v2302
    %v3604 = vunpack.c.h.b16 %v2302
    %v3605 = vunpack.c.l.b16 %v2303
    %v3606 = vunpack.c.h.b16 %v2303
    %v3607 = vunpack.c.l.b16 %v2304
    %v3608 = vunpack.c.h.b16 %v2304
    %v3609 = vunpack.c.l.b16 %v2305
    %v3610 = vunpack.c.h.b16 %v2305
    %v3611 = vunpack.c.l.b16 %v2306
    %v3612 = vunpack.c.h.b16 %v2306
    %v3613 = vunpack.c.l.b16 %v2307
    %v3614 = vunpack.c.h.b16 %v2307
    %v3615 = vunpack.c.l.b16 %v2308
    %v3616 = vunpack.c.h.b16 %v2308
    %v3617 = vunpack.c.l.b16 %v2309
    %v3618 = vunpack.c.h.b16 %v2309
    %v3619 = vunpack.c.l.b16 %v2310
    %v3620 = vunpack.c.h.b16 %v2310
    %v3621 = vunpack.c.l.b16 %v2311
    %v3622 = vunpack.c.h.b16 %v2311
    %v3623 = vunpack.c.l.b16 %v2312
    %v3624 = vunpack.c.h.b16 %v2312
    %v3625 = vunpack.c.l.b16 %v2313
    %v3626 = vunpack.c.h.b16 %v2313
    %v3627 = vunpack.c.l.b16 %v2314
    %v3628 = vunpack.c.h.b16 %v2314
    %v3629 = vunpack.c.l.b16 %v2315
    %v3630 = vunpack.c.h.b16 %v2315
    %v3631 = vunpack.c.l.b16 %v2316
    %v3632 = vunpack.c.h.b16 %v2316
    %v3633 = vunpack.c.l.b16 %v2317
    %v3634 = vunpack.c.h.b16 %v2317
    %v3635 = vunpack.c.l.b16 %v2318
    %v3636 = vunpack.c.h.b16 %v2318
    %v3637 = vunpack.c.l.b16 %v2319
    %v3638 = vunpack.c.h.b16 %v2319
    %v3639 = vunpack.c.l.b16 %v2320
    %v3640 = vunpack.c.h.b16 %v2320
    %v3641 = vunpack.c.l.b16 %v2321
    %v3642 = vunpack.c.h.b16 %v2321
    %v3643 = vunpack.c.l.b16 %v2322
    %v3644 = vunpack.c.h.b16 %v2322
    %v3645 = vunpack.c.l.b16 %v2323
    %v3646 = vunpack.c.h.b16 %v2323
    %v3647 = vunpack.c.l.b16 %v2324
    %v3648 = vunpack.c.h.b16 %v2324
    %v3649 = vunpack.c.l.b16 %v2325
    %v3650 = vunpack.c.h.b16 %v2325
    %v3651 = vunpack.c.l.b16 %v2326
    %v3652 = vunpack.c.h.b16 %v2326
    %v3653 = vunpack.c.l.b16 %v2327
    %v3654 = vunpack.c.h.b16 %v2327
    %v3655 = vunpack.c.l.b16 %v2328
    %v3656 = vunpack.c.h.b16 %v2328
    %v3657 = vunpack.c.l.b16 %v2329
    %v3658 = vunpack.c.h.b16 %v2329
    %v3659 = vunpack.c.l.b16 %v2330
    %v3660 = vunpack.c.h.b16 %v2330
    %v3661 = vunpack.c.l.b16 %v2331
    %v3662 = vunpack.c.h.b16 %v2331
    %v3663 = vunpack.c.l.b16 %v2332
    %v3664 = vunpack.c.h.b16 %v2332
    %v3665 = vunpack.c.l.b16 %v2333
    %v3666 = vunpack.c.h.b16 %v2333
    %v3667 = vunpack.c.l.b16 %v2334
    %v3668 = vunpack.c.h.b16 %v2334
    %v3669 = vunpack.c.l.b16 %v2335
    %v3670 = vunpack.c.h.b16 %v2335
    %v3671 = vunpack.c.l.b16 %v2336
    %v3672 = vunpack.c.h.b16 %v2336
    %v3673 = vunpack.c.l.b16 %v2337
    %v3674 = vunpack.c.h.b16 %v2337
    %v3675 = vunpack.c.l.b16 %v2338
    %v3676 = vunpack.c.h.b16 %v2338
    %v3677 = vunpack.c.l.b16 %v2339
    %v3678 = vunpack.c.h.b16 %v2339
    %v3679 = vunpack.c.l.b16 %v2340
    %v3680 = vunpack.c.h.b16 %v2340
    %v3681 = vunpack.c.l.b16 %v2341
    %v3682 = vunpack.c.h.b16 %v2341
    %v3683 = vunpack.c.l.b16 %v2342
    %v3684 = vunpack.c.h.b16 %v2342
    %v3685 = vunpack.c.l.b16 %v2343
    %v3686 = vunpack.c.h.b16 %v2343
    %v3687 = vunpack.c.l.b16 %v2344
    %v3688 = vunpack.c.h.b16 %v2344
    %v3689 = vunpack.c.l.b16 %v2345
    %v3690 = vunpack.c.h.b16 %v2345
    %v3691 = vunpack.c.l.b16 %v2346
    %v3692 = vunpack.c.h.b16 %v2346
    %v3693 = vunpack.c.l.b16 %v2347
    %v3694 = vunpack.c.h.b16 %v2347
    %v3695 = vunpack.c.l.b16 %v2348
    %v3696 = vunpack.c.h.b16 %v2348
    %v3697 = vunpack.c.l.b16 %v2349
    %v3698 = vunpack.c.h.b16 %v2349
    %v3699 = vunpack.c.l.b16 %v2350
    %v3700 = vunpack.c.h.b16 %v2350
    %v3701 = vunpack.c.l.b16 %v2351
    %v3702 = vunpack.c.h.b16 %v2351
    %v3703 = vunpack.c.l.b16 %v2352
    %v3704 = vunpack.c.h.b16 %v2352
    %v3705 = vunpack.c.l.b16 %v2353
    %v3706 = vunpack.c.h.b16 %v2353
    %v3707 = vunpack.c.l.b16 %v2354
    %v3708 = vunpack.c.h.b16 %v2354
    %v3709 = vunpack.c.l.b16 %v2355
    %v3710 = vunpack.c.h.b16 %v2355
    %v3711 = vunpack.c.l.b16 %v2356
    %v3712 = vunpack.c.h.b16 %v2356
    %v3713 = vunpack.c.l.b16 %v2357
    %v3714 = vunpack.c.h.b16 %v2357
    %v3715 = vunpack.c.l.b16 %v2358
    %v3716 = vunpack.c.h.b16 %v2358
    %v3717 = vunpack.c.l.b16 %v2359
    %v3718 = vunpack.c.h.b16 %v2359
    %v3719 = vunpack.c.l.b16 %v2360
    %v3720 = vunpack.c.h.b16 %v2360
    %v3721 = vunpack.c.l.b16 %v2361
    %v3722 = vunpack.c.h.b16 %v2361
    %v3723 = vunpack.c.l.b16 %v2362
    %v3724 = vunpack.c.h.b16 %v2362
    %v3725 = vunpack.c.l.b16 %v2363
    %v3726 = vunpack.c.h.b16 %v2363
    %v3727 = vunpack.c.l.b16 %v2364
    %v3728 = vunpack.c.h.b16 %v2364
    %v3729 = vunpack.c.l.b16 %v2365
    %v3730 = vunpack.c.h.b16 %v2365
    %v3731 = vunpack.c.l.b16 %v2366
    %v3732 = vunpack.c.h.b16 %v2366
    %v3733 = vunpack.c.l.b16 %v2367
    %v3734 = vunpack.c.h.b16 %v2367
    %v3735 = vunpack.c.l.b16 %v2368
    %v3736 = vunpack.c.h.b16 %v2368
    %v3737 = vunpack.c.l.b16 %v2369
    %v3738 = vunpack.c.h.b16 %v2369
    %v3739 = vunpack.c.l.b16 %v2370
    %v3740 = vunpack.c.h.b16 %v2370
    %v3741 = vunpack.c.l.b16 %v2371
    %v3742 = vunpack.c.h.b16 %v2371
    %v3743 = vunpack.c.l.b16 %v2372
    %v3744 = vunpack.c.h.b16 %v2372
    %v3745 = vunpack.c.l.b16 %v2373
    %v3746 = vunpack.c.h.b16 %v2373
    %v3747 = vunpack.c.l.b16 %v2374
    %v3748 = vunpack.c.h.b16 %v2374
    %v3749 = vunpack.c.l.b16 %v2375
    %v3750 = vunpack.c.h.b16 %v2375
    %v3751 = vunpack.c.l.b16 %v2376
    %v3752 = vunpack.c.h.b16 %v2376
    %v3753 = vunpack.c.l.b16 %v2377
    %v3754 = vunpack.c.h.b16 %v2377
    %v3755 = vunpack.c.l.b16 %v2378
    %v3756 = vunpack.c.h.b16 %v2378
    %v3757 = vunpack.c.l.b16 %v2379
    %v3758 = vunpack.c.h.b16 %v2379
    %v3759 = vunpack.c.l.b16 %v2380
    %v3760 = vunpack.c.h.b16 %v2380
    %v3761 = vunpack.c.l.b16 %v2381
    %v3762 = vunpack.c.h.b16 %v2381
    %v3763 = vunpack.c.l.b16 %v2382
    %v3764 = vunpack.c.h.b16 %v2382
    %v3765 = vunpack.c.l.b16 %v2383
    %v3766 = vunpack.c.h.b16 %v2383
    %v3767 = vunpack.c.l.b16 %v2384
    %v3768 = vunpack.c.h.b16 %v2384
    %v3769 = vunpack.c.l.b16 %v2385
    %v3770 = vunpack.c.h.b16 %v2385
    %v3771 = vunpack.c.l.b16 %v2386
    %v3772 = vunpack.c.h.b16 %v2386
    %v3773 = vunpack.c.l.b16 %v2387
    %v3774 = vunpack.c.h.b16 %v2387
    %v3775 = vunpack.c.l.b16 %v2388
    %v3776 = vunpack.c.h.b16 %v2388
    %v3777 = vunpack.c.l.b16 %v2389
    %v3778 = vunpack.c.h.b16 %v2389
    %v3779 = vunpack.c.l.b16 %v2390
    %v3780 = vunpack.c.h.b16 %v2390
    %v3781 = vunpack.c.l.b16 %v2391
    %v3782 = vunpack.c.h.b16 %v2391
    %v3783 = vunpack.c.l.b16 %v2392
    %v3784 = vunpack.c.h.b16 %v2392
    %v3785 = vunpack.c.l.b16 %v2393
    %v3786 = vunpack.c.h.b16 %v2393
    %v3787 = vunpack.c.l.b16 %v2394
    %v3788 = vunpack.c.h.b16 %v2394
    %v3789 = vunpack.c.l.b16 %v2395
    %v3790 = vunpack.c.h.b16 %v2395
    %v3791 = vunpack.c.l.b16 %v2396
    %v3792 = vunpack.c.h.b16 %v2396
    %v3793 = vunpack.c.l.b16 %v2397
    %v3794 = vunpack.c.h.b16 %v2397
    %v3795 = vunpack.c.l.b16 %v2398
    %v3796 = vunpack.c.h.b16 %v2398
    %v3797 = vunpack.c.l.b16 %v2399
    %v3798 = vunpack.c.h.b16 %v2399
    %v3799 = vunpack.c.l.b16 %v2400
    %v3800 = vunpack.c.h.b16 %v2400
    %v3801 = vunpack.c.l.b16 %v2401
    %v3802 = vunpack.c.h.b16 %v2401
    %v3803 = vunpack.c.l.b16 %v2402
    %v3804 = vunpack.c.h.b16 %v2402
    %v3805 = vunpack.c.l.b16 %v2403
    %v3806 = vunpack.c.h.b16 %v2403
    %v3807 = vunpack.c.l.b16 %v2404
    %v3808 = vunpack.c.h.b16 %v2404
    %v3809 = vunpack.c.l.b16 %v2405
    %v3810 = vunpack.c.h.b16 %v2405
    %v3811 = vunpack.c.l.b16 %v2406
    %v3812 = vunpack.c.h.b16 %v2406
    %v3813 = vunpack.c.l.b16 %v2407
    %v3814 = vunpack.c.h.b16 %v2407
    %v3815 = vunpack.c.l.b16 %v2408
    %v3816 = vunpack.c.h.b16 %v2408
    %v3817 = vunpack.c.l.b16 %v2409
    %v3818 = vunpack.c.h.b16 %v2409
    %v3819 = vunpack.c.l.b16 %v2410
    %v3820 = vunpack.c.h.b16 %v2410
    %v3821 = vunpack.c.l.b16 %v2411
    %v3822 = vunpack.c.h.b16 %v2411
    %v3823 = vunpack.c.l.b16 %v2412
    %v3824 = vunpack.c.h.b16 %v2412
    %v3825 = vunpack.c.l.b16 %v2413
    %v3826 = vunpack.c.h.b16 %v2413
    %v3827 = vunpack.c.l.b16 %v2414
    %v3828 = vunpack.c.h.b16 %v2414
    %v3829 = vunpack.c.l.b16 %v2415
    %v3830 = vunpack.c.h.b16 %v2415
    %v3831 = vunpack.c.l.b16 %v2416
    %v3832 = vunpack.c.h.b16 %v2416
    %v3833 = vunpack.c.l.b16 %v2417
    %v3834 = vunpack.c.h.b16 %v2417
    %v3835 = vunpack.c.l.b16 %v2418
    %v3836 = vunpack.c.h.b16 %v2418
    %v3837 = vunpack.c.l.b16 %v2419
    %v3838 = vunpack.c.h.b16 %v2419
    %v3839 = vunpack.c.l.b16 %v2420
    %v3840 = vunpack.c.h.b16 %v2420
    %v3841 = vunpack.c.l.b16 %v2421
    %v3842 = vunpack.c.h.b16 %v2421
    %v3843 = vunpack.c.l.b16 %v2422
    %v3844 = vunpack.c.h.b16 %v2422
    %v3845 = vunpack.c.l.b16 %v2423
    %v3846 = vunpack.c.h.b16 %v2423
    %v3847 = vunpack.c.l.b16 %v2424
    %v3848 = vunpack.c.h.b16 %v2424
    %v3849 = vunpack.c.l.b16 %v2425
    %v3850 = vunpack.c.h.b16 %v2425
    %v3851 = vunpack.c.l.b16 %v2426
    %v3852 = vunpack.c.h.b16 %v2426
    %v3853 = vunpack.c.l.b16 %v2427
    %v3854 = vunpack.c.h.b16 %v2427
    %v3855 = vunpack.c.l.b16 %v2428
    %v3856 = vunpack.c.h.b16 %v2428
    %v3857 = vunpack.c.l.b16 %v2429
    %v3858 = vunpack.c.h.b16 %v2429
    %v3859 = vunpack.c.l.b16 %v2430
    %v3860 = vunpack.c.h.b16 %v2430
    %v3861 = vunpack.c.l.b16 %v2431
    %v3862 = vunpack.c.h.b16 %v2431
    %v3863 = vunpack.c.l.b16 %v2432
    %v3864 = vunpack.c.h.b16 %v2432
    %v3865 = vunpack.c.l.b16 %v2433
    %v3866 = vunpack.c.h.b16 %v2433
    %v3867 = vunpack.c.l.b16 %v2434
    %v3868 = vunpack.c.h.b16 %v2434
    %v3869 = vunpack.c.l.b16 %v2435
    %v3870 = vunpack.c.h.b16 %v2435
    %v3871 = vunpack.c.l.b16 %v2436
    %v3872 = vunpack.c.h.b16 %v2436
    %v3873 = vunpack.c.l.b16 %v2437
    %v3874 = vunpack.c.h.b16 %v2437
    %v3875 = vunpack.c.l.b16 %v2438
    %v3876 = vunpack.c.h.b16 %v2438
    %v3877 = vunpack.c.l.b16 %v2439
    %v3878 = vunpack.c.h.b16 %v2439
    %v3879 = vunpack.c.l.b16 %v2440
    %v3880 = vunpack.c.h.b16 %v2440
    %v3881 = vunpack.c.l.b16 %v2441
    %v3882 = vunpack.c.h.b16 %v2441
    %v3883 = vunpack.c.l.b16 %v2442
    %v3884 = vunpack.c.h.b16 %v2442
    %v3885 = vunpack.c.l.b16 %v2443
    %v3886 = vunpack.c.h.b16 %v2443
    %v3887 = vunpack.c.l.b16 %v2444
    %v3888 = vunpack.c.h.b16 %v2444
    %v3889 = vunpack.c.l.b16 %v2445
    %v3890 = vunpack.c.h.b16 %v2445
    %v3891 = vunpack.c.l.b16 %v2446
    %v3892 = vunpack.c.h.b16 %v2446
    %v3893 = vunpack.c.l.b16 %v2447
    %v3894 = vunpack.c.h.b16 %v2447
    %v3895 = vunpack.c.l.b16 %v2448
    %v3896 = vunpack.c.h.b16 %v2448
    %v3897 = vunpack.c.l.b16 %v2449
    %v3898 = vunpack.c.h.b16 %v2449
    %v3899 = vunpack.c.l.b16 %v2450
    %v3900 = vunpack.c.h.b16 %v2450
    %v3901 = vunpack.c.l.b16 %v2451
    %v3902 = vunpack.c.h.b16 %v2451
    %v3903 = vunpack.c.l.b16 %v2452
    %v3904 = vunpack.c.h.b16 %v2452
    %v3905 = vunpack.c.l.b16 %v2453
    %v3906 = vunpack.c.h.b16 %v2453
    %v3907 = vunpack.c.l.b16 %v2454
    %v3908 = vunpack.c.h.b16 %v2454
    %v3909 = vunpack.c.l.b16 %v2455
    %v3910 = vunpack.c.h.b16 %v2455
    %v3911 = vunpack.c.l.b16 %v2456
    %v3912 = vunpack.c.h.b16 %v2456
    %v3913 = vunpack.c.l.b16 %v2457
    %v3914 = vunpack.c.h.b16 %v2457
    %v3915 = vunpack.c.l.b16 %v2458
    %v3916 = vunpack.c.h.b16 %v2458
    %v3917 = vunpack.c.l.b16 %v2459
    %v3918 = vunpack.c.h.b16 %v2459
    %v3919 = vunpack.c.l.b16 %v2460
    %v3920 = vunpack.c.h.b16 %v2460
    %v3921 = vunpack.c.l.b16 %v2461
    %v3922 = vunpack.c.h.b16 %v2461
    %v3923 = vunpack.c.l.b16 %v2462
    %v3924 = vunpack.c.h.b16 %v2462
    %v3925 = vunpack.c.l.b16 %v2463
    %v3926 = vunpack.c.h.b16 %v2463
    %v3927 = vunpack.c.l.b16 %v2464
    %v3928 = vunpack.c.h.b16 %v2464
    %v3929 = vunpack.c.l.b16 %v2465
    %v3930 = vunpack.c.h.b16 %v2465
    %v3931 = vunpack.c.l.b16 %v2466
    %v3932 = vunpack.c.h.b16 %v2466
    %v3933 = vunpack.c.l.b16 %v2467
    %v3934 = vunpack.c.h.b16 %v2467
    %v3935 = vunpack.c.l.b16 %v2468
    %v3936 = vunpack.c.h.b16 %v2468
    %v3937 = vunpack.c.l.b16 %v2469
    %v3938 = vunpack.c.h.b16 %v2469
    %v3939 = vunpack.c.l.b16 %v2470
    %v3940 = vunpack.c.h.b16 %v2470
    %v3941 = vunpack.c.l.b16 %v2471
    %v3942 = vunpack.c.h.b16 %v2471
    %v3943 = vunpack.c.l.b16 %v2472
    %v3944 = vunpack.c.h.b16 %v2472
    %v3945 = vunpack.c.l.b16 %v2473
    %v3946 = vunpack.c.h.b16 %v2473
    %v3947 = vunpack.c.l.b16 %v2474
    %v3948 = vunpack.c.h.b16 %v2474
    %v3949 = vunpack.c.l.b16 %v2475
    %v3950 = vunpack.c.h.b16 %v2475
    %v3951 = vunpack.c.l.b16 %v2476
    %v3952 = vunpack.c.h.b16 %v2476
    %v3953 = vunpack.c.l.b16 %v2477
    %v3954 = vunpack.c.h.b16 %v2477
    %v3955 = vunpack.c.l.b16 %v2478
    %v3956 = vunpack.c.h.b16 %v2478
    %v3957 = vunpack.c.l.b16 %v2479
    %v3958 = vunpack.c.h.b16 %v2479
    %v3959 = vunpack.c.l.b16 %v2480
    %v3960 = vunpack.c.h.b16 %v2480
    %v3961 = vunpack.c.l.b16 %v2481
    %v3962 = vunpack.c.h.b16 %v2481
    %v3963 = vunpack.c.l.b16 %v2482
    %v3964 = vunpack.c.h.b16 %v2482
    %v3965 = vunpack.c.l.b16 %v2483
    %v3966 = vunpack.c.h.b16 %v2483
    %v3967 = vunpack.c.l.b16 %v2484
    %v3968 = vunpack.c.h.b16 %v2484
    %v3969 = vunpack.c.l.b16 %v2485
    %v3970 = vunpack.c.h.b16 %v2485
    %v3971 = vunpack.c.l.b16 %v2486
    %v3972 = vunpack.c.h.b16 %v2486
    %v3973 = vunpack.c.l.b16 %v2487
    %v3974 = vunpack.c.h.b16 %v2487
    %v3975 = vunpack.c.l.b16 %v2488
    %v3976 = vunpack.c.h.b16 %v2488
    %v3977 = vunpack.c.l.b16 %v2489
    %v3978 = vunpack.c.h.b16 %v2489
    %v3979 = vunpack.c.l.b16 %v2490
    %v3980 = vunpack.c.h.b16 %v2490
    %v3981 = vunpack.c.l.b16 %v2491
    %v3982 = vunpack.c.h.b16 %v2491
    %v3983 = vunpack.c.l.b16 %v2492
    %v3984 = vunpack.c.h.b16 %v2492
    %v3985 = vunpack.c.l.b16 %v2493
    %v3986 = vunpack.c.h.b16 %v2493
    %v3987 = vunpack.c.l.b16 %v2494
    %v3988 = vunpack.c.h.b16 %v2494
    %v3989 = vunpack.c.l.b16 %v2495
    %v3990 = vunpack.c.h.b16 %v2495
    %v3991 = vunpack.c.l.b16 %v2496
    %v3992 = vunpack.c.h.b16 %v2496
    %v3993 = vunpack.c.l.b16 %v2497
    %v3994 = vunpack.c.h.b16 %v2497
    %v3995 = vunpack.c.l.b16 %v2498
    %v3996 = vunpack.c.h.b16 %v2498
    %v3997 = vunpack.c.l.b16 %v2499
    %v3998 = vunpack.c.h.b16 %v2499
    %v3999 = vunpack.c.l.b16 %v2500
    %v4000 = vunpack.c.h.b16 %v2500
    %v4001 = vunpack.c.l.b16 %v2501
    %v4002 = vunpack.c.h.b16 %v2501
    %v4003 = vunpack.c.l.b16 %v2502
    %v4004 = vunpack.c.h.b16 %v2502
    %v4005 = vunpack.c.l.b16 %v2503
    %v4006 = vunpack.c.h.b16 %v2503
    %v4007 = vunpack.c.l.b16 %v2504
    %v4008 = vunpack.c.h.b16 %v2504
    %v4009 = vunpack.c.l.b16 %v2505
    %v4010 = vunpack.c.h.b16 %v2505
    %v4011 = vunpack.c.l.b16 %v2506
    %v4012 = vunpack.c.h.b16 %v2506
    %v4013 = vunpack.c.l.b16 %v2507
    %v4014 = vunpack.c.h.b16 %v2507
    %v4015 = vunpack.c.l.b16 %v2508
    %v4016 = vunpack.c.h.b16 %v2508
    %v4017 = vunpack.c.l.b16 %v2509
    %v4018 = vunpack.c.h.b16 %v2509
    %v4019 = vunpack.c.l.b16 %v2510
    %v4020 = vunpack.c.h.b16 %v2510
    %v4021 = vunpack.c.l.b16 %v2511
    %v4022 = vunpack.c.h.b16 %v2511
    %v4023 = vunpack.c.l.b16 %v2512
    %v4024 = vunpack.c.h.b16 %v2512
    %v4025 = vunpack.c.l.b16 %v2513
    %v4026 = vunpack.c.h.b16 %v2513
    %v4027 = vunpack.c.l.b16 %v2514
    %v4028 = vunpack.c.h.b16 %v2514
    %v4029 = vunpack.c.l.b16 %v2515
    %v4030 = vunpack.c.h.b16 %v2515
    %v4031 = vunpack.c.l.b16 %v2516
    %v4032 = vunpack.c.h.b16 %v2516
    %v4033 = vunpack.c.l.b16 %v2517
    %v4034 = vunpack.c.h.b16 %v2517
    %v4035 = vunpack.c.l.b16 %v2518
    %v4036 = vunpack.c.h.b16 %v2518
    %v4037 = vunpack.c.l.b16 %v2519
    %v4038 = vunpack.c.h.b16 %v2519
    %v4039 = vunpack.c.l.b16 %v2520
    %v4040 = vunpack.c.h.b16 %v2520
    %v4041 = vunpack.c.l.b16 %v2521
    %v4042 = vunpack.c.h.b16 %v2521
    %v4043 = vunpack.c.l.b16 %v2522
    %v4044 = vunpack.c.h.b16 %v2522
    %v4045 = vunpack.c.l.b16 %v2523
    %v4046 = vunpack.c.h.b16 %v2523
    %v4047 = vunpack.c.l.b16 %v2524
    %v4048 = vunpack.c.h.b16 %v2524
    %v4049 = vunpack.c.l.b16 %v2525
    %v4050 = vunpack.c.h.b16 %v2525
    %v4051 = vunpack.c.l.b16 %v2526
    %v4052 = vunpack.c.h.b16 %v2526
    %v4053 = vunpack.c.l.b16 %v2527
    %v4054 = vunpack.c.h.b16 %v2527
    %v4055 = vunpack.c.l.b16 %v2528
    %v4056 = vunpack.c.h.b16 %v2528
    %v4057 = vunpack.c.l.b16 %v2529
    %v4058 = vunpack.c.h.b16 %v2529
    %v4059 = vunpack.c.l.b16 %v2530
    %v4060 = vunpack.c.h.b16 %v2530
    %v4061 = vunpack.c.l.b16 %v2531
    %v4062 = vunpack.c.h.b16 %v2531
    %v4063 = vunpack.c.l.b16 %v2532
    %v4064 = vunpack.c.h.b16 %v2532
    %v4065 = vunpack.c.l.b16 %v2533
    %v4066 = vunpack.c.h.b16 %v2533
    %v4067 = vunpack.c.l.b16 %v2534
    %v4068 = vunpack.c.h.b16 %v2534
    %v4069 = vunpack.c.l.b16 %v2535
    %v4070 = vunpack.c.h.b16 %v2535
    %v4071 = vunpack.c.l.b16 %v2536
    %v4072 = vunpack.c.h.b16 %v2536
    %v4073 = vunpack.c.l.b16 %v2537
    %v4074 = vunpack.c.h.b16 %v2537
    %v4075 = vunpack.c.l.b16 %v2538
    %v4076 = vunpack.c.h.b16 %v2538
    %v4077 = vunpack.c.l.b16 %v2539
    %v4078 = vunpack.c.h.b16 %v2539
    %v4079 = vunpack.c.l.b16 %v2540
    %v4080 = vunpack.c.h.b16 %v2540
    %v4081 = vunpack.c.l.b16 %v2541
    %v4082 = vunpack.c.h.b16 %v2541
    %v4083 = vunpack.c.l.b16 %v2542
    %v4084 = vunpack.c.h.b16 %v2542
    %v4085 = vunpack.c.l.b16 %v2543
    %v4086 = vunpack.c.h.b16 %v2543
    %v4087 = vunpack.c.l.b16 %v2544
    %v4088 = vunpack.c.h.b16 %v2544
    %v4089 = vunpack.c.l.b16 %v2545
    %v4090 = vunpack.c.h.b16 %v2545
    %v4091 = vunpack.c.l.b16 %v2546
    %v4092 = vunpack.c.h.b16 %v2546
    %v4093 = vunpack.c.l.b16 %v2547
    %v4094 = vunpack.c.h.b16 %v2547
    %v4095 = vunpack.c.l.b16 %v2548
    %v4096 = vunpack.c.h.b16 %v2548
    %v4097 = vunpack.c.l.b16 %v2549
    %v4098 = vunpack.c.h.b16 %v2549
    %v4099 = vunpack.c.l.b16 %v2550
    %v4100 = vunpack.c.h.b16 %v2550
    %v4101 = vunpack.c.l.b16 %v2551
    %v4102 = vunpack.c.h.b16 %v2551
    %v4103 = vunpack.c.l.b16 %v2552
    %v4104 = vunpack.c.h.b16 %v2552
    %v4105 = vunpack.c.l.b16 %v2553
    %v4106 = vunpack.c.h.b16 %v2553
    %v4107 = vunpack.c.l.b16 %v2554
    %v4108 = vunpack.c.h.b16 %v2554
    %v4109 = vunpack.c.l.b16 %v2555
    %v4110 = vunpack.c.h.b16 %v2555
    %v4111 = vunpack.c.l.b16 %v2556
    %v4112 = vunpack.c.h.b16 %v2556
    %v4113 = vunpack.c.l.b16 %v2557
    %v4114 = vunpack.c.h.b16 %v2557
    %v4115 = vunpack.c.l.b16 %v2558
    %v4116 = vunpack.c.h.b16 %v2558
    %v4117 = vunpack.c.l.b16 %v2559
    %v4118 = vunpack.c.h.b16 %v2559
    %v4119 = vunpack.c.l.b16 %v2560
    %v4120 = vunpack.c.h.b16 %v2560
    %v4121 = vunpack.c.l.b16 %v2561
    %v4122 = vunpack.c.h.b16 %v2561
    %v4123 = vunpack.c.l.b16 %v2562
    %v4124 = vunpack.c.h.b16 %v2562
    %v4125 = vunpack.c.l.b16 %v2563
    %v4126 = vunpack.c.h.b16 %v2563
    %v4127 = vunpack.c.l.b16 %v2564
    %v4128 = vunpack.c.h.b16 %v2564
    %v4129 = vunpack.c.l.b16 %v2565
    %v4130 = vunpack.c.h.b16 %v2565
    %v4131 = vunpack.c.l.b16 %v2566
    %v4132 = vunpack.c.h.b16 %v2566
    %v4133 = vunpack.c.l.b16 %v2567
    %v4134 = vunpack.c.h.b16 %v2567
    %v4135 = vunpack.c.l.b16 %v2568
    %v4136 = vunpack.c.h.b16 %v2568
    %v4137 = vunpack.c.l.b16 %v2569
    %v4138 = vunpack.c.h.b16 %v2569
    %v4139 = vunpack.c.l.b16 %v2570
    %v4140 = vunpack.c.h.b16 %v2570
    %v4141 = vunpack.c.l.b16 %v2571
    %v4142 = vunpack.c.h.b16 %v2571
    %v4143 = vunpack.c.l.b16 %v2572
    %v4144 = vunpack.c.h.b16 %v2572
    %v4145 = vunpack.c.l.b16 %v2573
    %v4146 = vunpack.c.h.b16 %v2573
    %v4147 = vunpack.c.l.b16 %v2574
    %v4148 = vunpack.c.h.b16 %v2574
    %v4149 = vunpack.c.l.b16 %v2575
    %v4150 = vunpack.c.h.b16 %v2575
    %v4151 = vunpack.c.l.b16 %v2576
    %v4152 = vunpack.c.h.b16 %v2576
    %v4153 = vunpack.c.l.b16 %v2577
    %v4154 = vunpack.c.h.b16 %v2577
    %v4155 = vunpack.c.l.b16 %v2578
    %v4156 = vunpack.c.h.b16 %v2578
    %v4157 = vpack.c.b16 %v3141, %v3133
    %v4158 = vpack.c.b16 %v3142, %v3134
    %v4159 = vpack.c.b16 %v3143, %v3135
    %v4160 = vpack.c.b16 %v3144, %v3136
    %v4161 = vpack.c.b16 %v3145, %v3137
    %v4162 = vpack.c.b16 %v3146, %v3138
    %v4163 = vpack.c.b16 %v3147, %v3139
    %v4164 = vpack.c.b16 %v3148, %v3140
    %v4165 = vpack.c.b16 %v3157, %v3149
    %v4166 = vpack.c.b16 %v3158, %v3150
    %v4167 = vpack.c.b16 %v3159, %v3151
    %v4168 = vpack.c.b16 %v3160, %v3152
    %v4169 = vpack.c.b16 %v3161, %v3153
    %v4170 = vpack.c.b16 %v3162, %v3154
    %v4171 = vpack.c.b16 %v3163, %v3155
    %v4172 = vpack.c.b16 %v3164, %v3156
    %v4173 = vpack.c.b16 %v3173, %v3165
    %v4174 = vpack.c.b16 %v3174, %v3166
    %v4175 = vpack.c.b16 %v3175, %v3167
    %v4176 = vpack.c.b16 %v3176, %v3168
    %v4177 = vpack.c.b16 %v3177, %v3169
    %v4178 = vpack.c.b16 %v3178, %v3170
    %v4179 = vpack.c.b16 %v3179, %v3171
    %v4180 = vpack.c.b16 %v3180, %v3172
    %v4181 = vpack.c.b16 %v3189, %v3181
    %v4182 = vpack.c.b16 %v3190, %v3182
    %v4183 = vpack.c.b16 %v3191, %v3183
    %v4184 = vpack.c.b16 %v3192, %v3184
    %v4185 = vpack.c.b16 %v3193, %v3185
    %v4186 = vpack.c.b16 %v3194, %v3186
    %v4187 = vpack.c.b16 %v3195, %v3187
    %v4188 = vpack.c.b16 %v3196, %v3188
    %v4189 = vpack.c.b16 %v3205, %v3197
    %v4190 = vpack.c.b16 %v3206, %v3198
    %v4191 = vpack.c.b16 %v3207, %v3199
    %v4192 = vpack.c.b16 %v3208, %v3200
    %v4193 = vpack.c.b16 %v3209, %v3201
    %v4194 = vpack.c.b16 %v3210, %v3202
    %v4195 = vpack.c.b16 %v3211, %v3203
    %v4196 = vpack.c.b16 %v3212, %v3204
    %v4197 = vpack.c.b16 %v3221, %v3213
    %v4198 = vpack.c.b16 %v3222, %v3214
    %v4199 = vpack.c.b16 %v3223, %v3215
    %v4200 = vpack.c.b16 %v3224, %v3216
    %v4201 = vpack.c.b16 %v3225, %v3217
    %v4202 = vpack.c.b16 %v3226, %v3218
    %v4203 = vpack.c.b16 %v3227, %v3219
    %v4204 = vpack.c.b16 %v3228, %v3220
    %v4205 = vpack.c.b16 %v3237, %v3229
    %v4206 = vpack.c.b16 %v3238, %v3230
    %v4207 = vpack.c.b16 %v3239, %v3231
    %v4208 = vpack.c.b16 %v3240, %v3232
    %v4209 = vpack.c.b16 %v3241, %v3233
    %v4210 = vpack.c.b16 %v3242, %v3234
    %v4211 = vpack.c.b16 %v3243, %v3235
    %v4212 = vpack.c.b16 %v3244, %v3236
    %v4213 = vpack.c.b16 %v3253, %v3245
    %v4214 = vpack.c.b16 %v3254, %v3246
    %v4215 = vpack.c.b16 %v3255, %v3247
    %v4216 = vpack.c.b16 %v3256, %v3248
    %v4217 = vpack.c.b16 %v3257, %v3249
    %v4218 = vpack.c.b16 %v3258, %v3250
    %v4219 = vpack.c.b16 %v3259, %v3251
    %v4220 = vpack.c.b16 %v3260, %v3252
    %v4221 = vpack.c.b16 %v3269, %v3261
    %v4222 = vpack.c.b16 %v3270, %v3262
    %v4223 = vpack.c.b16 %v3271, %v3263
    %v4224 = vpack.c.b16 %v3272, %v3264
    %v4225 = vpack.c.b16 %v3273, %v3265
    %v4226 = vpack.c.b16 %v3274, %v3266
    %v4227 = vpack.c.b16 %v3275, %v3267
    %v4228 = vpack.c.b16 %v3276, %v3268
    %v4229 = vpack.c.b16 %v3285, %v3277
    %v4230 = vpack.c.b16 %v3286, %v3278
    %v4231 = vpack.c.b16 %v3287, %v3279
    %v4232 = vpack.c.b16 %v3288, %v3280
    %v4233 = vpack.c.b16 %v3289, %v3281
    %v4234 = vpack.c.b16 %v3290, %v3282
    %v4235 = vpack.c.b16 %v3291, %v3283
    %v4236 = vpack.c.b16 %v3292, %v3284
    %v4237 = vpack.c.b16 %v3301, %v3293
    %v4238 = vpack.c.b16 %v3302, %v3294
    %v4239 = vpack.c.b16 %v3303, %v3295
    %v4240 = vpack.c.b16 %v3304, %v3296
    %v4241 = vpack.c.b16 %v3305, %v3297
    %v4242 = vpack.c.b16 %v3306, %v3298
    %v4243 = vpack.c.b16 %v3307, %v3299
    %v4244 = vpack.c.b16 %v3308, %v3300
    %v4245 = vpack.c.b16 %v3317, %v3309
    %v4246 = vpack.c.b16 %v3318, %v3310
    %v4247 = vpack.c.b16 %v3319, %v3311
    %v4248 = vpack.c.b16 %v3320, %v3312
    %v4249 = vpack.c.b16 %v3321, %v3313
    %v4250 = vpack.c.b16 %v3322, %v3314
    %v4251 = vpack.c.b16 %v3323, %v3315
    %v4252 = vpack.c.b16 %v3324, %v3316
    %v4253 = vpack.c.b16 %v3333, %v3325
    %v4254 = vpack.c.b16 %v3334, %v3326
    %v4255 = vpack.c.b16 %v3335, %v3327
    %v4256 = vpack.c.b16 %v3336, %v3328
    %v4257 = vpack.c.b16 %v3337, %v3329
    %v4258 = vpack.c.b16 %v3338, %v3330
    %v4259 = vpack.c.b16 %v3339, %v3331
    %v4260 = vpack.c.b16 %v3340, %v3332
    %v4261 = vpack.c.b16 %v3349, %v3341
    %v4262 = vpack.c.b16 %v3350, %v3342
    %v4263 = vpack.c.b16 %v3351, %v3343
    %v4264 = vpack.c.b16 %v3352, %v3344
    %v4265 = vpack.c.b16 %v3353, %v3345
    %v4266 = vpack.c.b16 %v3354, %v3346
    %v4267 = vpack.c.b16 %v3355, %v3347
    %v4268 = vpack.c.b16 %v3356, %v3348
    %v4269 = vpack.c.b16 %v3365, %v3357
    %v4270 = vpack.c.b16 %v3366, %v3358
    %v4271 = vpack.c.b16 %v3367, %v3359
    %v4272 = vpack.c.b16 %v3368, %v3360
    %v4273 = vpack.c.b16 %v3369, %v3361
    %v4274 = vpack.c.b16 %v3370, %v3362
    %v4275 = vpack.c.b16 %v3371, %v3363
    %v4276 = vpack.c.b16 %v3372, %v3364
    %v4277 = vpack.c.b16 %v3381, %v3373
    %v4278 = vpack.c.b16 %v3382, %v3374
    %v4279 = vpack.c.b16 %v3383, %v3375
    %v4280 = vpack.c.b16 %v3384, %v3376
    %v4281 = vpack.c.b16 %v3385, %v3377
    %v4282 = vpack.c.b16 %v3386, %v3378
    %v4283 = vpack.c.b16 %v3387, %v3379
    %v4284 = vpack.c.b16 %v3388, %v3380
    %v4285 = vpack.c.b16 %v3397, %v3389
    %v4286 = vpack.c.b16 %v3398, %v3390
    %v4287 = vpack.c.b16 %v3399, %v3391
    %v4288 = vpack.c.b16 %v3400, %v3392
    %v4289 = vpack.c.b16 %v3401, %v3393
    %v4290 = vpack.c.b16 %v3402, %v3394
    %v4291 = vpack.c.b16 %v3403, %v3395
    %v4292 = vpack.c.b16 %v3404, %v3396
    %v4293 = vpack.c.b16 %v3413, %v3405
    %v4294 = vpack.c.b16 %v3414, %v3406
    %v4295 = vpack.c.b16 %v3415, %v3407
    %v4296 = vpack.c.b16 %v3416, %v3408
    %v4297 = vpack.c.b16 %v3417, %v3409
    %v4298 = vpack.c.b16 %v3418, %v3410
    %v4299 = vpack.c.b16 %v3419, %v3411
    %v4300 = vpack.c.b16 %v3420, %v3412
    %v4301 = vpack.c.b16 %v3429, %v3421
    %v4302 = vpack.c.b16 %v3430, %v3422
    %v4303 = vpack.c.b16 %v3431, %v3423
    %v4304 = vpack.c.b16 %v3432, %v3424
    %v4305 = vpack.c.b16 %v3433, %v3425
    %v4306 = vpack.c.b16 %v3434, %v3426
    %v4307 = vpack.c.b16 %v3435, %v3427
    %v4308 = vpack.c.b16 %v3436, %v3428
    %v4309 = vpack.c.b16 %v3445, %v3437
    %v4310 = vpack.c.b16 %v3446, %v3438
    %v4311 = vpack.c.b16 %v3447, %v3439
    %v4312 = vpack.c.b16 %v3448, %v3440
    %v4313 = vpack.c.b16 %v3449, %v3441
    %v4314 = vpack.c.b16 %v3450, %v3442
    %v4315 = vpack.c.b16 %v3451, %v3443
    %v4316 = vpack.c.b16 %v3452, %v3444
    %v4317 = vpack.c.b16 %v3461, %v3453
    %v4318 = vpack.c.b16 %v3462, %v3454
    %v4319 = vpack.c.b16 %v3463, %v3455
    %v4320 = vpack.c.b16 %v3464, %v3456
    %v4321 = vpack.c.b16 %v3465, %v3457
    %v4322 = vpack.c.b16 %v3466, %v3458
    %v4323 = vpack.c.b16 %v3467, %v3459
    %v4324 = vpack.c.b16 %v3468, %v3460
    %v4325 = vpack.c.b16 %v3477, %v3469
    %v4326 = vpack.c.b16 %v3478, %v3470
    %v4327 = vpack.c.b16 %v3479, %v3471
    %v4328 = vpack.c.b16 %v3480, %v3472
    %v4329 = vpack.c.b16 %v3481, %v3473
    %v4330 = vpack.c.b16 %v3482, %v3474
    %v4331 = vpack.c.b16 %v3483, %v3475
    %v4332 = vpack.c.b16 %v3484, %v3476
    %v4333 = vpack.c.b16 %v3493, %v3485
    %v4334 = vpack.c.b16 %v3494, %v3486
    %v4335 = vpack.c.b16 %v3495, %v3487
    %v4336 = vpack.c.b16 %v3496, %v3488
    %v4337 = vpack.c.b16 %v3497, %v3489
    %v4338 = vpack.c.b16 %v3498, %v3490
    %v4339 = vpack.c.b16 %v3499, %v3491
    %v4340 = vpack.c.b16 %v3500, %v3492
    %v4341 = vpack.c.b16 %v3509, %v3501
    %v4342 = vpack.c.b16 %v3510, %v3502
    %v4343 = vpack.c.b16 %v3511, %v3503
    %v4344 = vpack.c.b16 %v3512, %v3504
    %v4345 = vpack.c.b16 %v3513, %v3505
    %v4346 = vpack.c.b16 %v3514, %v3506
    %v4347 = vpack.c.b16 %v3515, %v3507
    %v4348 = vpack.c.b16 %v3516, %v3508
    %v4349 = vpack.c.b16 %v3525, %v3517
    %v4350 = vpack.c.b16 %v3526, %v3518
    %v4351 = vpack.c.b16 %v3527, %v3519
    %v4352 = vpack.c.b16 %v3528, %v3520
    %v4353 = vpack.c.b16 %v3529, %v3521
    %v4354 = vpack.c.b16 %v3530, %v3522
    %v4355 = vpack.c.b16 %v3531, %v3523
    %v4356 = vpack.c.b16 %v3532, %v3524
    %v4357 = vpack.c.b16 %v3541, %v3533
    %v4358 = vpack.c.b16 %v3542, %v3534
    %v4359 = vpack.c.b16 %v3543, %v3535
    %v4360 = vpack.c.b16 %v3544, %v3536
    %v4361 = vpack.c.b16 %v3545, %v3537
    %v4362 = vpack.c.b16 %v3546, %v3538
    %v4363 = vpack.c.b16 %v3547, %v3539
    %v4364 = vpack.c.b16 %v3548, %v3540
    %v4365 = vpack.c.b16 %v3557, %v3549
    %v4366 = vpack.c.b16 %v3558, %v3550
    %v4367 = vpack.c.b16 %v3559, %v3551
    %v4368 = vpack.c.b16 %v3560, %v3552
    %v4369 = vpack.c.b16 %v3561, %v3553
    %v4370 = vpack.c.b16 %v3562, %v3554
    %v4371 = vpack.c.b16 %v3563, %v3555
    %v4372 = vpack.c.b16 %v3564, %v3556
    %v4373 = vpack.c.b16 %v3573, %v3565
    %v4374 = vpack.c.b16 %v3574, %v3566
    %v4375 = vpack.c.b16 %v3575, %v3567
    %v4376 = vpack.c.b16 %v3576, %v3568
    %v4377 = vpack.c.b16 %v3577, %v3569
    %v4378 = vpack.c.b16 %v3578, %v3570
    %v4379 = vpack.c.b16 %v3579, %v3571
    %v4380 = vpack.c.b16 %v3580, %v3572
    %v4381 = vpack.c.b16 %v3589, %v3581
    %v4382 = vpack.c.b16 %v3590, %v3582
    %v4383 = vpack.c.b16 %v3591, %v3583
    %v4384 = vpack.c.b16 %v3592, %v3584
    %v4385 = vpack.c.b16 %v3593, %v3585
    %v4386 = vpack.c.b16 %v3594, %v3586
    %v4387 = vpack.c.b16 %v3595, %v3587
    %v4388 = vpack.c.b16 %v3596, %v3588
    %v4389 = vpack.c.b16 %v3605, %v3597
    %v4390 = vpack.c.b16 %v3606, %v3598
    %v4391 = vpack.c.b16 %v3607, %v3599
    %v4392 = vpack.c.b16 %v3608, %v3600
    %v4393 = vpack.c.b16 %v3609, %v3601
    %v4394 = vpack.c.b16 %v3610, %v3602
    %v4395 = vpack.c.b16 %v3611, %v3603
    %v4396 = vpack.c.b16 %v3612, %v3604
    %v4397 = vpack.c.b16 %v3621, %v3613
    %v4398 = vpack.c.b16 %v3622, %v3614
    %v4399 = vpack.c.b16 %v3623, %v3615
    %v4400 = vpack.c.b16 %v3624, %v3616
    %v4401 = vpack.c.b16 %v3625, %v3617
    %v4402 = vpack.c.b16 %v3626, %v3618
    %v4403 = vpack.c.b16 %v3627, %v3619
    %v4404 = vpack.c.b16 %v3628, %v3620
    %v4405 = vpack.c.b16 %v3637, %v3629
    %v4406 = vpack.c.b16 %v3638, %v3630
    %v4407 = vpack.c.b16 %v3639, %v3631
    %v4408 = vpack.c.b16 %v3640, %v3632
    %v4409 = vpack.c.b16 %v3641, %v3633
    %v4410 = vpack.c.b16 %v3642, %v3634
    %v4411 = vpack.c.b16 %v3643, %v3635
    %v4412 = vpack.c.b16 %v3644, %v3636
    %v4413 = vpack.c.b16 %v3653, %v3645
    %v4414 = vpack.c.b16 %v3654, %v3646
    %v4415 = vpack.c.b16 %v3655, %v3647
    %v4416 = vpack.c.b16 %v3656, %v3648
    %v4417 = vpack.c.b16 %v3657, %v3649
    %v4418 = vpack.c.b16 %v3658, %v3650
    %v4419 = vpack.c.b16 %v3659, %v3651
    %v4420 = vpack.c.b16 %v3660, %v3652
    %v4421 = vpack.c.b16 %v3669, %v3661
    %v4422 = vpack.c.b16 %v3670, %v3662
    %v4423 = vpack.c.b16 %v3671, %v3663
    %v4424 = vpack.c.b16 %v3672, %v3664
    %v4425 = vpack.c.b16 %v3673, %v3665
    %v4426 = vpack.c.b16 %v3674, %v3666
    %v4427 = vpack.c.b16 %v3675, %v3667
    %v4428 = vpack.c.b16 %v3676, %v3668
    %v4429 = vpack.c.b16 %v3685, %v3677
    %v4430 = vpack.c.b16 %v3686, %v3678
    %v4431 = vpack.c.b16 %v3687, %v3679
    %v4432 = vpack.c.b16 %v3688, %v3680
    %v4433 = vpack.c.b16 %v3689, %v3681
    %v4434 = vpack.c.b16 %v3690, %v3682
    %v4435 = vpack.c.b16 %v3691, %v3683
    %v4436 = vpack.c.b16 %v3692, %v3684
    %v4437 = vpack.c.b16 %v3701, %v3693
    %v4438 = vpack.c.b16 %v3702, %v3694
    %v4439 = vpack.c.b16 %v3703, %v3695
    %v4440 = vpack.c.b16 %v3704, %v3696
    %v4441 = vpack.c.b16 %v3705, %v3697
    %v4442 = vpack.c.b16 %v3706, %v3698
    %v4443 = vpack.c.b16 %v3707, %v3699
    %v4444 = vpack.c.b16 %v3708, %v3700
    %v4445 = vpack.c.b16 %v3717, %v3709
    %v4446 = vpack.c.b16 %v3718, %v3710
    %v4447 = vpack.c.b16 %v3719, %v3711
    %v4448 = vpack.c.b16 %v3720, %v3712
    %v4449 = vpack.c.b16 %v3721, %v3713
    %v4450 = vpack.c.b16 %v3722, %v3714
    %v4451 = vpack.c.b16 %v3723, %v3715
    %v4452 = vpack.c.b16 %v3724, %v3716
    %v4453 = vpack.c.b16 %v3733, %v3725
    %v4454 = vpack.c.b16 %v3734, %v3726
    %v4455 = vpack.c.b16 %v3735, %v3727
    %v4456 = vpack.c.b16 %v3736, %v3728
    %v4457 = vpack.c.b16 %v3737, %v3729
    %v4458 = vpack.c.b16 %v3738, %v3730
    %v4459 = vpack.c.b16 %v3739, %v3731
    %v4460 = vpack.c.b16 %v3740, %v3732
    %v4461 = vpack.c.b16 %v3749, %v3741
    %v4462 = vpack.c.b16 %v3750, %v3742
    %v4463 = vpack.c.b16 %v3751, %v3743
    %v4464 = vpack.c.b16 %v3752, %v3744
    %v4465 = vpack.c.b16 %v3753, %v3745
    %v4466 = vpack.c.b16 %v3754, %v3746
    %v4467 = vpack.c.b16 %v3755, %v3747
    %v4468 = vpack.c.b16 %v3756, %v3748
    %v4469 = vpack.c.b16 %v3765, %v3757
    %v4470 = vpack.c.b16 %v3766, %v3758
    %v4471 = vpack.c.b16 %v3767, %v3759
    %v4472 = vpack.c.b16 %v3768, %v3760
    %v4473 = vpack.c.b16 %v3769, %v3761
    %v4474 = vpack.c.b16 %v3770, %v3762
    %v4475 = vpack.c.b16 %v3771, %v3763
    %v4476 = vpack.c.b16 %v3772, %v3764
    %v4477 = vpack.c.b16 %v3781, %v3773
    %v4478 = vpack.c.b16 %v3782, %v3774
    %v4479 = vpack.c.b16 %v3783, %v3775
    %v4480 = vpack.c.b16 %v3784, %v3776
    %v4481 = vpack.c.b16 %v3785, %v3777
    %v4482 = vpack.c.b16 %v3786, %v3778
    %v4483 = vpack.c.b16 %v3787, %v3779
    %v4484 = vpack.c.b16 %v3788, %v3780
    %v4485 = vpack.c.b16 %v3797, %v3789
    %v4486 = vpack.c.b16 %v3798, %v3790
    %v4487 = vpack.c.b16 %v3799, %v3791
    %v4488 = vpack.c.b16 %v3800, %v3792
    %v4489 = vpack.c.b16 %v3801, %v3793
    %v4490 = vpack.c.b16 %v3802, %v3794
    %v4491 = vpack.c.b16 %v3803, %v3795
    %v4492 = vpack.c.b16 %v3804, %v3796
    %v4493 = vpack.c.b16 %v3813, %v3805
    %v4494 = vpack.c.b16 %v3814, %v3806
    %v4495 = vpack.c.b16 %v3815, %v3807
    %v4496 = vpack.c.b16 %v3816, %v3808
    %v4497 = vpack.c.b16 %v3817, %v3809
    %v4498 = vpack.c.b16 %v3818, %v3810
    %v4499 = vpack.c.b16 %v3819, %v3811
    %v4500 = vpack.c.b16 %v3820, %v3812
    %v4501 = vpack.c.b16 %v3829, %v3821
    %v4502 = vpack.c.b16 %v3830, %v3822
    %v4503 = vpack.c.b16 %v3831, %v3823
    %v4504 = vpack.c.b16 %v3832, %v3824
    %v4505 = vpack.c.b16 %v3833, %v3825
    %v4506 = vpack.c.b16 %v3834, %v3826
    %v4507 = vpack.c.b16 %v3835, %v3827
    %v4508 = vpack.c.b16 %v3836, %v3828
    %v4509 = vpack.c.b16 %v3845, %v3837
    %v4510 = vpack.c.b16 %v3846, %v3838
    %v4511 = vpack.c.b16 %v3847, %v3839
    %v4512 = vpack.c.b16 %v3848, %v3840
    %v4513 = vpack.c.b16 %v3849, %v3841
    %v4514 = vpack.c.b16 %v3850, %v3842
    %v4515 = vpack.c.b16 %v3851, %v3843
    %v4516 = vpack.c.b16 %v3852, %v3844
    %v4517 = vpack.c.b16 %v3861, %v3853
    %v4518 = vpack.c.b16 %v3862, %v3854
    %v4519 = vpack.c.b16 %v3863, %v3855
    %v4520 = vpack.c.b16 %v3864, %v3856
    %v4521 = vpack.c.b16 %v3865, %v3857
    %v4522 = vpack.c.b16 %v3866, %v3858
    %v4523 = vpack.c.b16 %v3867, %v3859
    %v4524 = vpack.c.b16 %v3868, %v3860
    %v4525 = vpack.c.b16 %v3877, %v3869
    %v4526 = vpack.c.b16 %v3878, %v3870
    %v4527 = vpack.c.b16 %v3879, %v3871
    %v4528 = vpack.c.b16 %v3880, %v3872
    %v4529 = vpack.c.b16 %v3881, %v3873
    %v4530 = vpack.c.b16 %v3882, %v3874
    %v4531 = vpack.c.b16 %v3883, %v3875
    %v4532 = vpack.c.b16 %v3884, %v3876
    %v4533 = vpack.c.b16 %v3893, %v3885
    %v4534 = vpack.c.b16 %v3894, %v3886
    %v4535 = vpack.c.b16 %v3895, %v3887
    %v4536 = vpack.c.b16 %v3896, %v3888
    %v4537 = vpack.c.b16 %v3897, %v3889
    %v4538 = vpack.c.b16 %v3898, %v3890
    %v4539 = vpack.c.b16 %v3899, %v3891
    %v4540 = vpack.c.b16 %v3900, %v3892
    %v4541 = vpack.c.b16 %v3909, %v3901
    %v4542 = vpack.c.b16 %v3910, %v3902
    %v4543 = vpack.c.b16 %v3911, %v3903
    %v4544 = vpack.c.b16 %v3912, %v3904
    %v4545 = vpack.c.b16 %v3913, %v3905
    %v4546 = vpack.c.b16 %v3914, %v3906
    %v4547 = vpack.c.b16 %v3915, %v3907
    %v4548 = vpack.c.b16 %v3916, %v3908
    %v4549 = vpack.c.b16 %v3925, %v3917
    %v4550 = vpack.c.b16 %v3926, %v3918
    %v4551 = vpack.c.b16 %v3927, %v3919
    %v4552 = vpack.c.b16 %v3928, %v3920
    %v4553 = vpack.c.b16 %v3929, %v3921
    %v4554 = vpack.c.b16 %v3930, %v3922
    %v4555 = vpack.c.b16 %v3931, %v3923
    %v4556 = vpack.c.b16 %v3932, %v3924
    %v4557 = vpack.c.b16 %v3941, %v3933
    %v4558 = vpack.c.b16 %v3942, %v3934
    %v4559 = vpack.c.b16 %v3943, %v3935
    %v4560 = vpack.c.b16 %v3944, %v3936
    %v4561 = vpack.c.b16 %v3945, %v3937
    %v4562 = vpack.c.b16 %v3946, %v3938
    %v4563 = vpack.c.b16 %v3947, %v3939
    %v4564 = vpack.c.b16 %v3948, %v3940
    %v4565 = vpack.c.b16 %v3957, %v3949
    %v4566 = vpack.c.b16 %v3958, %v3950
    %v4567 = vpack.c.b16 %v3959, %v3951
    %v4568 = vpack.c.b16 %v3960, %v3952
    %v4569 = vpack.c.b16 %v3961, %v3953
    %v4570 = vpack.c.b16 %v3962, %v3954
    %v4571 = vpack.c.b16 %v3963, %v3955
    %v4572 = vpack.c.b16 %v3964, %v3956
    %v4573 = vpack.c.b16 %v3973, %v3965
    %v4574 = vpack.c.b16 %v3974, %v3966
    %v4575 = vpack.c.b16 %v3975, %v3967
    %v4576 = vpack.c.b16 %v3976, %v3968
    %v4577 = vpack.c.b16 %v3977, %v3969
    %v4578 = vpack.c.b16 %v3978, %v3970
    %v4579 = vpack.c.b16 %v3979, %v3971
    %v4580 = vpack.c.b16 %v3980, %v3972
    %v4581 = vpack.c.b16 %v3989, %v3981
    %v4582 = vpack.c.b16 %v3990, %v3982
    %v4583 = vpack.c.b16 %v3991, %v3983
    %v4584 = vpack.c.b16 %v3992, %v3984
    %v4585 = vpack.c.b16 %v3993, %v3985
    %v4586 = vpack.c.b16 %v3994, %v3986
    %v4587 = vpack.c.b16 %v3995, %v3987
    %v4588 = vpack.c.b16 %v3996, %v3988
    %v4589 = vpack.c.b16 %v4005, %v3997
    %v4590 = vpack.c.b16 %v4006, %v3998
    %v4591 = vpack.c.b16 %v4007, %v3999
    %v4592 = vpack.c.b16 %v4008, %v4000
    %v4593 = vpack.c.b16 %v4009, %v4001
    %v4594 = vpack.c.b16 %v4010, %v4002
    %v4595 = vpack.c.b16 %v4011, %v4003
    %v4596 = vpack.c.b16 %v4012, %v4004
    %v4597 = vpack.c.b16 %v4021, %v4013
    %v4598 = vpack.c.b16 %v4022, %v4014
    %v4599 = vpack.c.b16 %v4023, %v4015
    %v4600 = vpack.c.b16 %v4024, %v4016
    %v4601 = vpack.c.b16 %v4025, %v4017
    %v4602 = vpack.c.b16 %v4026, %v4018
    %v4603 = vpack.c.b16 %v4027, %v4019
    %v4604 = vpack.c.b16 %v4028, %v4020
    %v4605 = vpack.c.b16 %v4037, %v4029
    %v4606 = vpack.c.b16 %v4038, %v4030
    %v4607 = vpack.c.b16 %v4039, %v4031
    %v4608 = vpack.c.b16 %v4040, %v4032
    %v4609 = vpack.c.b16 %v4041, %v4033
    %v4610 = vpack.c.b16 %v4042, %v4034
    %v4611 = vpack.c.b16 %v4043, %v4035
    %v4612 = vpack.c.b16 %v4044, %v4036
    %v4613 = vpack.c.b16 %v4053, %v4045
    %v4614 = vpack.c.b16 %v4054, %v4046
    %v4615 = vpack.c.b16 %v4055, %v4047
    %v4616 = vpack.c.b16 %v4056, %v4048
    %v4617 = vpack.c.b16 %v4057, %v4049
    %v4618 = vpack.c.b16 %v4058, %v4050
    %v4619 = vpack.c.b16 %v4059, %v4051
    %v4620 = vpack.c.b16 %v4060, %v4052
    %v4621 = vpack.c.b16 %v4069, %v4061
    %v4622 = vpack.c.b16 %v4070, %v4062
    %v4623 = vpack.c.b16 %v4071, %v4063
    %v4624 = vpack.c.b16 %v4072, %v4064
    %v4625 = vpack.c.b16 %v4073, %v4065
    %v4626 = vpack.c.b16 %v4074, %v4066
    %v4627 = vpack.c.b16 %v4075, %v4067
    %v4628 = vpack.c.b16 %v4076, %v4068
    %v4629 = vpack.c.b16 %v4085, %v4077
    %v4630 = vpack.c.b16 %v4086, %v4078
    %v4631 = vpack.c.b16 %v4087, %v4079
    %v4632 = vpack.c.b16 %v4088, %v4080
    %v4633 = vpack.c.b16 %v4089, %v4081
    %v4634 = vpack.c.b16 %v4090, %v4082
    %v4635 = vpack.c.b16 %v4091, %v4083
    %v4636 = vpack.c.b16 %v4092, %v4084
    %v4637 = vpack.c.b16 %v4101, %v4093
    %v4638 = vpack.c.b16 %v4102, %v4094
    %v4639 = vpack.c.b16 %v4103, %v4095
    %v4640 = vpack.c.b16 %v4104, %v4096
    %v4641 = vpack.c.b16 %v4105, %v4097
    %v4642 = vpack.c.b16 %v4106, %v4098
    %v4643 = vpack.c.b16 %v4107, %v4099
    %v4644 = vpack.c.b16 %v4108, %v4100
    %v4645 = vpack.c.b16 %v4117, %v4109
    %v4646 = vpack.c.b16 %v4118, %v4110
    %v4647 = vpack.c.b16 %v4119, %v4111
    %v4648 = vpack.c.b16 %v4120, %v4112
    %v4649 = vpack.c.b16 %v4121, %v4113
    %v4650 = vpack.c.b16 %v4122, %v4114
    %v4651 = vpack.c.b16 %v4123, %v4115
    %v4652 = vpack.c.b16 %v4124, %v4116
    %v4653 = vpack.c.b16 %v4133, %v4125
    %v4654 = vpack.c.b16 %v4134, %v4126
    %v4655 = vpack.c.b16 %v4135, %v4127
    %v4656 = vpack.c.b16 %v4136, %v4128
    %v4657 = vpack.c.b16 %v4137, %v4129
    %v4658 = vpack.c.b16 %v4138, %v4130
    %v4659 = vpack.c.b16 %v4139, %v4131
    %v4660 = vpack.c.b16 %v4140, %v4132
    %v4661 = vpack.c.b16 %v4149, %v4141
    %v4662 = vpack.c.b16 %v4150, %v4142
    %v4663 = vpack.c.b16 %v4151, %v4143
    %v4664 = vpack.c.b16 %v4152, %v4144
    %v4665 = vpack.c.b16 %v4153, %v4145
    %v4666 = vpack.c.b16 %v4154, %v4146
    %v4667 = vpack.c.b16 %v4155, %v4147
    %v4668 = vpack.c.b16 %v4156, %v4148
    %5181 = vmatprep.subr.bf16.mxu0 %v4158
    %5182 = vmatpush1.bf16.msra.mxu0 %v4157
    %5183 = vmatprep.subr.bf16.mxu0 %v4166
    %5184 = vmatpush1.bf16.msra.mxu0 %v4165
    %5185 = vmatprep.subr.bf16.mxu0 %v4174
    %5186 = vmatpush1.bf16.msra.mxu0 %v4173
    %5187 = vmatprep.subr.bf16.mxu0 %v4182
    %5188 = vmatpush1.bf16.msra.mxu0 %v4181
    %5189 = vmatprep.subr.bf16.mxu0 %v4190
    %5190 = vmatpush1.bf16.msra.mxu0 %v4189
    %5191 = vmatprep.subr.bf16.mxu0 %v4198
    %5192 = vmatpush1.bf16.msra.mxu0 %v4197
    %5193 = vmatprep.subr.bf16.mxu0 %v4206
    %5194 = vmatpush1.bf16.msra.mxu0 %v4205
    %5195 = vmatprep.subr.bf16.mxu0 %v4214
    %5196 = vmatpush1.bf16.msra.mxu0 %v4213
    %5197 = vmatprep.subr.bf16.mxu0 %v4222
    %5198 = vmatpush1.bf16.msra.mxu0 %v4221
    %5199 = vmatprep.subr.bf16.mxu0 %v4230
    %5200 = vmatpush1.bf16.msra.mxu0 %v4229
    %5201 = vmatprep.subr.bf16.mxu0 %v4238
    %5202 = vmatpush1.bf16.msra.mxu0 %v4237
    %5203 = vmatprep.subr.bf16.mxu0 %v4246
    %5204 = vmatpush1.bf16.msra.mxu0 %v4245
    %5205 = vmatprep.subr.bf16.mxu0 %v4254
    %5206 = vmatpush1.bf16.msra.mxu0 %v4253
    %5207 = vmatprep.subr.bf16.mxu0 %v4262
    %5208 = vmatpush1.bf16.msra.mxu0 %v4261
    %5209 = vmatprep.subr.bf16.mxu0 %v4270
    %5210 = vmatpush1.bf16.msra.mxu0 %v4269
    %5211 = vmatprep.subr.bf16.mxu0 %v4278
    %5212 = vmatpush1.bf16.msra.mxu0 %v4277
    %5213 = vmatprep.mubr.bf16.mxu0 %v2060
    %5214 = vmatmul.mubr.bf16.gmra.mrb[0].mxu0 %v2059
    %v5215 = vpop.f32.mrb[0].mxu0
    %v5216 = vadd.f32 %v2584, %v5215
    %v5217 = vpop.f32.mrb[0].mxu0
    %v5218 = vadd.f32 %v2588, %v5217
    %v5219 = vpop.f32.mrb[0].mxu0
    %v5220 = vpop.f32.mrb[0].mxu0
    %5221 = vdwg.mxu0
    %5222 = vmatprep.subr.bf16.mxu0 %v4286
    %5223 = vmatpush1.bf16.msra.mxu0 %v4285
    %5224 = vmatprep.subr.bf16.mxu0 %v4294
    %5225 = vmatpush1.bf16.msra.mxu0 %v4293
    %5226 = vmatprep.subr.bf16.mxu0 %v4302
    %5227 = vmatpush1.bf16.msra.mxu0 %v4301
    %5228 = vmatprep.subr.bf16.mxu0 %v4310
    %5229 = vmatpush1.bf16.msra.mxu0 %v4309
    %5230 = vmatprep.subr.bf16.mxu0 %v4318
    %5231 = vmatpush1.bf16.msra.mxu0 %v4317
    %5232 = vmatprep.subr.bf16.mxu0 %v4326
    %5233 = vmatpush1.bf16.msra.mxu0 %v4325
    %5234 = vmatprep.subr.bf16.mxu0 %v4334
    %5235 = vmatpush1.bf16.msra.mxu0 %v4333
    %5236 = vmatprep.subr.bf16.mxu0 %v4342
    %5237 = vmatpush1.bf16.msra.mxu0 %v4341
    %5238 = vmatprep.subr.bf16.mxu0 %v4350
    %5239 = vmatpush1.bf16.msra.mxu0 %v4349
    %5240 = vmatprep.subr.bf16.mxu0 %v4358
    %5241 = vmatpush1.bf16.msra.mxu0 %v4357
    %5242 = vmatprep.subr.bf16.mxu0 %v4366
    %5243 = vmatpush1.bf16.msra.mxu0 %v4365
    %5244 = vmatprep.subr.bf16.mxu0 %v4374
    %5245 = vmatpush1.bf16.msra.mxu0 %v4373
    %5246 = vmatprep.subr.bf16.mxu0 %v4382
    %5247 = vmatpush1.bf16.msra.mxu0 %v4381
    %5248 = vmatprep.subr.bf16.mxu0 %v4390
    %5249 = vmatpush1.bf16.msra.mxu0 %v4389
    %5250 = vmatprep.subr.bf16.mxu0 %v4398
    %5251 = vmatpush1.bf16.msra.mxu0 %v4397
    %5252 = vmatprep.subr.bf16.mxu0 %v4406
    %5253 = vmatpush1.bf16.msra.mxu0 %v4405
    %5254 = vmatprep.mubr.bf16.mxu0 %v2062
    %5255 = vmatmul.mubr.bf16.gmra.mrb[0].mxu0 %v2061
    %v5256 = vpop.f32.mrb[0].mxu0
    %v5257 = vadd.f32 %v5216, %v5256
    %v5258 = vpop.f32.mrb[0].mxu0
    %v5259 = vadd.f32 %v5218, %v5258
    %v5260 = vpop.f32.mrb[0].mxu0
    %v5261 = vpop.f32.mrb[0].mxu0
    %5262 = vdwg.mxu0
    %5263 = vmatprep.subr.bf16.mxu0 %v4414
    %5264 = vmatpush1.bf16.msra.mxu0 %v4413
    %5265 = vmatprep.subr.bf16.mxu0 %v4422
    %5266 = vmatpush1.bf16.msra.mxu0 %v4421
    %5267 = vmatprep.subr.bf16.mxu0 %v4430
    %5268 = vmatpush1.bf16.msra.mxu0 %v4429
    %5269 = vmatprep.subr.bf16.mxu0 %v4438
    %5270 = vmatpush1.bf16.msra.mxu0 %v4437
    %5271 = vmatprep.subr.bf16.mxu0 %v4446
    %5272 = vmatpush1.bf16.msra.mxu0 %v4445
    %5273 = vmatprep.subr.bf16.mxu0 %v4454
    %5274 = vmatpush1.bf16.msra.mxu0 %v4453
    %5275 = vmatprep.subr.bf16.mxu0 %v4462
    %5276 = vmatpush1.bf16.msra.mxu0 %v4461
    %5277 = vmatprep.subr.bf16.mxu0 %v4470
    %5278 = vmatpush1.bf16.msra.mxu0 %v4469
    %5279 = vmatprep.subr.bf16.mxu0 %v4478
    %5280 = vmatpush1.bf16.msra.mxu0 %v4477
    %5281 = vmatprep.subr.bf16.mxu0 %v4486
    %5282 = vmatpush1.bf16.msra.mxu0 %v4485
    %5283 = vmatprep.subr.bf16.mxu0 %v4494
    %5284 = vmatpush1.bf16.msra.mxu0 %v4493
    %5285 = vmatprep.subr.bf16.mxu0 %v4502
    %5286 = vmatpush1.bf16.msra.mxu0 %v4501
    %5287 = vmatprep.subr.bf16.mxu0 %v4510
    %5288 = vmatpush1.bf16.msra.mxu0 %v4509
    %5289 = vmatprep.subr.bf16.mxu0 %v4518
    %5290 = vmatpush1.bf16.msra.mxu0 %v4517
    %5291 = vmatprep.subr.bf16.mxu0 %v4526
    %5292 = vmatpush1.bf16.msra.mxu0 %v4525
    %5293 = vmatprep.subr.bf16.mxu0 %v4534
    %5294 = vmatpush1.bf16.msra.mxu0 %v4533
    %5295 = vmatprep.mubr.bf16.mxu0 %v2064
    %5296 = vmatmul.mubr.bf16.gmra.mrb[0].mxu0 %v2063
    %v5297 = vpop.f32.mrb[0].mxu0
    %v5298 = vadd.f32 %v5257, %v5297
    %v5299 = vpop.f32.mrb[0].mxu0
    %v5300 = vadd.f32 %v5259, %v5299
    %v5301 = vpop.f32.mrb[0].mxu0
    %v5302 = vpop.f32.mrb[0].mxu0
    %5303 = vdwg.mxu0
    %5304 = vmatprep.subr.bf16.mxu0 %v4542
    %5305 = vmatpush1.bf16.msra.mxu0 %v4541
    %5306 = vmatprep.subr.bf16.mxu0 %v4550
    %5307 = vmatpush1.bf16.msra.mxu0 %v4549
    %5308 = vmatprep.subr.bf16.mxu0 %v4558
    %5309 = vmatpush1.bf16.msra.mxu0 %v4557
    %5310 = vmatprep.subr.bf16.mxu0 %v4566
    %5311 = vmatpush1.bf16.msra.mxu0 %v4565
    %5312 = vmatprep.subr.bf16.mxu0 %v4574
    %5313 = vmatpush1.bf16.msra.mxu0 %v4573
    %5314 = vmatprep.subr.bf16.mxu0 %v4582
    %5315 = vmatpush1.bf16.msra.mxu0 %v4581
    %5316 = vmatprep.subr.bf16.mxu0 %v4590
    %5317 = vmatpush1.bf16.msra.mxu0 %v4589
    %5318 = vmatprep.subr.bf16.mxu0 %v4598
    %5319 = vmatpush1.bf16.msra.mxu0 %v4597
    %5320 = vmatprep.subr.bf16.mxu0 %v4606
    %5321 = vmatpush1.bf16.msra.mxu0 %v4605
    %5322 = vmatprep.subr.bf16.mxu0 %v4614
    %5323 = vmatpush1.bf16.msra.mxu0 %v4613
    %5324 = vmatprep.subr.bf16.mxu0 %v4622
    %5325 = vmatpush1.bf16.msra.mxu0 %v4621
    %5326 = vmatprep.subr.bf16.mxu0 %v4630
    %5327 = vmatpush1.bf16.msra.mxu0 %v4629
    %5328 = vmatprep.subr.bf16.mxu0 %v4638
    %5329 = vmatpush1.bf16.msra.mxu0 %v4637
    %5330 = vmatprep.subr.bf16.mxu0 %v4646
    %5331 = vmatpush1.bf16.msra.mxu0 %v4645
    %5332 = vmatprep.subr.bf16.mxu0 %v4654
    %5333 = vmatpush1.bf16.msra.mxu0 %v4653
    %5334 = vmatprep.subr.bf16.mxu0 %v4662
    %5335 = vmatpush1.bf16.msra.mxu0 %v4661
    %5336 = vmatprep.mubr.bf16.mxu0 %v2066
    %5337 = vmatmul.mubr.bf16.gmra.mrb[0].mxu0 %v2065
    %v5338 = vpop.f32.mrb[0].mxu0
    %v5339 = vadd.f32 %v5298, %v5338
    %v5340 = vpop.f32.mrb[0].mxu0
    %v5341 = vadd.f32 %v5300, %v5340
    %v5342 = vpop.f32.mrb[0].mxu0
    %v5343 = vpop.f32.mrb[0].mxu0
    %5344 = vdwg.mxu0
    %5345 = vmatprep.subr.bf16.mxu0 %v4160
    %5346 = vmatpush1.bf16.msra.mxu0 %v4159
    %5347 = vmatprep.subr.bf16.mxu0 %v4168
    %5348 = vmatpush1.bf16.msra.mxu0 %v4167
    %5349 = vmatprep.subr.bf16.mxu0 %v4176
    %5350 = vmatpush1.bf16.msra.mxu0 %v4175
    %5351 = vmatprep.subr.bf16.mxu0 %v4184
    %5352 = vmatpush1.bf16.msra.mxu0 %v4183
    %5353 = vmatprep.subr.bf16.mxu0 %v4192
    %5354 = vmatpush1.bf16.msra.mxu0 %v4191
    %5355 = vmatprep.subr.bf16.mxu0 %v4200
    %5356 = vmatpush1.bf16.msra.mxu0 %v4199
    %5357 = vmatprep.subr.bf16.mxu0 %v4208
    %5358 = vmatpush1.bf16.msra.mxu0 %v4207
    %5359 = vmatprep.subr.bf16.mxu0 %v4216
    %5360 = vmatpush1.bf16.msra.mxu0 %v4215
    %5361 = vmatprep.subr.bf16.mxu0 %v4224
    %5362 = vmatpush1.bf16.msra.mxu0 %v4223
    %5363 = vmatprep.subr.bf16.mxu0 %v4232
    %5364 = vmatpush1.bf16.msra.mxu0 %v4231
    %5365 = vmatprep.subr.bf16.mxu0 %v4240
    %5366 = vmatpush1.bf16.msra.mxu0 %v4239
    %5367 = vmatprep.subr.bf16.mxu0 %v4248
    %5368 = vmatpush1.bf16.msra.mxu0 %v4247
    %5369 = vmatprep.subr.bf16.mxu0 %v4256
    %5370 = vmatpush1.bf16.msra.mxu0 %v4255
    %5371 = vmatprep.subr.bf16.mxu0 %v4264
    %5372 = vmatpush1.bf16.msra.mxu0 %v4263
    %5373 = vmatprep.subr.bf16.mxu0 %v4272
    %5374 = vmatpush1.bf16.msra.mxu0 %v4271
    %5375 = vmatprep.subr.bf16.mxu0 %v4280
    %5376 = vmatpush1.bf16.msra.mxu0 %v4279
    %5377 = vmatprep.mubr.bf16.mxu0 %v2060
    %5378 = vmatmul.mubr.bf16.gmra.mrb[0].mxu0 %v2059
    %v5379 = vpop.f32.mrb[0].mxu0
    %v5380 = vadd.f32 %v2592, %v5379
    %v5381 = vpop.f32.mrb[0].mxu0
    %v5382 = vadd.f32 %v2596, %v5381
    %v5383 = vpop.f32.mrb[0].mxu0
    %v5384 = vpop.f32.mrb[0].mxu0
    %5385 = vdwg.mxu0
    %5386 = vmatprep.subr.bf16.mxu0 %v4288
    %5387 = vmatpush1.bf16.msra.mxu0 %v4287
    %5388 = vmatprep.subr.bf16.mxu0 %v4296
    %5389 = vmatpush1.bf16.msra.mxu0 %v4295
    %5390 = vmatprep.subr.bf16.mxu0 %v4304
    %5391 = vmatpush1.bf16.msra.mxu0 %v4303
    %5392 = vmatprep.subr.bf16.mxu0 %v4312
    %5393 = vmatpush1.bf16.msra.mxu0 %v4311
    %5394 = vmatprep.subr.bf16.mxu0 %v4320
    %5395 = vmatpush1.bf16.msra.mxu0 %v4319
    %5396 = vmatprep.subr.bf16.mxu0 %v4328
    %5397 = vmatpush1.bf16.msra.mxu0 %v4327
    %5398 = vmatprep.subr.bf16.mxu0 %v4336
    %5399 = vmatpush1.bf16.msra.mxu0 %v4335
    %5400 = vmatprep.subr.bf16.mxu0 %v4344
    %5401 = vmatpush1.bf16.msra.mxu0 %v4343
    %5402 = vmatprep.subr.bf16.mxu0 %v4352
    %5403 = vmatpush1.bf16.msra.mxu0 %v4351
    %5404 = vmatprep.subr.bf16.mxu0 %v4360
    %5405 = vmatpush1.bf16.msra.mxu0 %v4359
    %5406 = vmatprep.subr.bf16.mxu0 %v4368
    %5407 = vmatpush1.bf16.msra.mxu0 %v4367
    %5408 = vmatprep.subr.bf16.mxu0 %v4376
    %5409 = vmatpush1.bf16.msra.mxu0 %v4375
    %5410 = vmatprep.subr.bf16.mxu0 %v4384
    %5411 = vmatpush1.bf16.msra.mxu0 %v4383
    %5412 = vmatprep.subr.bf16.mxu0 %v4392
    %5413 = vmatpush1.bf16.msra.mxu0 %v4391
    %5414 = vmatprep.subr.bf16.mxu0 %v4400
    %5415 = vmatpush1.bf16.msra.mxu0 %v4399
    %5416 = vmatprep.subr.bf16.mxu0 %v4408
    %5417 = vmatpush1.bf16.msra.mxu0 %v4407
    %5418 = vmatprep.mubr.bf16.mxu0 %v2062
    %5419 = vmatmul.mubr.bf16.gmra.mrb[0].mxu0 %v2061
    %v5420 = vpop.f32.mrb[0].mxu0
    %v5421 = vadd.f32 %v5380, %v5420
    %v5422 = vpop.f32.mrb[0].mxu0
    %v5423 = vadd.f32 %v5382, %v5422
    %v5424 = vpop.f32.mrb[0].mxu0
    %v5425 = vpop.f32.mrb[0].mxu0
    %5426 = vdwg.mxu0
    %5427 = vmatprep.subr.bf16.mxu0 %v4416
    %5428 = vmatpush1.bf16.msra.mxu0 %v4415
    %5429 = vmatprep.subr.bf16.mxu0 %v4424
    %5430 = vmatpush1.bf16.msra.mxu0 %v4423
    %5431 = vmatprep.subr.bf16.mxu0 %v4432
    %5432 = vmatpush1.bf16.msra.mxu0 %v4431
    %5433 = vmatprep.subr.bf16.mxu0 %v4440
    %5434 = vmatpush1.bf16.msra.mxu0 %v4439
    %5435 = vmatprep.subr.bf16.mxu0 %v4448
    %5436 = vmatpush1.bf16.msra.mxu0 %v4447
    %5437 = vmatprep.subr.bf16.mxu0 %v4456
    %5438 = vmatpush1.bf16.msra.mxu0 %v4455
    %5439 = vmatprep.subr.bf16.mxu0 %v4464
    %5440 = vmatpush1.bf16.msra.mxu0 %v4463
    %5441 = vmatprep.subr.bf16.mxu0 %v4472
    %5442 = vmatpush1.bf16.msra.mxu0 %v4471
    %5443 = vmatprep.subr.bf16.mxu0 %v4480
    %5444 = vmatpush1.bf16.msra.mxu0 %v4479
    %5445 = vmatprep.subr.bf16.mxu0 %v4488
    %5446 = vmatpush1.bf16.msra.mxu0 %v4487
    %5447 = vmatprep.subr.bf16.mxu0 %v4496
    %5448 = vmatpush1.bf16.msra.mxu0 %v4495
    %5449 = vmatprep.subr.bf16.mxu0 %v4504
    %5450 = vmatpush1.bf16.msra.mxu0 %v4503
    %5451 = vmatprep.subr.bf16.mxu0 %v4512
    %5452 = vmatpush1.bf16.msra.mxu0 %v4511
    %5453 = vmatprep.subr.bf16.mxu0 %v4520
    %5454 = vmatpush1.bf16.msra.mxu0 %v4519
    %5455 = vmatprep.subr.bf16.mxu0 %v4528
    %5456 = vmatpush1.bf16.msra.mxu0 %v4527
    %5457 = vmatprep.subr.bf16.mxu0 %v4536
    %5458 = vmatpush1.bf16.msra.mxu0 %v4535
    %5459 = vmatprep.mubr.bf16.mxu0 %v2064
    %5460 = vmatmul.mubr.bf16.gmra.mrb[0].mxu0 %v2063
    %v5461 = vpop.f32.mrb[0].mxu0
    %v5462 = vadd.f32 %v5421, %v5461
    %v5463 = vpop.f32.mrb[0].mxu0
    %v5464 = vadd.f32 %v5423, %v5463
    %v5465 = vpop.f32.mrb[0].mxu0
    %v5466 = vpop.f32.mrb[0].mxu0
    %5467 = vdwg.mxu0
    %5468 = vmatprep.subr.bf16.mxu0 %v4544
    %5469 = vmatpush1.bf16.msra.mxu0 %v4543
    %5470 = vmatprep.subr.bf16.mxu0 %v4552
    %5471 = vmatpush1.bf16.msra.mxu0 %v4551
    %5472 = vmatprep.subr.bf16.mxu0 %v4560
    %5473 = vmatpush1.bf16.msra.mxu0 %v4559
    %5474 = vmatprep.subr.bf16.mxu0 %v4568
    %5475 = vmatpush1.bf16.msra.mxu0 %v4567
    %5476 = vmatprep.subr.bf16.mxu0 %v4576
    %5477 = vmatpush1.bf16.msra.mxu0 %v4575
    %5478 = vmatprep.subr.bf16.mxu0 %v4584
    %5479 = vmatpush1.bf16.msra.mxu0 %v4583
    %5480 = vmatprep.subr.bf16.mxu0 %v4592
    %5481 = vmatpush1.bf16.msra.mxu0 %v4591
    %5482 = vmatprep.subr.bf16.mxu0 %v4600
    %5483 = vmatpush1.bf16.msra.mxu0 %v4599
    %5484 = vmatprep.subr.bf16.mxu0 %v4608
    %5485 = vmatpush1.bf16.msra.mxu0 %v4607
    %5486 = vmatprep.subr.bf16.mxu0 %v4616
    %5487 = vmatpush1.bf16.msra.mxu0 %v4615
    %5488 = vmatprep.subr.bf16.mxu0 %v4624
    %5489 = vmatpush1.bf16.msra.mxu0 %v4623
    %5490 = vmatprep.subr.bf16.mxu0 %v4632
    %5491 = vmatpush1.bf16.msra.mxu0 %v4631
    %5492 = vmatprep.subr.bf16.mxu0 %v4640
    %5493 = vmatpush1.bf16.msra.mxu0 %v4639
    %5494 = vmatprep.subr.bf16.mxu0 %v4648
    %5495 = vmatpush1.bf16.msra.mxu0 %v4647
    %5496 = vmatprep.subr.bf16.mxu0 %v4656
    %5497 = vmatpush1.bf16.msra.mxu0 %v4655
    %5498 = vmatprep.subr.bf16.mxu0 %v4664
    %5499 = vmatpush1.bf16.msra.mxu0 %v4663
    %5500 = vmatprep.mubr.bf16.mxu0 %v2066
    %5501 = vmatmul.mubr.bf16.gmra.mrb[0].mxu0 %v2065
    %v5502 = vpop.f32.mrb[0].mxu0
    %v5503 = vadd.f32 %v5462, %v5502
    %v5504 = vpop.f32.mrb[0].mxu0
    %v5505 = vadd.f32 %v5464, %v5504
    %v5506 = vpop.f32.mrb[0].mxu0
    %v5507 = vpop.f32.mrb[0].mxu0
    %5508 = vdwg.mxu0
    %5509 = vmatprep.subr.bf16.mxu0 %v4162
    %5510 = vmatpush1.bf16.msra.mxu0 %v4161
    %5511 = vmatprep.subr.bf16.mxu0 %v4170
    %5512 = vmatpush1.bf16.msra.mxu0 %v4169
    %5513 = vmatprep.subr.bf16.mxu0 %v4178
    %5514 = vmatpush1.bf16.msra.mxu0 %v4177
    %5515 = vmatprep.subr.bf16.mxu0 %v4186
    %5516 = vmatpush1.bf16.msra.mxu0 %v4185
    %5517 = vmatprep.subr.bf16.mxu0 %v4194
    %5518 = vmatpush1.bf16.msra.mxu0 %v4193
    %5519 = vmatprep.subr.bf16.mxu0 %v4202
    %5520 = vmatpush1.bf16.msra.mxu0 %v4201
    %5521 = vmatprep.subr.bf16.mxu0 %v4210
    %5522 = vmatpush1.bf16.msra.mxu0 %v4209
    %5523 = vmatprep.subr.bf16.mxu0 %v4218
    %5524 = vmatpush1.bf16.msra.mxu0 %v4217
    %5525 = vmatprep.subr.bf16.mxu0 %v4226
    %5526 = vmatpush1.bf16.msra.mxu0 %v4225
    %5527 = vmatprep.subr.bf16.mxu0 %v4234
    %5528 = vmatpush1.bf16.msra.mxu0 %v4233
    %5529 = vmatprep.subr.bf16.mxu0 %v4242
    %5530 = vmatpush1.bf16.msra.mxu0 %v4241
    %5531 = vmatprep.subr.bf16.mxu0 %v4250
    %5532 = vmatpush1.bf16.msra.mxu0 %v4249
    %5533 = vmatprep.subr.bf16.mxu0 %v4258
    %5534 = vmatpush1.bf16.msra.mxu0 %v4257
    %5535 = vmatprep.subr.bf16.mxu0 %v4266
    %5536 = vmatpush1.bf16.msra.mxu0 %v4265
    %5537 = vmatprep.subr.bf16.mxu0 %v4274
    %5538 = vmatpush1.bf16.msra.mxu0 %v4273
    %5539 = vmatprep.subr.bf16.mxu0 %v4282
    %5540 = vmatpush1.bf16.msra.mxu0 %v4281
    %5541 = vmatprep.mubr.bf16.mxu0 %v2060
    %5542 = vmatmul.mubr.bf16.gmra.mrb[0].mxu0 %v2059
    %v5543 = vpop.f32.mrb[0].mxu0
    %v5544 = vadd.f32 %v2600, %v5543
    %v5545 = vpop.f32.mrb[0].mxu0
    %v5546 = vadd.f32 %v2604, %v5545
    %v5547 = vpop.f32.mrb[0].mxu0
    %v5548 = vpop.f32.mrb[0].mxu0
    %5549 = vdwg.mxu0
    %5550 = vmatprep.subr.bf16.mxu0 %v4290
    %5551 = vmatpush1.bf16.msra.mxu0 %v4289
    %5552 = vmatprep.subr.bf16.mxu0 %v4298
    %5553 = vmatpush1.bf16.msra.mxu0 %v4297
    %5554 = vmatprep.subr.bf16.mxu0 %v4306
    %5555 = vmatpush1.bf16.msra.mxu0 %v4305
    %5556 = vmatprep.subr.bf16.mxu0 %v4314
    %5557 = vmatpush1.bf16.msra.mxu0 %v4313
    %5558 = vmatprep.subr.bf16.mxu0 %v4322
    %5559 = vmatpush1.bf16.msra.mxu0 %v4321
    %5560 = vmatprep.subr.bf16.mxu0 %v4330
    %5561 = vmatpush1.bf16.msra.mxu0 %v4329
    %5562 = vmatprep.subr.bf16.mxu0 %v4338
    %5563 = vmatpush1.bf16.msra.mxu0 %v4337
    %5564 = vmatprep.subr.bf16.mxu0 %v4346
    %5565 = vmatpush1.bf16.msra.mxu0 %v4345
    %5566 = vmatprep.subr.bf16.mxu0 %v4354
    %5567 = vmatpush1.bf16.msra.mxu0 %v4353
    %5568 = vmatprep.subr.bf16.mxu0 %v4362
    %5569 = vmatpush1.bf16.msra.mxu0 %v4361
    %5570 = vmatprep.subr.bf16.mxu0 %v4370
    %5571 = vmatpush1.bf16.msra.mxu0 %v4369
    %5572 = vmatprep.subr.bf16.mxu0 %v4378
    %5573 = vmatpush1.bf16.msra.mxu0 %v4377
    %5574 = vmatprep.subr.bf16.mxu0 %v4386
    %5575 = vmatpush1.bf16.msra.mxu0 %v4385
    %5576 = vmatprep.subr.bf16.mxu0 %v4394
    %5577 = vmatpush1.bf16.msra.mxu0 %v4393
    %5578 = vmatprep.subr.bf16.mxu0 %v4402
    %5579 = vmatpush1.bf16.msra.mxu0 %v4401
    %5580 = vmatprep.subr.bf16.mxu0 %v4410
    %5581 = vmatpush1.bf16.msra.mxu0 %v4409
    %5582 = vmatprep.mubr.bf16.mxu0 %v2062
    %5583 = vmatmul.mubr.bf16.gmra.mrb[0].mxu0 %v2061
    %v5584 = vpop.f32.mrb[0].mxu0
    %v5585 = vadd.f32 %v5544, %v5584
    %v5586 = vpop.f32.mrb[0].mxu0
    %v5587 = vadd.f32 %v5546, %v5586
    %v5588 = vpop.f32.mrb[0].mxu0
    %v5589 = vpop.f32.mrb[0].mxu0
    %5590 = vdwg.mxu0
    %5591 = vmatprep.subr.bf16.mxu0 %v4418
    %5592 = vmatpush1.bf16.msra.mxu0 %v4417
    %5593 = vmatprep.subr.bf16.mxu0 %v4426
    %5594 = vmatpush1.bf16.msra.mxu0 %v4425
    %5595 = vmatprep.subr.bf16.mxu0 %v4434
    %5596 = vmatpush1.bf16.msra.mxu0 %v4433
    %5597 = vmatprep.subr.bf16.mxu0 %v4442
    %5598 = vmatpush1.bf16.msra.mxu0 %v4441
    %5599 = vmatprep.subr.bf16.mxu0 %v4450
    %5600 = vmatpush1.bf16.msra.mxu0 %v4449
    %5601 = vmatprep.subr.bf16.mxu0 %v4458
    %5602 = vmatpush1.bf16.msra.mxu0 %v4457
    %5603 = vmatprep.subr.bf16.mxu0 %v4466
    %5604 = vmatpush1.bf16.msra.mxu0 %v4465
    %5605 = vmatprep.subr.bf16.mxu0 %v4474
    %5606 = vmatpush1.bf16.msra.mxu0 %v4473
    %5607 = vmatprep.subr.bf16.mxu0 %v4482
    %5608 = vmatpush1.bf16.msra.mxu0 %v4481
    %5609 = vmatprep.subr.bf16.mxu0 %v4490
    %5610 = vmatpush1.bf16.msra.mxu0 %v4489
    %5611 = vmatprep.subr.bf16.mxu0 %v4498
    %5612 = vmatpush1.bf16.msra.mxu0 %v4497
    %5613 = vmatprep.subr.bf16.mxu0 %v4506
    %5614 = vmatpush1.bf16.msra.mxu0 %v4505
    %5615 = vmatprep.subr.bf16.mxu0 %v4514
    %5616 = vmatpush1.bf16.msra.mxu0 %v4513
    %5617 = vmatprep.subr.bf16.mxu0 %v4522
    %5618 = vmatpush1.bf16.msra.mxu0 %v4521
    %5619 = vmatprep.subr.bf16.mxu0 %v4530
    %5620 = vmatpush1.bf16.msra.mxu0 %v4529
    %5621 = vmatprep.subr.bf16.mxu0 %v4538
    %5622 = vmatpush1.bf16.msra.mxu0 %v4537
    %5623 = vmatprep.mubr.bf16.mxu0 %v2064
    %5624 = vmatmul.mubr.bf16.gmra.mrb[0].mxu0 %v2063
    %v5625 = vpop.f32.mrb[0].mxu0
    %v5626 = vadd.f32 %v5585, %v5625
    %v5627 = vpop.f32.mrb[0].mxu0
    %v5628 = vadd.f32 %v5587, %v5627
    %v5629 = vpop.f32.mrb[0].mxu0
    %v5630 = vpop.f32.mrb[0].mxu0
    %5631 = vdwg.mxu0
    %5632 = vmatprep.subr.bf16.mxu0 %v4546
    %5633 = vmatpush1.bf16.msra.mxu0 %v4545
    %5634 = vmatprep.subr.bf16.mxu0 %v4554
    %5635 = vmatpush1.bf16.msra.mxu0 %v4553
    %5636 = vmatprep.subr.bf16.mxu0 %v4562
    %5637 = vmatpush1.bf16.msra.mxu0 %v4561
    %5638 = vmatprep.subr.bf16.mxu0 %v4570
    %5639 = vmatpush1.bf16.msra.mxu0 %v4569
    %5640 = vmatprep.subr.bf16.mxu0 %v4578
    %5641 = vmatpush1.bf16.msra.mxu0 %v4577
    %5642 = vmatprep.subr.bf16.mxu0 %v4586
    %5643 = vmatpush1.bf16.msra.mxu0 %v4585
    %5644 = vmatprep.subr.bf16.mxu0 %v4594
    %5645 = vmatpush1.bf16.msra.mxu0 %v4593
    %5646 = vmatprep.subr.bf16.mxu0 %v4602
    %5647 = vmatpush1.bf16.msra.mxu0 %v4601
    %5648 = vmatprep.subr.bf16.mxu0 %v4610
    %5649 = vmatpush1.bf16.msra.mxu0 %v4609
    %5650 = vmatprep.subr.bf16.mxu0 %v4618
    %5651 = vmatpush1.bf16.msra.mxu0 %v4617
    %5652 = vmatprep.subr.bf16.mxu0 %v4626
    %5653 = vmatpush1.bf16.msra.mxu0 %v4625
    %5654 = vmatprep.subr.bf16.mxu0 %v4634
    %5655 = vmatpush1.bf16.msra.mxu0 %v4633
    %5656 = vmatprep.subr.bf16.mxu0 %v4642
    %5657 = vmatpush1.bf16.msra.mxu0 %v4641
    %5658 = vmatprep.subr.bf16.mxu0 %v4650
    %5659 = vmatpush1.bf16.msra.mxu0 %v4649
    %5660 = vmatprep.subr.bf16.mxu0 %v4658
    %5661 = vmatpush1.bf16.msra.mxu0 %v4657
    %5662 = vmatprep.subr.bf16.mxu0 %v4666
    %5663 = vmatpush1.bf16.msra.mxu0 %v4665
    %5664 = vmatprep.mubr.bf16.mxu0 %v2066
    %5665 = vmatmul.mubr.bf16.gmra.mrb[0].mxu0 %v2065
    %v5666 = vpop.f32.mrb[0].mxu0
    %v5667 = vadd.f32 %v5626, %v5666
    %v5668 = vpop.f32.mrb[0].mxu0
    %v5669 = vadd.f32 %v5628, %v5668
    %v5670 = vpop.f32.mrb[0].mxu0
    %v5671 = vpop.f32.mrb[0].mxu0
    %5672 = vdwg.mxu0
    %5673 = vmatprep.subr.bf16.mxu0 %v4164
    %5674 = vmatpush1.bf16.msra.mxu0 %v4163
    %5675 = vmatprep.subr.bf16.mxu0 %v4172
    %5676 = vmatpush1.bf16.msra.mxu0 %v4171
    %5677 = vmatprep.subr.bf16.mxu0 %v4180
    %5678 = vmatpush1.bf16.msra.mxu0 %v4179
    %5679 = vmatprep.subr.bf16.mxu0 %v4188
    %5680 = vmatpush1.bf16.msra.mxu0 %v4187
    %5681 = vmatprep.subr.bf16.mxu0 %v4196
    %5682 = vmatpush1.bf16.msra.mxu0 %v4195
    %5683 = vmatprep.subr.bf16.mxu0 %v4204
    %5684 = vmatpush1.bf16.msra.mxu0 %v4203
    %5685 = vmatprep.subr.bf16.mxu0 %v4212
    %5686 = vmatpush1.bf16.msra.mxu0 %v4211
    %5687 = vmatprep.subr.bf16.mxu0 %v4220
    %5688 = vmatpush1.bf16.msra.mxu0 %v4219
    %5689 = vmatprep.subr.bf16.mxu0 %v4228
    %5690 = vmatpush1.bf16.msra.mxu0 %v4227
    %5691 = vmatprep.subr.bf16.mxu0 %v4236
    %5692 = vmatpush1.bf16.msra.mxu0 %v4235
    %5693 = vmatprep.subr.bf16.mxu0 %v4244
    %5694 = vmatpush1.bf16.msra.mxu0 %v4243
    %5695 = vmatprep.subr.bf16.mxu0 %v4252
    %5696 = vmatpush1.bf16.msra.mxu0 %v4251
    %5697 = vmatprep.subr.bf16.mxu0 %v4260
    %5698 = vmatpush1.bf16.msra.mxu0 %v4259
    %5699 = vmatprep.subr.bf16.mxu0 %v4268
    %5700 = vmatpush1.bf16.msra.mxu0 %v4267
    %5701 = vmatprep.subr.bf16.mxu0 %v4276
    %5702 = vmatpush1.bf16.msra.mxu0 %v4275
    %5703 = vmatprep.subr.bf16.mxu0 %v4284
    %5704 = vmatpush1.bf16.msra.mxu0 %v4283
    %5705 = vmatprep.mubr.bf16.mxu0 %v2060
    %5706 = vmatmul.mubr.bf16.gmra.mrb[0].mxu0 %v2059
    %v5707 = vpop.f32.mrb[0].mxu0
    %v5708 = vadd.f32 %v2608, %v5707
    %v5709 = vpop.f32.mrb[0].mxu0
    %v5710 = vadd.f32 %v2612, %v5709
    %v5711 = vpop.f32.mrb[0].mxu0
    %v5712 = vpop.f32.mrb[0].mxu0
    %5713 = vdwg.mxu0
    %5714 = vmatprep.subr.bf16.mxu0 %v4292
    %5715 = vmatpush1.bf16.msra.mxu0 %v4291
    %5716 = vmatprep.subr.bf16.mxu0 %v4300
    %5717 = vmatpush1.bf16.msra.mxu0 %v4299
    %5718 = vmatprep.subr.bf16.mxu0 %v4308
    %5719 = vmatpush1.bf16.msra.mxu0 %v4307
    %5720 = vmatprep.subr.bf16.mxu0 %v4316
    %5721 = vmatpush1.bf16.msra.mxu0 %v4315
    %5722 = vmatprep.subr.bf16.mxu0 %v4324
    %5723 = vmatpush1.bf16.msra.mxu0 %v4323
    %5724 = vmatprep.subr.bf16.mxu0 %v4332
    %5725 = vmatpush1.bf16.msra.mxu0 %v4331
    %5726 = vmatprep.subr.bf16.mxu0 %v4340
    %5727 = vmatpush1.bf16.msra.mxu0 %v4339
    %5728 = vmatprep.subr.bf16.mxu0 %v4348
    %5729 = vmatpush1.bf16.msra.mxu0 %v4347
    %5730 = vmatprep.subr.bf16.mxu0 %v4356
    %5731 = vmatpush1.bf16.msra.mxu0 %v4355
    %5732 = vmatprep.subr.bf16.mxu0 %v4364
    %5733 = vmatpush1.bf16.msra.mxu0 %v4363
    %5734 = vmatprep.subr.bf16.mxu0 %v4372
    %5735 = vmatpush1.bf16.msra.mxu0 %v4371
    %5736 = vmatprep.subr.bf16.mxu0 %v4380
    %5737 = vmatpush1.bf16.msra.mxu0 %v4379
    %5738 = vmatprep.subr.bf16.mxu0 %v4388
    %5739 = vmatpush1.bf16.msra.mxu0 %v4387
    %5740 = vmatprep.subr.bf16.mxu0 %v4396
    %5741 = vmatpush1.bf16.msra.mxu0 %v4395
    %5742 = vmatprep.subr.bf16.mxu0 %v4404
    %5743 = vmatpush1.bf16.msra.mxu0 %v4403
    %5744 = vmatprep.subr.bf16.mxu0 %v4412
    %5745 = vmatpush1.bf16.msra.mxu0 %v4411
    %5746 = vmatprep.mubr.bf16.mxu0 %v2062
    %5747 = vmatmul.mubr.bf16.gmra.mrb[0].mxu0 %v2061
    %v5748 = vpop.f32.mrb[0].mxu0
    %v5749 = vadd.f32 %v5708, %v5748
    %v5750 = vpop.f32.mrb[0].mxu0
    %v5751 = vadd.f32 %v5710, %v5750
    %v5752 = vpop.f32.mrb[0].mxu0
    %v5753 = vpop.f32.mrb[0].mxu0
    %5754 = vdwg.mxu0
    %5755 = vmatprep.subr.bf16.mxu0 %v4420
    %5756 = vmatpush1.bf16.msra.mxu0 %v4419
    %5757 = vmatprep.subr.bf16.mxu0 %v4428
    %5758 = vmatpush1.bf16.msra.mxu0 %v4427
    %5759 = vmatprep.subr.bf16.mxu0 %v4436
    %5760 = vmatpush1.bf16.msra.mxu0 %v4435
    %5761 = vmatprep.subr.bf16.mxu0 %v4444
    %5762 = vmatpush1.bf16.msra.mxu0 %v4443
    %5763 = vmatprep.subr.bf16.mxu0 %v4452
    %5764 = vmatpush1.bf16.msra.mxu0 %v4451
    %5765 = vmatprep.subr.bf16.mxu0 %v4460
    %5766 = vmatpush1.bf16.msra.mxu0 %v4459
    %5767 = vmatprep.subr.bf16.mxu0 %v4468
    %5768 = vmatpush1.bf16.msra.mxu0 %v4467
    %5769 = vmatprep.subr.bf16.mxu0 %v4476
    %5770 = vmatpush1.bf16.msra.mxu0 %v4475
    %5771 = vmatprep.subr.bf16.mxu0 %v4484
    %5772 = vmatpush1.bf16.msra.mxu0 %v4483
    %5773 = vmatprep.subr.bf16.mxu0 %v4492
    %5774 = vmatpush1.bf16.msra.mxu0 %v4491
    %5775 = vmatprep.subr.bf16.mxu0 %v4500
    %5776 = vmatpush1.bf16.msra.mxu0 %v4499
    %5777 = vmatprep.subr.bf16.mxu0 %v4508
    %5778 = vmatpush1.bf16.msra.mxu0 %v4507
    %5779 = vmatprep.subr.bf16.mxu0 %v4516
    %5780 = vmatpush1.bf16.msra.mxu0 %v4515
    %5781 = vmatprep.subr.bf16.mxu0 %v4524
    %5782 = vmatpush1.bf16.msra.mxu0 %v4523
    %5783 = vmatprep.subr.bf16.mxu0 %v4532
    %5784 = vmatpush1.bf16.msra.mxu0 %v4531
    %5785 = vmatprep.subr.bf16.mxu0 %v4540
    %5786 = vmatpush1.bf16.msra.mxu0 %v4539
    %5787 = vmatprep.mubr.bf16.mxu0 %v2064
    %5788 = vmatmul.mubr.bf16.gmra.mrb[0].mxu0 %v2063
    %v5789 = vpop.f32.mrb[0].mxu0
    %v5790 = vadd.f32 %v5749, %v5789
    %v5791 = vpop.f32.mrb[0].mxu0
    %v5792 = vadd.f32 %v5751, %v5791
    %v5793 = vpop.f32.mrb[0].mxu0
    %v5794 = vpop.f32.mrb[0].mxu0
    %5795 = vdwg.mxu0
    %5796 = vmatprep.subr.bf16.mxu0 %v4548
    %5797 = vmatpush1.bf16.msra.mxu0 %v4547
    %5798 = vmatprep.subr.bf16.mxu0 %v4556
    %5799 = vmatpush1.bf16.msra.mxu0 %v4555
    %5800 = vmatprep.subr.bf16.mxu0 %v4564
    %5801 = vmatpush1.bf16.msra.mxu0 %v4563
    %5802 = vmatprep.subr.bf16.mxu0 %v4572
    %5803 = vmatpush1.bf16.msra.mxu0 %v4571
    %5804 = vmatprep.subr.bf16.mxu0 %v4580
    %5805 = vmatpush1.bf16.msra.mxu0 %v4579
    %5806 = vmatprep.subr.bf16.mxu0 %v4588
    %5807 = vmatpush1.bf16.msra.mxu0 %v4587
    %5808 = vmatprep.subr.bf16.mxu0 %v4596
    %5809 = vmatpush1.bf16.msra.mxu0 %v4595
    %5810 = vmatprep.subr.bf16.mxu0 %v4604
    %5811 = vmatpush1.bf16.msra.mxu0 %v4603
    %5812 = vmatprep.subr.bf16.mxu0 %v4612
    %5813 = vmatpush1.bf16.msra.mxu0 %v4611
    %5814 = vmatprep.subr.bf16.mxu0 %v4620
    %5815 = vmatpush1.bf16.msra.mxu0 %v4619
    %5816 = vmatprep.subr.bf16.mxu0 %v4628
    %5817 = vmatpush1.bf16.msra.mxu0 %v4627
    %5818 = vmatprep.subr.bf16.mxu0 %v4636
    %5819 = vmatpush1.bf16.msra.mxu0 %v4635
    %5820 = vmatprep.subr.bf16.mxu0 %v4644
    %5821 = vmatpush1.bf16.msra.mxu0 %v4643
    %5822 = vmatprep.subr.bf16.mxu0 %v4652
    %5823 = vmatpush1.bf16.msra.mxu0 %v4651
    %5824 = vmatprep.subr.bf16.mxu0 %v4660
    %5825 = vmatpush1.bf16.msra.mxu0 %v4659
    %5826 = vmatprep.subr.bf16.mxu0 %v4668
    %5827 = vmatpush1.bf16.msra.mxu0 %v4667
    %5828 = vmatprep.mubr.bf16.mxu0 %v2066
    %5829 = vmatmul.mubr.bf16.gmra.mrb[0].mxu0 %v2065
    %v5830 = vpop.f32.mrb[0].mxu0
    %v5831 = vadd.f32 %v5790, %v5830
    %v5832 = vpop.f32.mrb[0].mxu0
    %v5833 = vadd.f32 %v5792, %v5832
    %v5834 = vpop.f32.mrb[0].mxu0
    %v5835 = vpop.f32.mrb[0].mxu0
    %5836 = vdwg.mxu0
    %v5837 = vmax.f32 %v5339, 0.0
    %v5838 = vmax.f32 %v5341, 0.0
    %v5839 = vmax.f32 %v5503, 0.0
    %v5840 = vmax.f32 %v5505, 0.0
    %v5841 = vmax.f32 %v5667, 0.0
    %v5842 = vmax.f32 %v5669, 0.0
    %v5843 = vmax.f32 %v5831, 0.0
    %v5844 = vmax.f32 %v5833, 0.0
    %v5845 = vpack.c.bf16 %v5837, %v5837
    %v5846 = vpack.c.bf16 %v5838, %v5838
    %v5847 = vpack.c.bf16 %v5839, %v5839
    %v5848 = vpack.c.bf16 %v5840, %v5840
    %v5849 = vpack.c.bf16 %v5841, %v5841
    %v5850 = vpack.c.bf16 %v5842, %v5842
    %v5851 = vpack.c.bf16 %v5843, %v5843
    %v5852 = vpack.c.bf16 %v5844, %v5844
    %v5853 = vld [vmem:[#allocation18] sm:$0xf]
    %v5854 = vld [vmem:[#allocation18 + $0x4] sm:$0xf]
    %v5855 = vld [vmem:[#allocation18 + $0x8] sm:$0xf]
    %v5856 = vld [vmem:[#allocation18 + $0xc] sm:$0xf]
    %v5857 = vld [vmem:[#allocation18 + $0x10] sm:$0xf]
    %v5858 = vld [vmem:[#allocation18 + $0x14] sm:$0xf]
    %v5859 = vld [vmem:[#allocation18 + $0x18] sm:$0xf]
    %v5860 = vld [vmem:[#allocation18 + $0x1c] sm:$0xf]
    %v5861 = vld [vmem:[#allocation18 + $0x20] sm:$0xf]
    %v5862 = vld [vmem:[#allocation18 + $0x24] sm:$0xf]
    %v5863 = vld [vmem:[#allocation18 + $0x28] sm:$0xf]
    %v5864 = vld [vmem:[#allocation18 + $0x2c] sm:$0xf]
    %v5865 = vld [vmem:[#allocation18 + $0x30] sm:$0xf]
    %v5866 = vld [vmem:[#allocation18 + $0x34] sm:$0xf]
    %v5867 = vld [vmem:[#allocation18 + $0x38] sm:$0xf]
    %v5868 = vld [vmem:[#allocation18 + $0x3c] sm:$0xf]
    %v5869 = vld [vmem:[#allocation18 + $0x40] sm:$0xf]
    %v5870 = vld [vmem:[#allocation18 + $0x44] sm:$0xf]
    %v5871 = vld [vmem:[#allocation18 + $0x48] sm:$0xf]
    %v5872 = vld [vmem:[#allocation18 + $0x4c] sm:$0xf]
    %v5873 = vld [vmem:[#allocation18 + $0x50] sm:$0xf]
    %v5874 = vld [vmem:[#allocation18 + $0x54] sm:$0xf]
    %v5875 = vld [vmem:[#allocation18 + $0x58] sm:$0xf]
    %v5876 = vld [vmem:[#allocation18 + $0x5c] sm:$0xf]
    %v5877 = vld [vmem:[#allocation18 + $0x60] sm:$0xf]
    %v5878 = vld [vmem:[#allocation18 + $0x64] sm:$0xf]
    %v5879 = vld [vmem:[#allocation18 + $0x68] sm:$0xf]
    %v5880 = vld [vmem:[#allocation18 + $0x6c] sm:$0xf]
    %v5881 = vld [vmem:[#allocation18 + $0x70] sm:$0xf]
    %v5882 = vld [vmem:[#allocation18 + $0x74] sm:$0xf]
    %v5883 = vld [vmem:[#allocation18 + $0x78] sm:$0xf]
    %v5884 = vld [vmem:[#allocation18 + $0x7c] sm:$0xf]
    %v5885 = vld [vmem:[#allocation18 + $0x80] sm:$0xf]
    %v5886 = vld [vmem:[#allocation18 + $0x84] sm:$0xf]
    %v5887 = vld [vmem:[#allocation18 + $0x88] sm:$0xf]
    %v5888 = vld [vmem:[#allocation18 + $0x8c] sm:$0xf]
    %v5889 = vld [vmem:[#allocation18 + $0x90] sm:$0xf]
    %v5890 = vld [vmem:[#allocation18 + $0x94] sm:$0xf]
    %v5891 = vld [vmem:[#allocation18 + $0x98] sm:$0xf]
    %v5892 = vld [vmem:[#allocation18 + $0x9c] sm:$0xf]
    %v5893 = vld [vmem:[#allocation18 + $0xa0] sm:$0xf]
    %v5894 = vld [vmem:[#allocation18 + $0xa4] sm:$0xf]
    %v5895 = vld [vmem:[#allocation18 + $0xa8] sm:$0xf]
    %v5896 = vld [vmem:[#allocation18 + $0xac] sm:$0xf]
    %v5897 = vld [vmem:[#allocation18 + $0xb0] sm:$0xf]
    %v5898 = vld [vmem:[#allocation18 + $0xb4] sm:$0xf]
    %v5899 = vld [vmem:[#allocation18 + $0xb8] sm:$0xf]
    %v5900 = vld [vmem:[#allocation18 + $0xbc] sm:$0xf]
    %v5901 = vld [vmem:[#allocation18 + $0xc0] sm:$0xf]
    %v5902 = vld [vmem:[#allocation18 + $0xc4] sm:$0xf]
    %v5903 = vld [vmem:[#allocation18 + $0xc8] sm:$0xf]
    %v5904 = vld [vmem:[#allocation18 + $0xcc] sm:$0xf]
    %v5905 = vld [vmem:[#allocation18 + $0xd0] sm:$0xf]
    %v5906 = vld [vmem:[#allocation18 + $0xd4] sm:$0xf]
    %v5907 = vld [vmem:[#allocation18 + $0xd8] sm:$0xf]
    %v5908 = vld [vmem:[#allocation18 + $0xdc] sm:$0xf]
    %v5909 = vld [vmem:[#allocation18 + $0xe0] sm:$0xf]
    %v5910 = vld [vmem:[#allocation18 + $0xe4] sm:$0xf]
    %v5911 = vld [vmem:[#allocation18 + $0xe8] sm:$0xf]
    %v5912 = vld [vmem:[#allocation18 + $0xec] sm:$0xf]
    %v5913 = vld [vmem:[#allocation18 + $0xf0] sm:$0xf]
    %v5914 = vld [vmem:[#allocation18 + $0xf4] sm:$0xf]
    %v5915 = vld [vmem:[#allocation18 + $0xf8] sm:$0xf]
    %v5916 = vld [vmem:[#allocation18 + $0xfc] sm:$0xf]
    %v5917 = vld [vmem:[#allocation18 + $0x100] sm:$0xf]
    %v5918 = vld [vmem:[#allocation18 + $0x104] sm:$0xf]
    %v5919 = vld [vmem:[#allocation18 + $0x108] sm:$0xf]
    %v5920 = vld [vmem:[#allocation18 + $0x10c] sm:$0xf]
    %v5921 = vld [vmem:[#allocation18 + $0x110] sm:$0xf]
    %v5922 = vld [vmem:[#allocation18 + $0x114] sm:$0xf]
    %v5923 = vld [vmem:[#allocation18 + $0x118] sm:$0xf]
    %v5924 = vld [vmem:[#allocation18 + $0x11c] sm:$0xf]
    %v5925 = vld [vmem:[#allocation18 + $0x120] sm:$0xf]
    %v5926 = vld [vmem:[#allocation18 + $0x124] sm:$0xf]
    %v5927 = vld [vmem:[#allocation18 + $0x128] sm:$0xf]
    %v5928 = vld [vmem:[#allocation18 + $0x12c] sm:$0xf]
    %v5929 = vld [vmem:[#allocation18 + $0x130] sm:$0xf]
    %v5930 = vld [vmem:[#allocation18 + $0x134] sm:$0xf]
    %v5931 = vld [vmem:[#allocation18 + $0x138] sm:$0xf]
    %v5932 = vld [vmem:[#allocation18 + $0x13c] sm:$0xf]
    %v5933 = vld [vmem:[#allocation18 + $0x140] sm:$0xf]
    %v5934 = vld [vmem:[#allocation18 + $0x144] sm:$0xf]
    %v5935 = vld [vmem:[#allocation18 + $0x148] sm:$0xf]
    %v5936 = vld [vmem:[#allocation18 + $0x14c] sm:$0xf]
    %v5937 = vld [vmem:[#allocation18 + $0x150] sm:$0xf]
    %v5938 = vld [vmem:[#allocation18 + $0x154] sm:$0xf]
    %v5939 = vld [vmem:[#allocation18 + $0x158] sm:$0xf]
    %v5940 = vld [vmem:[#allocation18 + $0x15c] sm:$0xf]
    %v5941 = vld [vmem:[#allocation18 + $0x160] sm:$0xf]
    %v5942 = vld [vmem:[#allocation18 + $0x164] sm:$0xf]
    %v5943 = vld [vmem:[#allocation18 + $0x168] sm:$0xf]
    %v5944 = vld [vmem:[#allocation18 + $0x16c] sm:$0xf]
    %v5945 = vld [vmem:[#allocation18 + $0x170] sm:$0xf]
    %v5946 = vld [vmem:[#allocation18 + $0x174] sm:$0xf]
    %v5947 = vld [vmem:[#allocation18 + $0x178] sm:$0xf]
    %v5948 = vld [vmem:[#allocation18 + $0x17c] sm:$0xf]
    %v5949 = vld [vmem:[#allocation18 + $0x180] sm:$0xf]
    %v5950 = vld [vmem:[#allocation18 + $0x184] sm:$0xf]
    %v5951 = vld [vmem:[#allocation18 + $0x188] sm:$0xf]
    %v5952 = vld [vmem:[#allocation18 + $0x18c] sm:$0xf]
    %v5953 = vld [vmem:[#allocation18 + $0x190] sm:$0xf]
    %v5954 = vld [vmem:[#allocation18 + $0x194] sm:$0xf]
    %v5955 = vld [vmem:[#allocation18 + $0x198] sm:$0xf]
    %v5956 = vld [vmem:[#allocation18 + $0x19c] sm:$0xf]
    %v5957 = vld [vmem:[#allocation18 + $0x1a0] sm:$0xf]
    %v5958 = vld [vmem:[#allocation18 + $0x1a4] sm:$0xf]
    %v5959 = vld [vmem:[#allocation18 + $0x1a8] sm:$0xf]
    %v5960 = vld [vmem:[#allocation18 + $0x1ac] sm:$0xf]
    %v5961 = vld [vmem:[#allocation18 + $0x1b0] sm:$0xf]
    %v5962 = vld [vmem:[#allocation18 + $0x1b4] sm:$0xf]
    %v5963 = vld [vmem:[#allocation18 + $0x1b8] sm:$0xf]
    %v5964 = vld [vmem:[#allocation18 + $0x1bc] sm:$0xf]
    %v5965 = vld [vmem:[#allocation18 + $0x1c0] sm:$0xf]
    %v5966 = vld [vmem:[#allocation18 + $0x1c4] sm:$0xf]
    %v5967 = vld [vmem:[#allocation18 + $0x1c8] sm:$0xf]
    %v5968 = vld [vmem:[#allocation18 + $0x1cc] sm:$0xf]
    %v5969 = vld [vmem:[#allocation18 + $0x1d0] sm:$0xf]
    %v5970 = vld [vmem:[#allocation18 + $0x1d4] sm:$0xf]
    %v5971 = vld [vmem:[#allocation18 + $0x1d8] sm:$0xf]
    %v5972 = vld [vmem:[#allocation18 + $0x1dc] sm:$0xf]
    %v5973 = vld [vmem:[#allocation18 + $0x1e0] sm:$0xf]
    %v5974 = vld [vmem:[#allocation18 + $0x1e4] sm:$0xf]
    %v5975 = vld [vmem:[#allocation18 + $0x1e8] sm:$0xf]
    %v5976 = vld [vmem:[#allocation18 + $0x1ec] sm:$0xf]
    %v5977 = vld [vmem:[#allocation18 + $0x1f0] sm:$0xf]
    %v5978 = vld [vmem:[#allocation18 + $0x1f4] sm:$0xf]
    %v5979 = vld [vmem:[#allocation18 + $0x1f8] sm:$0xf]
    %v5980 = vld [vmem:[#allocation18 + $0x1fc] sm:$0xf]
    %v5981 = vld [vmem:[#allocation20] sm:$0x1]
    %v5983 = vlaneseq
    %v5984 = vshrl.u32 %v5983, 7
    %v5985 = vsub.s32 0, %v5984
    %v5986 = vrot.slane %v5981, %v5985
    %v6116 = vunpack.c.l.b16 %v5853
    %v6117 = vunpack.c.l.b16 %v5854
    %v6118 = vunpack.c.l.b16 %v5855
    %v6119 = vunpack.c.l.b16 %v5856
    %v6120 = vunpack.c.l.b16 %v5857
    %v6121 = vunpack.c.l.b16 %v5858
    %v6122 = vunpack.c.l.b16 %v5859
    %v6123 = vunpack.c.l.b16 %v5860
    %v6124 = vunpack.c.l.b16 %v5861
    %v6125 = vunpack.c.l.b16 %v5862
    %v6126 = vunpack.c.l.b16 %v5863
    %v6127 = vunpack.c.l.b16 %v5864
    %v6128 = vunpack.c.l.b16 %v5865
    %v6129 = vunpack.c.l.b16 %v5866
    %v6130 = vunpack.c.l.b16 %v5867
    %v6131 = vunpack.c.l.b16 %v5868
    %v6132 = vunpack.c.l.b16 %v5869
    %v6133 = vunpack.c.l.b16 %v5870
    %v6134 = vunpack.c.l.b16 %v5871
    %v6135 = vunpack.c.l.b16 %v5872
    %v6136 = vunpack.c.l.b16 %v5873
    %v6137 = vunpack.c.l.b16 %v5874
    %v6138 = vunpack.c.l.b16 %v5875
    %v6139 = vunpack.c.l.b16 %v5876
    %v6140 = vunpack.c.l.b16 %v5877
    %v6141 = vunpack.c.l.b16 %v5878
    %v6142 = vunpack.c.l.b16 %v5879
    %v6143 = vunpack.c.l.b16 %v5880
    %v6144 = vunpack.c.l.b16 %v5881
    %v6145 = vunpack.c.l.b16 %v5882
    %v6146 = vunpack.c.l.b16 %v5883
    %v6147 = vunpack.c.l.b16 %v5884
    %v6148 = vunpack.c.l.b16 %v5885
    %v6149 = vunpack.c.l.b16 %v5886
    %v6150 = vunpack.c.l.b16 %v5887
    %v6151 = vunpack.c.l.b16 %v5888
    %v6152 = vunpack.c.l.b16 %v5889
    %v6153 = vunpack.c.l.b16 %v5890
    %v6154 = vunpack.c.l.b16 %v5891
    %v6155 = vunpack.c.l.b16 %v5892
    %v6156 = vunpack.c.l.b16 %v5893
    %v6157 = vunpack.c.l.b16 %v5894
    %v6158 = vunpack.c.l.b16 %v5895
    %v6159 = vunpack.c.l.b16 %v5896
    %v6160 = vunpack.c.l.b16 %v5897
    %v6161 = vunpack.c.l.b16 %v5898
    %v6162 = vunpack.c.l.b16 %v5899
    %v6163 = vunpack.c.l.b16 %v5900
    %v6164 = vunpack.c.l.b16 %v5901
    %v6165 = vunpack.c.l.b16 %v5902
    %v6166 = vunpack.c.l.b16 %v5903
    %v6167 = vunpack.c.l.b16 %v5904
    %v6168 = vunpack.c.l.b16 %v5905
    %v6169 = vunpack.c.l.b16 %v5906
    %v6170 = vunpack.c.l.b16 %v5907
    %v6171 = vunpack.c.l.b16 %v5908
    %v6172 = vunpack.c.l.b16 %v5909
    %v6173 = vunpack.c.l.b16 %v5910
    %v6174 = vunpack.c.l.b16 %v5911
    %v6175 = vunpack.c.l.b16 %v5912
    %v6176 = vunpack.c.l.b16 %v5913
    %v6177 = vunpack.c.l.b16 %v5914
    %v6178 = vunpack.c.l.b16 %v5915
    %v6179 = vunpack.c.l.b16 %v5916
    %v6180 = vunpack.c.l.b16 %v5917
    %v6181 = vunpack.c.l.b16 %v5918
    %v6182 = vunpack.c.l.b16 %v5919
    %v6183 = vunpack.c.l.b16 %v5920
    %v6184 = vunpack.c.l.b16 %v5921
    %v6185 = vunpack.c.l.b16 %v5922
    %v6186 = vunpack.c.l.b16 %v5923
    %v6187 = vunpack.c.l.b16 %v5924
    %v6188 = vunpack.c.l.b16 %v5925
    %v6189 = vunpack.c.l.b16 %v5926
    %v6190 = vunpack.c.l.b16 %v5927
    %v6191 = vunpack.c.l.b16 %v5928
    %v6192 = vunpack.c.l.b16 %v5929
    %v6193 = vunpack.c.l.b16 %v5930
    %v6194 = vunpack.c.l.b16 %v5931
    %v6195 = vunpack.c.l.b16 %v5932
    %v6196 = vunpack.c.l.b16 %v5933
    %v6197 = vunpack.c.l.b16 %v5934
    %v6198 = vunpack.c.l.b16 %v5935
    %v6199 = vunpack.c.l.b16 %v5936
    %v6200 = vunpack.c.l.b16 %v5937
    %v6201 = vunpack.c.l.b16 %v5938
    %v6202 = vunpack.c.l.b16 %v5939
    %v6203 = vunpack.c.l.b16 %v5940
    %v6204 = vunpack.c.l.b16 %v5941
    %v6205 = vunpack.c.l.b16 %v5942
    %v6206 = vunpack.c.l.b16 %v5943
    %v6207 = vunpack.c.l.b16 %v5944
    %v6208 = vunpack.c.l.b16 %v5945
    %v6209 = vunpack.c.l.b16 %v5946
    %v6210 = vunpack.c.l.b16 %v5947
    %v6211 = vunpack.c.l.b16 %v5948
    %v6212 = vunpack.c.l.b16 %v5949
    %v6213 = vunpack.c.l.b16 %v5950
    %v6214 = vunpack.c.l.b16 %v5951
    %v6215 = vunpack.c.l.b16 %v5952
    %v6216 = vunpack.c.l.b16 %v5953
    %v6217 = vunpack.c.l.b16 %v5954
    %v6218 = vunpack.c.l.b16 %v5955
    %v6219 = vunpack.c.l.b16 %v5956
    %v6220 = vunpack.c.l.b16 %v5957
    %v6221 = vunpack.c.l.b16 %v5958
    %v6222 = vunpack.c.l.b16 %v5959
    %v6223 = vunpack.c.l.b16 %v5960
    %v6224 = vunpack.c.l.b16 %v5961
    %v6225 = vunpack.c.l.b16 %v5962
    %v6226 = vunpack.c.l.b16 %v5963
    %v6227 = vunpack.c.l.b16 %v5964
    %v6228 = vunpack.c.l.b16 %v5965
    %v6229 = vunpack.c.l.b16 %v5966
    %v6230 = vunpack.c.l.b16 %v5967
    %v6231 = vunpack.c.l.b16 %v5968
    %v6232 = vunpack.c.l.b16 %v5969
    %v6233 = vunpack.c.l.b16 %v5970
    %v6234 = vunpack.c.l.b16 %v5971
    %v6235 = vunpack.c.l.b16 %v5972
    %v6236 = vunpack.c.l.b16 %v5973
    %v6237 = vunpack.c.l.b16 %v5974
    %v6238 = vunpack.c.l.b16 %v5975
    %v6239 = vunpack.c.l.b16 %v5976
    %v6240 = vunpack.c.l.b16 %v5977
    %v6241 = vunpack.c.l.b16 %v5978
    %v6242 = vunpack.c.l.b16 %v5979
    %v6243 = vunpack.c.l.b16 %v5980
    %v6244 = vpack.c.b16 %v6117, %v6116
    %v6245 = vpack.c.b16 %v6119, %v6118
    %v6246 = vpack.c.b16 %v6121, %v6120
    %v6247 = vpack.c.b16 %v6123, %v6122
    %v6248 = vpack.c.b16 %v6125, %v6124
    %v6249 = vpack.c.b16 %v6127, %v6126
    %v6250 = vpack.c.b16 %v6129, %v6128
    %v6251 = vpack.c.b16 %v6131, %v6130
    %v6252 = vpack.c.b16 %v6133, %v6132
    %v6253 = vpack.c.b16 %v6135, %v6134
    %v6254 = vpack.c.b16 %v6137, %v6136
    %v6255 = vpack.c.b16 %v6139, %v6138
    %v6256 = vpack.c.b16 %v6141, %v6140
    %v6257 = vpack.c.b16 %v6143, %v6142
    %v6258 = vpack.c.b16 %v6145, %v6144
    %v6259 = vpack.c.b16 %v6147, %v6146
    %v6260 = vpack.c.b16 %v6149, %v6148
    %v6261 = vpack.c.b16 %v6151, %v6150
    %v6262 = vpack.c.b16 %v6153, %v6152
    %v6263 = vpack.c.b16 %v6155, %v6154
    %v6264 = vpack.c.b16 %v6157, %v6156
    %v6265 = vpack.c.b16 %v6159, %v6158
    %v6266 = vpack.c.b16 %v6161, %v6160
    %v6267 = vpack.c.b16 %v6163, %v6162
    %v6268 = vpack.c.b16 %v6165, %v6164
    %v6269 = vpack.c.b16 %v6167, %v6166
    %v6270 = vpack.c.b16 %v6169, %v6168
    %v6271 = vpack.c.b16 %v6171, %v6170
    %v6272 = vpack.c.b16 %v6173, %v6172
    %v6273 = vpack.c.b16 %v6175, %v6174
    %v6274 = vpack.c.b16 %v6177, %v6176
    %v6275 = vpack.c.b16 %v6179, %v6178
    %v6276 = vpack.c.b16 %v6181, %v6180
    %v6277 = vpack.c.b16 %v6183, %v6182
    %v6278 = vpack.c.b16 %v6185, %v6184
    %v6279 = vpack.c.b16 %v6187, %v6186
    %v6280 = vpack.c.b16 %v6189, %v6188
    %v6281 = vpack.c.b16 %v6191, %v6190
    %v6282 = vpack.c.b16 %v6193, %v6192
    %v6283 = vpack.c.b16 %v6195, %v6194
    %v6284 = vpack.c.b16 %v6197, %v6196
    %v6285 = vpack.c.b16 %v6199, %v6198
    %v6286 = vpack.c.b16 %v6201, %v6200
    %v6287 = vpack.c.b16 %v6203, %v6202
    %v6288 = vpack.c.b16 %v6205, %v6204
    %v6289 = vpack.c.b16 %v6207, %v6206
    %v6290 = vpack.c.b16 %v6209, %v6208
    %v6291 = vpack.c.b16 %v6211, %v6210
    %v6292 = vpack.c.b16 %v6213, %v6212
    %v6293 = vpack.c.b16 %v6215, %v6214
    %v6294 = vpack.c.b16 %v6217, %v6216
    %v6295 = vpack.c.b16 %v6219, %v6218
    %v6296 = vpack.c.b16 %v6221, %v6220
    %v6297 = vpack.c.b16 %v6223, %v6222
    %v6298 = vpack.c.b16 %v6225, %v6224
    %v6299 = vpack.c.b16 %v6227, %v6226
    %v6300 = vpack.c.b16 %v6229, %v6228
    %v6301 = vpack.c.b16 %v6231, %v6230
    %v6302 = vpack.c.b16 %v6233, %v6232
    %v6303 = vpack.c.b16 %v6235, %v6234
    %v6304 = vpack.c.b16 %v6237, %v6236
    %v6305 = vpack.c.b16 %v6239, %v6238
    %v6306 = vpack.c.b16 %v6241, %v6240
    %v6307 = vpack.c.b16 %v6243, %v6242
    %6372 = vmatprep.subr.bf16.mxu0 0
    %6373 = vmatpush1.bf16.msra.mxu0 %v6244
    %6374 = vmatprep.subr.bf16.mxu0 0
    %6375 = vmatpush1.bf16.msra.mxu0 %v6245
    %6376 = vmatprep.subr.bf16.mxu0 0
    %6377 = vmatpush1.bf16.msra.mxu0 %v6246
    %6378 = vmatprep.subr.bf16.mxu0 0
    %6379 = vmatpush1.bf16.msra.mxu0 %v6247
    %6380 = vmatprep.subr.bf16.mxu0 0
    %6381 = vmatpush1.bf16.msra.mxu0 %v6248
    %6382 = vmatprep.subr.bf16.mxu0 0
    %6383 = vmatpush1.bf16.msra.mxu0 %v6249
    %6384 = vmatprep.subr.bf16.mxu0 0
    %6385 = vmatpush1.bf16.msra.mxu0 %v6250
    %6386 = vmatprep.subr.bf16.mxu0 0
    %6387 = vmatpush1.bf16.msra.mxu0 %v6251
    %6388 = vmatprep.subr.bf16.mxu0 0
    %6389 = vmatpush1.bf16.msra.mxu0 %v6252
    %6390 = vmatprep.subr.bf16.mxu0 0
    %6391 = vmatpush1.bf16.msra.mxu0 %v6253
    %6392 = vmatprep.subr.bf16.mxu0 0
    %6393 = vmatpush1.bf16.msra.mxu0 %v6254
    %6394 = vmatprep.subr.bf16.mxu0 0
    %6395 = vmatpush1.bf16.msra.mxu0 %v6255
    %6396 = vmatprep.subr.bf16.mxu0 0
    %6397 = vmatpush1.bf16.msra.mxu0 %v6256
    %6398 = vmatprep.subr.bf16.mxu0 0
    %6399 = vmatpush1.bf16.msra.mxu0 %v6257
    %6400 = vmatprep.subr.bf16.mxu0 0
    %6401 = vmatpush1.bf16.msra.mxu0 %v6258
    %6402 = vmatprep.subr.bf16.mxu0 0
    %6403 = vmatpush1.bf16.msra.mxu0 %v6259
    %6404 = vmatprep.mubr.bf16.mxu0 %v5846
    %6405 = vmatmul.mubr.bf16.gmra.mrb[0].mxu0 %v5845
    %v6406 = vpop.f32.mrb[0].mxu0
    %v6407 = vadd.f32 %v5986, %v6406
    %v6408 = vpop.f32.mrb[0].mxu0
    %v6409 = vpop.f32.mrb[0].mxu0
    %v6410 = vpop.f32.mrb[0].mxu0
    %6411 = vdwg.mxu0
    %6412 = vmatprep.subr.bf16.mxu0 0
    %6413 = vmatpush1.bf16.msra.mxu0 %v6260
    %6414 = vmatprep.subr.bf16.mxu0 0
    %6415 = vmatpush1.bf16.msra.mxu0 %v6261
    %6416 = vmatprep.subr.bf16.mxu0 0
    %6417 = vmatpush1.bf16.msra.mxu0 %v6262
    %6418 = vmatprep.subr.bf16.mxu0 0
    %6419 = vmatpush1.bf16.msra.mxu0 %v6263
    %6420 = vmatprep.subr.bf16.mxu0 0
    %6421 = vmatpush1.bf16.msra.mxu0 %v6264
    %6422 = vmatprep.subr.bf16.mxu0 0
    %6423 = vmatpush1.bf16.msra.mxu0 %v6265
    %6424 = vmatprep.subr.bf16.mxu0 0
    %6425 = vmatpush1.bf16.msra.mxu0 %v6266
    %6426 = vmatprep.subr.bf16.mxu0 0
    %6427 = vmatpush1.bf16.msra.mxu0 %v6267
    %6428 = vmatprep.subr.bf16.mxu0 0
    %6429 = vmatpush1.bf16.msra.mxu0 %v6268
    %6430 = vmatprep.subr.bf16.mxu0 0
    %6431 = vmatpush1.bf16.msra.mxu0 %v6269
    %6432 = vmatprep.subr.bf16.mxu0 0
    %6433 = vmatpush1.bf16.msra.mxu0 %v6270
    %6434 = vmatprep.subr.bf16.mxu0 0
    %6435 = vmatpush1.bf16.msra.mxu0 %v6271
    %6436 = vmatprep.subr.bf16.mxu0 0
    %6437 = vmatpush1.bf16.msra.mxu0 %v6272
    %6438 = vmatprep.subr.bf16.mxu0 0
    %6439 = vmatpush1.bf16.msra.mxu0 %v6273
    %6440 = vmatprep.subr.bf16.mxu0 0
    %6441 = vmatpush1.bf16.msra.mxu0 %v6274
    %6442 = vmatprep.subr.bf16.mxu0 0
    %6443 = vmatpush1.bf16.msra.mxu0 %v6275
    %6444 = vmatprep.mubr.bf16.mxu0 %v5848
    %6445 = vmatmul.mubr.bf16.gmra.mrb[0].mxu0 %v5847
    %v6446 = vpop.f32.mrb[0].mxu0
    %v6447 = vadd.f32 %v6407, %v6446
    %v6448 = vpop.f32.mrb[0].mxu0
    %v6449 = vpop.f32.mrb[0].mxu0
    %v6450 = vpop.f32.mrb[0].mxu0
    %6451 = vdwg.mxu0
    %6452 = vmatprep.subr.bf16.mxu0 0
    %6453 = vmatpush1.bf16.msra.mxu0 %v6276
    %6454 = vmatprep.subr.bf16.mxu0 0
    %6455 = vmatpush1.bf16.msra.mxu0 %v6277
    %6456 = vmatprep.subr.bf16.mxu0 0
    %6457 = vmatpush1.bf16.msra.mxu0 %v6278
    %6458 = vmatprep.subr.bf16.mxu0 0
    %6459 = vmatpush1.bf16.msra.mxu0 %v6279
    %6460 = vmatprep.subr.bf16.mxu0 0
    %6461 = vmatpush1.bf16.msra.mxu0 %v6280
    %6462 = vmatprep.subr.bf16.mxu0 0
    %6463 = vmatpush1.bf16.msra.mxu0 %v6281
    %6464 = vmatprep.subr.bf16.mxu0 0
    %6465 = vmatpush1.bf16.msra.mxu0 %v6282
    %6466 = vmatprep.subr.bf16.mxu0 0
    %6467 = vmatpush1.bf16.msra.mxu0 %v6283
    %6468 = vmatprep.subr.bf16.mxu0 0
    %6469 = vmatpush1.bf16.msra.mxu0 %v6284
    %6470 = vmatprep.subr.bf16.mxu0 0
    %6471 = vmatpush1.bf16.msra.mxu0 %v6285
    %6472 = vmatprep.subr.bf16.mxu0 0
    %6473 = vmatpush1.bf16.msra.mxu0 %v6286
    %6474 = vmatprep.subr.bf16.mxu0 0
    %6475 = vmatpush1.bf16.msra.mxu0 %v6287
    %6476 = vmatprep.subr.bf16.mxu0 0
    %6477 = vmatpush1.bf16.msra.mxu0 %v6288
    %6478 = vmatprep.subr.bf16.mxu0 0
    %6479 = vmatpush1.bf16.msra.mxu0 %v6289
    %6480 = vmatprep.subr.bf16.mxu0 0
    %6481 = vmatpush1.bf16.msra.mxu0 %v6290
    %6482 = vmatprep.subr.bf16.mxu0 0
    %6483 = vmatpush1.bf16.msra.mxu0 %v6291
    %6484 = vmatprep.mubr.bf16.mxu0 %v5850
    %6485 = vmatmul.mubr.bf16.gmra.mrb[0].mxu0 %v5849
    %v6486 = vpop.f32.mrb[0].mxu0
    %v6487 = vadd.f32 %v6447, %v6486
    %v6488 = vpop.f32.mrb[0].mxu0
    %v6489 = vpop.f32.mrb[0].mxu0
    %v6490 = vpop.f32.mrb[0].mxu0
    %6491 = vdwg.mxu0
    %6492 = vmatprep.subr.bf16.mxu0 0
    %6493 = vmatpush1.bf16.msra.mxu0 %v6292
    %6494 = vmatprep.subr.bf16.mxu0 0
    %6495 = vmatpush1.bf16.msra.mxu0 %v6293
    %6496 = vmatprep.subr.bf16.mxu0 0
    %6497 = vmatpush1.bf16.msra.mxu0 %v6294
    %6498 = vmatprep.subr.bf16.mxu0 0
    %6499 = vmatpush1.bf16.msra.mxu0 %v6295
    %6500 = vmatprep.subr.bf16.mxu0 0
    %6501 = vmatpush1.bf16.msra.mxu0 %v6296
    %6502 = vmatprep.subr.bf16.mxu0 0
    %6503 = vmatpush1.bf16.msra.mxu0 %v6297
    %6504 = vmatprep.subr.bf16.mxu0 0
    %6505 = vmatpush1.bf16.msra.mxu0 %v6298
    %6506 = vmatprep.subr.bf16.mxu0 0
    %6507 = vmatpush1.bf16.msra.mxu0 %v6299
    %6508 = vmatprep.subr.bf16.mxu0 0
    %6509 = vmatpush1.bf16.msra.mxu0 %v6300
    %6510 = vmatprep.subr.bf16.mxu0 0
    %6511 = vmatpush1.bf16.msra.mxu0 %v6301
    %6512 = vmatprep.subr.bf16.mxu0 0
    %6513 = vmatpush1.bf16.msra.mxu0 %v6302
    %6514 = vmatprep.subr.bf16.mxu0 0
    %6515 = vmatpush1.bf16.msra.mxu0 %v6303
    %6516 = vmatprep.subr.bf16.mxu0 0
    %6517 = vmatpush1.bf16.msra.mxu0 %v6304
    %6518 = vmatprep.subr.bf16.mxu0 0
    %6519 = vmatpush1.bf16.msra.mxu0 %v6305
    %6520 = vmatprep.subr.bf16.mxu0 0
    %6521 = vmatpush1.bf16.msra.mxu0 %v6306
    %6522 = vmatprep.subr.bf16.mxu0 0
    %6523 = vmatpush1.bf16.msra.mxu0 %v6307
    %6524 = vmatprep.mubr.bf16.mxu0 %v5852
    %6525 = vmatmul.mubr.bf16.gmra.mrb[0].mxu0 %v5851
    %v6526 = vpop.f32.mrb[0].mxu0
    %v6527 = vadd.f32 %v6487, %v6526
    %v6528 = vpop.f32.mrb[0].mxu0
    %v6529 = vpop.f32.mrb[0].mxu0
    %v6530 = vpop.f32.mrb[0].mxu0
    %6531 = vdwg.mxu0
    %6532 = vst [vmem:[#allocation21] sm:$0x3] %v6527
    // Predicated region
    $region74: #{fcnn_forward.1} parent=1 // pred_check
      _
    $region75: #{fcnn_forward.1} parent=1 // pred_check_branch
      %6534 = sbr.rel (0) target = $region77
    $region76: #{fcnn_forward.1} parent=1 // pred_region
      %s6536 = ssub.s32 32, 32
      %6537 = vsyncadd [#allocation8], %s6536
      %s6539 = sshll.u32 [#allocation21], 4
      %s6540 = int_to_ptr.vmem [resolvable:$true] %s6539
      %6542 = dma.vmem_to_hbm [thread:$0]  %s6540, 32, %s9, [#allocation8]
    $region77: #{fcnn_forward.1} parent=1 // pred_fallthru
      _
    // Predicated region
    $region78: #{fcnn_forward.1} parent=1 // pred_check
      _
    $region79: #{fcnn_forward.1} parent=1 // pred_check_branch
      %6544 = sbr.rel (0) target = $region81
    $region80: #{fcnn_forward.1} parent=1 // pred_region
      %6545 = dma.done [#allocation8], 32
    $region81: #{fcnn_forward.1} parent=1 // pred_fallthru
      _
    %6546 = vsyncpa [#allocation7], 1
    %6547 = vsyncpa [#allocation10], 1
    %6548 = vsyncpa [#allocation13], 1
    %6549 = vsyncpa [#allocation16], 1
    %6550 = vsyncpa [#allocation19], 1
    %6551 = vsyncpa [#allocation8], 1

</llo_original>
